<compile_context>
chip_gen: v5e
topology: v5e:2x2
jax: 0.10.0
libtpu: 0.0.40
codegen_flags: <defaults>
</compile_context>

<pallas_src>
import math
from functools import partial

import jax
import jax.numpy as jnp
from jax.experimental import pallas as pl
from jax.experimental.pallas import tpu as pltpu


def _bnorm(x, gamma, beta, mean, var, eps=1e-5):
    # Inference-mode BatchNorm1d (running statistics).
    return (x - mean) * jax.lax.rsqrt(var + eps) * gamma + beta


def gin_kernel(x_idx_ref, src_ref, dstT_ref, eattr_ref, batchT_ref,
               atom_ref, bond_ref, ope_ref,
               w1_ref, b1_ref, g1_ref, be1_ref, m1_ref, v1_ref,
               w2_ref, b2_ref, g2_ref, be2_ref, m2_ref, v2_ref,
               node_ref, graph_ref, *, num_layers, num_graphs):
    N = x_idx_ref.shape[0]         # nodes
    E = src_ref.shape[0]           # edges
    Va = atom_ref.shape[0]         # atom vocab
    Vb = bond_ref.shape[1]         # bond vocab
    f32 = jnp.float32

    # ---- encoders & graph structure as dense one-hot operands (MXU-friendly, no gathers) ----
    # AtomEncoder: one_hot(x) @ atom_table   -> (N, D)
    atom_oh = (jax.lax.broadcasted_iota(jnp.int32, (N, Va), 1) == x_idx_ref[...]).astype(f32)
    h = jnp.dot(atom_oh, atom_ref[...], preferred_element_type=f32)

    # gather_oh[e, n] = (src[e] == n)    : x_j       = gather_oh  @ h      (E, D)
    # scatter_oh[n, e] = (dst[e] == n)   : aggregate = scatter_oh @ msg    (N, D)  (built transposed: no .T)
    gather_oh = (jax.lax.broadcasted_iota(jnp.int32, (E, N), 1) == src_ref[...]).astype(f32)
    scatter_oh = (jax.lax.broadcasted_iota(jnp.int32, (N, E), 0) == dstT_ref[...]).astype(f32)
    bond_oh = (jax.lax.broadcasted_iota(jnp.int32, (E, Vb), 1) == eattr_ref[...]).astype(f32)

    # ---- GIN layers (statically unrolled; weights resident in VMEM) ----
    for l in range(num_layers):
        edge_emb = jnp.dot(bond_oh, bond_ref[l], preferred_element_type=f32)       # (E, D)
        x_j = jnp.dot(gather_oh, h, preferred_element_type=f32)                    # (E, D)
        msg = jnp.maximum(x_j + edge_emb, 0.0)                                     # relu(x_j + e)
        agg = jnp.dot(scatter_oh, msg, preferred_element_type=f32)                 # (N, D) sum-aggr

        z = h * ope_ref[l] + agg                                                   # (1 + eps) * x + aggr

        # mlp = Linear(D, 2D) -> BatchNorm1d(2D) -> ReLU -> Linear(2D, D)
        z1 = jnp.dot(z, w1_ref[l], preferred_element_type=f32) + b1_ref[l]
        z1 = jnp.maximum(_bnorm(z1, g1_ref[l], be1_ref[l], m1_ref[l], v1_ref[l]), 0.0)
        z2 = jnp.dot(z1, w2_ref[l], preferred_element_type=f32) + b2_ref[l]

        # outer BatchNorm1d(D)
        h = _bnorm(z2, g2_ref[l], be2_ref[l], m2_ref[l], v2_ref[l])
        if l != num_layers - 1:
            h = jnp.maximum(h, 0.0)
        # TODO(synk): training-mode Dropout(0.7) / batch-statistics BatchNorm are not modeled
        # (inference forward: dropout = identity, BN uses running stats).

    node_ref[...] = h.astype(node_ref.dtype)

    # ---- per-graph mean pooling (scatter_add_ / count) as a dense (B, N) matmul ----
    pool = (jax.lax.broadcasted_iota(jnp.int32, (num_graphs, N), 0) == batchT_ref[...]).astype(f32)
    gsum = jnp.dot(pool, h, preferred_element_type=f32)                            # (B, D)
    cnt = jnp.sum(pool, axis=-1, keepdims=True)                                    # (B, 1)
    graph_ref[...] = (gsum / (cnt + 1e-9)).astype(graph_ref.dtype)


def gin_forward(x_idx, edge_index, edge_attr, batch, params, *, num_layers, num_graphs):
    N = x_idx.shape[0]
    E = edge_index.shape[1]
    D = params["atom_tab"].shape[1]

    x_col = x_idx.reshape(N, 1).astype(jnp.int32)
    src = edge_index[0].reshape(E, 1).astype(jnp.int32)
    dstT = edge_index[1].reshape(1, E).astype(jnp.int32)
    ea_col = edge_attr.reshape(E, 1).astype(jnp.int32)
    batchT = batch.reshape(1, N).astype(jnp.int32)

    inputs = [
        x_col, src, dstT, ea_col, batchT,
        params["atom_tab"], params["bond_tab"], params["ope"],
        params["w1"], params["b1"], params["g1"], params["be1"], params["m1"], params["v1"],
        params["w2"], params["b2"], params["g2"], params["be2"], params["m2"], params["v2"],
    ]

    def vspec(a):
        nd = a.ndim
        return pl.BlockSpec(a.shape, lambda i, _nd=nd: (0,) * _nd)

    kernel = partial(gin_kernel, num_layers=num_layers, num_graphs=num_graphs)
    node, graph = pl.pallas_call(
        kernel,
        out_shape=(jax.ShapeDtypeStruct((N, D), jnp.float32),
                   jax.ShapeDtypeStruct((num_graphs, D), jnp.float32)),
        grid=(1,),
        in_specs=[vspec(a) for a in inputs],
        out_specs=(pl.BlockSpec((N, D), lambda i: (0, 0)),
                   pl.BlockSpec((num_graphs, D), lambda i: (0, 0))),
        compiler_params=pltpu.CompilerParams(dimension_semantics=("arbitrary",)),
    )(*inputs)
    return node, graph


def gin_reference(x_idx, edge_index, edge_attr, batch, params, *, num_layers, num_graphs):
    """Pure-JAX mirror of the PyTorch GINGraph forward (inference mode)."""
    hp = jax.lax.Precision.HIGHEST
    src, dst = edge_index[0], edge_index[1]
    h = params["atom_tab"][x_idx]
    for l in range(num_layers):
        edge_emb = params["bond_tab"][l][edge_attr]
        msg = jnp.maximum(h[src] + edge_emb, 0.0)
        agg = jnp.zeros_like(h).at[dst].add(msg)
        z = h * params["ope"][l] + agg
        z1 = jnp.dot(z, params["w1"][l], precision=hp) + params["b1"][l]
        z1 = jnp.maximum(_bnorm(z1, params["g1"][l], params["be1"][l], params["m1"][l], params["v1"][l]), 0.0)
        z2 = jnp.dot(z1, params["w2"][l], precision=hp) + params["b2"][l]
        h = _bnorm(z2, params["g2"][l], params["be2"][l], params["m2"][l], params["v2"][l])
        if l != num_layers - 1:
            h = jnp.maximum(h, 0.0)
    node = h
    D = h.shape[-1]
    gsum = jnp.zeros((num_graphs, D), h.dtype).at[batch].add(h)
    cnt = jnp.zeros((num_graphs, D), h.dtype).at[batch].add(jnp.ones_like(h))
    graph = gsum / (cnt + 1e-9)
    return node, graph


def init_params(key, *, emb_dim, num_layers, atom_vocab, bond_vocab):
    D, H, L = emb_dim, 2 * emb_dim, num_layers

    def linear_stack(k, fan_in, fan_out):
        bound = 1.0 / math.sqrt(fan_in)
        kw, kb = jax.random.split(k)
        w = jax.random.uniform(kw, (L, fan_in, fan_out), jnp.float32, -bound, bound)
        b = jax.random.uniform(kb, (L, 1, fan_out), jnp.float32, -bound, bound)
        return w, b

    def bn_stack(k, dim):
        kg, kb, km, kv = jax.random.split(k, 4)
        g = jax.random.uniform(kg, (L, 1, dim), jnp.float32, 0.5, 1.5)
        b = 0.1 * jax.random.normal(kb, (L, 1, dim), jnp.float32)
        m = 0.1 * jax.random.normal(km, (L, 1, dim), jnp.float32)
        v = jax.random.uniform(kv, (L, 1, dim), jnp.float32, 0.5, 1.5)
        return g, b, m, v

    keys = jax.random.split(key, 7)
    atom_tab = 0.1 * jax.random.normal(keys[0], (atom_vocab, D), jnp.float32)
    bond_tab = 0.1 * jax.random.normal(keys[1], (L, bond_vocab, D), jnp.float32)
    w1, b1 = linear_stack(keys[2], D, H)
    w2, b2 = linear_stack(keys[3], H, D)
    g1, be1, m1, v1 = bn_stack(keys[4], H)
    g2, be2, m2, v2 = bn_stack(keys[5], D)

    # per-layer scalar eps (Parameter init 0 in torch; perturbed here for a stronger check),
    # pre-broadcast as (1 + eps) rows so the kernel multiply is a plain elementwise op.
    eps = 0.1 * jax.random.normal(keys[6], (L, 1, 1), jnp.float32)
    ope = jnp.broadcast_to(1.0 + eps, (L, 1, D))

    return dict(atom_tab=atom_tab, bond_tab=bond_tab, ope=ope,
                w1=w1, b1=b1, g1=g1, be1=be1, m1=m1, v1=v1,
                w2=w2, b2=b2, g2=g2, be2=be2, m2=m2, v2=v2)


if __name__ == "__main__":
    NUM_LAYERS = 3
    EMB_DIM = 128            # lane-dense feature dim (multiple of 128)
    NUM_GRAPHS = 8
    NODES_PER_GRAPH = 16
    EDGES_PER_GRAPH = 32
    ATOM_VOCAB = 16
    BOND_VOCAB = 8

    N = NUM_GRAPHS * NODES_PER_GRAPH   # 128 nodes -> fills the MXU M dimension
    E = NUM_GRAPHS * EDGES_PER_GRAPH   # 256 edges

    key = jax.random.PRNGKey(0)
    kx, ks, kd, ke, kp = jax.random.split(key, 5)

    x_idx = jax.random.randint(kx, (N,), 0, ATOM_VOCAB, dtype=jnp.int32)
    g_of_e = jnp.repeat(jnp.arange(NUM_GRAPHS, dtype=jnp.int32), EDGES_PER_GRAPH)
    src = g_of_e * NODES_PER_GRAPH + jax.random.randint(ks, (E,), 0, NODES_PER_GRAPH, dtype=jnp.int32)
    dst = g_of_e * NODES_PER_GRAPH + jax.random.randint(kd, (E,), 0, NODES_PER_GRAPH, dtype=jnp.int32)
    edge_index = jnp.stack([src, dst], axis=0)
    edge_attr = jax.random.randint(ke, (E,), 0, BOND_VOCAB, dtype=jnp.int32)
    batch = jnp.repeat(jnp.arange(NUM_GRAPHS, dtype=jnp.int32), NODES_PER_GRAPH)

    params = init_params(kp, emb_dim=EMB_DIM, num_layers=NUM_LAYERS,
                         atom_vocab=ATOM_VOCAB, bond_vocab=BOND_VOCAB)

    node, graph = gin_forward(x_idx, edge_index, edge_attr, batch, params,
                              num_layers=NUM_LAYERS, num_graphs=NUM_GRAPHS)
    node = jax.block_until_ready(node)
    graph = jax.block_until_ready(graph)

    node_ref, graph_ref = gin_reference(x_idx, edge_index, edge_attr, batch, params,
                                        num_layers=NUM_LAYERS, num_graphs=NUM_GRAPHS)

    assert node.shape == (N, EMB_DIM) and graph.shape == (NUM_GRAPHS, EMB_DIM)
    assert jnp.allclose(node, node_ref, atol=2e-3, rtol=2e-3), \
        f"node max abs err = {float(jnp.max(jnp.abs(node - node_ref)))}"
    assert jnp.allclose(graph, graph_ref, atol=2e-3, rtol=2e-3), \
        f"graph max abs err = {float(jnp.max(jnp.abs(graph - graph_ref)))}"
    print("KERNEL_OK")
</pallas_src>

<mosaic_0001>
module attributes {stable_mosaic.version = 11 : i64} {
  func.func @gin_kernel(%arg0: i32, %arg1: memref<128x1xi32, #tpu.memory_space<vmem>>, %arg2: memref<256x1xi32, #tpu.memory_space<vmem>>, %arg3: memref<1x256xi32, #tpu.memory_space<vmem>>, %arg4: memref<256x1xi32, #tpu.memory_space<vmem>>, %arg5: memref<1x128xi32, #tpu.memory_space<vmem>>, %arg6: memref<16x128xf32, #tpu.memory_space<vmem>>, %arg7: memref<3x8x128xf32, #tpu.memory_space<vmem>>, %arg8: memref<3x1x128xf32, #tpu.memory_space<vmem>>, %arg9: memref<3x128x256xf32, #tpu.memory_space<vmem>>, %arg10: memref<3x1x256xf32, #tpu.memory_space<vmem>>, %arg11: memref<3x1x256xf32, #tpu.memory_space<vmem>>, %arg12: memref<3x1x256xf32, #tpu.memory_space<vmem>>, %arg13: memref<3x1x256xf32, #tpu.memory_space<vmem>>, %arg14: memref<3x1x256xf32, #tpu.memory_space<vmem>>, %arg15: memref<3x256x128xf32, #tpu.memory_space<vmem>>, %arg16: memref<3x1x128xf32, #tpu.memory_space<vmem>>, %arg17: memref<3x1x128xf32, #tpu.memory_space<vmem>>, %arg18: memref<3x1x128xf32, #tpu.memory_space<vmem>>, %arg19: memref<3x1x128xf32, #tpu.memory_space<vmem>>, %arg20: memref<3x1x128xf32, #tpu.memory_space<vmem>>, %arg21: memref<128x128xf32, #tpu.memory_space<vmem>>, %arg22: memref<8x128xf32, #tpu.memory_space<vmem>>) attributes {dimension_semantics = [#tpu.dimension_semantics<arbitrary>], iteration_bounds = array<i64: 1>, scalar_prefetch = 0 : i64, scratch_operands = 0 : i64, tpu.core_type = #tpu.core_type<tc>, window_params = [{pipeline_mode = #tpu.pipeline_mode<synchronous>, transform_indices = @transform_0, window_bounds = array<i64: 128, 1>}, {pipeline_mode = #tpu.pipeline_mode<synchronous>, transform_indices = @transform_1, window_bounds = array<i64: 256, 1>}, {pipeline_mode = #tpu.pipeline_mode<synchronous>, transform_indices = @transform_2, window_bounds = array<i64: 1, 256>}, {pipeline_mode = #tpu.pipeline_mode<synchronous>, transform_indices = @transform_3, window_bounds = array<i64: 256, 1>}, {pipeline_mode = #tpu.pipeline_mode<synchronous>, transform_indices = @transform_4, window_bounds = array<i64: 1, 128>}, {pipeline_mode = #tpu.pipeline_mode<synchronous>, transform_indices = @transform_5, window_bounds = array<i64: 16, 128>}, {pipeline_mode = #tpu.pipeline_mode<synchronous>, transform_indices = @transform_6, window_bounds = array<i64: 3, 8, 128>}, {pipeline_mode = #tpu.pipeline_mode<synchronous>, transform_indices = @transform_7, window_bounds = array<i64: 3, 1, 128>}, {pipeline_mode = #tpu.pipeline_mode<synchronous>, transform_indices = @transform_8, window_bounds = array<i64: 3, 128, 256>}, {pipeline_mode = #tpu.pipeline_mode<synchronous>, transform_indices = @transform_9, window_bounds = array<i64: 3, 1, 256>}, {pipeline_mode = #tpu.pipeline_mode<synchronous>, transform_indices = @transform_10, window_bounds = array<i64: 3, 1, 256>}, {pipeline_mode = #tpu.pipeline_mode<synchronous>, transform_indices = @transform_11, window_bounds = array<i64: 3, 1, 256>}, {pipeline_mode = #tpu.pipeline_mode<synchronous>, transform_indices = @transform_12, window_bounds = array<i64: 3, 1, 256>}, {pipeline_mode = #tpu.pipeline_mode<synchronous>, transform_indices = @transform_13, window_bounds = array<i64: 3, 1, 256>}, {pipeline_mode = #tpu.pipeline_mode<synchronous>, transform_indices = @transform_14, window_bounds = array<i64: 3, 256, 128>}, {pipeline_mode = #tpu.pipeline_mode<synchronous>, transform_indices = @transform_15, window_bounds = array<i64: 3, 1, 128>}, {pipeline_mode = #tpu.pipeline_mode<synchronous>, transform_indices = @transform_16, window_bounds = array<i64: 3, 1, 128>}, {pipeline_mode = #tpu.pipeline_mode<synchronous>, transform_indices = @transform_17, window_bounds = array<i64: 3, 1, 128>}, {pipeline_mode = #tpu.pipeline_mode<synchronous>, transform_indices = @transform_18, window_bounds = array<i64: 3, 1, 128>}, {pipeline_mode = #tpu.pipeline_mode<synchronous>, transform_indices = @transform_19, window_bounds = array<i64: 3, 1, 128>}, {pipeline_mode = #tpu.pipeline_mode<synchronous>, transform_indices = @transform_20, window_bounds = array<i64: 128, 128>}, {pipeline_mode = #tpu.pipeline_mode<synchronous>, transform_indices = @transform_21, window_bounds = array<i64: 8, 128>}]} {
    %0 = tpu.iota {dimensions = array<i32: 1>} : vector<128x16xi32>
    %c0 = arith.constant 0 : index
    %c0_0 = arith.constant 0 : index
    %1 = vector.load %arg1[%c0, %c0_0] : memref<128x1xi32, #tpu.memory_space<vmem>>, vector<128x1xi32>
    %2 = vector.broadcast %1 : vector<128x1xi32> to vector<128x16xi32>
    %3 = arith.cmpi eq, %0, %2 : vector<128x16xi32>
    %4 = arith.extui %3 : vector<128x16xi1> to vector<128x16xi32>
    %5 = arith.sitofp %4 : vector<128x16xi32> to vector<128x16xf32>
    %c0_1 = arith.constant 0 : index
    %c0_2 = arith.constant 0 : index
    %6 = vector.load %arg6[%c0_1, %c0_2] : memref<16x128xf32, #tpu.memory_space<vmem>>, vector<16x128xf32>
    %cst = arith.constant dense<0.000000e+00> : vector<128x128xf32>
    %7 = tpu.matmul %5, %6, %cst {dimension_numbers = #tpu.dot_dimension_numbers<[1], [0], [0], [1], [0, 0, 1, 1], [], []>} : vector<128x16xf32>, vector<16x128xf32>, vector<128x128xf32> -> vector<128x128xf32>
    %8 = tpu.iota {dimensions = array<i32: 1>} : vector<256x128xi32>
    %c0_3 = arith.constant 0 : index
    %c0_4 = arith.constant 0 : index
    %9 = vector.load %arg2[%c0_3, %c0_4] : memref<256x1xi32, #tpu.memory_space<vmem>>, vector<256x1xi32>
    %10 = vector.broadcast %9 : vector<256x1xi32> to vector<256x128xi32>
    %11 = arith.cmpi eq, %8, %10 : vector<256x128xi32>
    %12 = arith.extui %11 : vector<256x128xi1> to vector<256x128xi32>
    %13 = arith.sitofp %12 : vector<256x128xi32> to vector<256x128xf32>
    %14 = tpu.iota {dimensions = array<i32: 0>} : vector<128x256xi32>
    %c0_5 = arith.constant 0 : index
    %c0_6 = arith.constant 0 : index
    %15 = vector.load %arg3[%c0_5, %c0_6] : memref<1x256xi32, #tpu.memory_space<vmem>>, vector<1x256xi32>
    %16 = vector.broadcast %15 : vector<1x256xi32> to vector<128x256xi32>
    %17 = arith.cmpi eq, %14, %16 : vector<128x256xi32>
    %18 = arith.extui %17 : vector<128x256xi1> to vector<128x256xi32>
    %19 = arith.sitofp %18 : vector<128x256xi32> to vector<128x256xf32>
    %20 = tpu.iota {dimensions = array<i32: 1>} : vector<256x8xi32>
    %c0_7 = arith.constant 0 : index
    %c0_8 = arith.constant 0 : index
    %21 = vector.load %arg4[%c0_7, %c0_8] : memref<256x1xi32, #tpu.memory_space<vmem>>, vector<256x1xi32>
    %22 = vector.broadcast %21 : vector<256x1xi32> to vector<256x8xi32>
    %23 = arith.cmpi eq, %20, %22 : vector<256x8xi32>
    %24 = arith.extui %23 : vector<256x8xi1> to vector<256x8xi32>
    %25 = arith.sitofp %24 : vector<256x8xi32> to vector<256x8xf32>
    %c0_9 = arith.constant 0 : index
    %c0_10 = arith.constant 0 : index
    %c0_11 = arith.constant 0 : index
    %26 = vector.load %arg7[%c0_9, %c0_10, %c0_11] : memref<3x8x128xf32, #tpu.memory_space<vmem>>, vector<1x8x128xf32>
    %27 = vector.shape_cast %26 : vector<1x8x128xf32> to vector<8x128xf32>
    %cst_12 = arith.constant dense<0.000000e+00> : vector<256x128xf32>
    %28 = tpu.matmul %25, %27, %cst_12 {dimension_numbers = #tpu.dot_dimension_numbers<[1], [0], [0], [1], [0, 0, 1, 1], [], []>} : vector<256x8xf32>, vector<8x128xf32>, vector<256x128xf32> -> vector<256x128xf32>
    %cst_13 = arith.constant dense<0.000000e+00> : vector<256x128xf32>
    %29 = tpu.matmul %13, %7, %cst_13 {dimension_numbers = #tpu.dot_dimension_numbers<[1], [0], [0], [1], [0, 0, 1, 1], [], []>} : vector<256x128xf32>, vector<128x128xf32>, vector<256x128xf32> -> vector<256x128xf32>
    %30 = arith.addf %29, %28 : vector<256x128xf32>
    %cst_14 = arith.constant 0.000000e+00 : f32
    %31 = vector.broadcast %cst_14 : f32 to vector<256x128xf32>
    %32 = arith.maximumf %30, %31 : vector<256x128xf32>
    %cst_15 = arith.constant dense<0.000000e+00> : vector<128x128xf32>
    %33 = tpu.matmul %19, %32, %cst_15 {dimension_numbers = #tpu.dot_dimension_numbers<[1], [0], [0], [1], [0, 0, 1, 1], [], []>} : vector<128x256xf32>, vector<256x128xf32>, vector<128x128xf32> -> vector<128x128xf32>
    %c0_16 = arith.constant 0 : index
    %c0_17 = arith.constant 0 : index
    %c0_18 = arith.constant 0 : index
    %34 = vector.load %arg8[%c0_16, %c0_17, %c0_18] : memref<3x1x128xf32, #tpu.memory_space<vmem>>, vector<1x1x128xf32>
    %35 = vector.shape_cast %34 : vector<1x1x128xf32> to vector<1x128xf32>
    %36 = vector.broadcast %35 : vector<1x128xf32> to vector<128x128xf32>
    %37 = arith.mulf %7, %36 : vector<128x128xf32>
    %38 = arith.addf %37, %33 : vector<128x128xf32>
    %c0_19 = arith.constant 0 : index
    %c0_20 = arith.constant 0 : index
    %c0_21 = arith.constant 0 : index
    %39 = vector.load %arg9[%c0_19, %c0_20, %c0_21] : memref<3x128x256xf32, #tpu.memory_space<vmem>>, vector<1x128x256xf32>
    %40 = vector.shape_cast %39 : vector<1x128x256xf32> to vector<128x256xf32>
    %cst_22 = arith.constant dense<0.000000e+00> : vector<128x256xf32>
    %41 = tpu.matmul %38, %40, %cst_22 {dimension_numbers = #tpu.dot_dimension_numbers<[1], [0], [0], [1], [0, 0, 1, 1], [], []>} : vector<128x128xf32>, vector<128x256xf32>, vector<128x256xf32> -> vector<128x256xf32>
    %c0_23 = arith.constant 0 : index
    %c0_24 = arith.constant 0 : index
    %c0_25 = arith.constant 0 : index
    %42 = vector.load %arg10[%c0_23, %c0_24, %c0_25] : memref<3x1x256xf32, #tpu.memory_space<vmem>>, vector<1x1x256xf32>
    %43 = vector.shape_cast %42 : vector<1x1x256xf32> to vector<1x256xf32>
    %44 = vector.broadcast %43 : vector<1x256xf32> to vector<128x256xf32>
    %45 = arith.addf %41, %44 : vector<128x256xf32>
    %c0_26 = arith.constant 0 : index
    %c0_27 = arith.constant 0 : index
    %c0_28 = arith.constant 0 : index
    %46 = vector.load %arg11[%c0_26, %c0_27, %c0_28] : memref<3x1x256xf32, #tpu.memory_space<vmem>>, vector<1x1x256xf32>
    %47 = vector.shape_cast %46 : vector<1x1x256xf32> to vector<1x256xf32>
    %c0_29 = arith.constant 0 : index
    %c0_30 = arith.constant 0 : index
    %c0_31 = arith.constant 0 : index
    %48 = vector.load %arg12[%c0_29, %c0_30, %c0_31] : memref<3x1x256xf32, #tpu.memory_space<vmem>>, vector<1x1x256xf32>
    %49 = vector.shape_cast %48 : vector<1x1x256xf32> to vector<1x256xf32>
    %c0_32 = arith.constant 0 : index
    %c0_33 = arith.constant 0 : index
    %c0_34 = arith.constant 0 : index
    %50 = vector.load %arg13[%c0_32, %c0_33, %c0_34] : memref<3x1x256xf32, #tpu.memory_space<vmem>>, vector<1x1x256xf32>
    %51 = vector.shape_cast %50 : vector<1x1x256xf32> to vector<1x256xf32>
    %c0_35 = arith.constant 0 : index
    %c0_36 = arith.constant 0 : index
    %c0_37 = arith.constant 0 : index
    %52 = vector.load %arg14[%c0_35, %c0_36, %c0_37] : memref<3x1x256xf32, #tpu.memory_space<vmem>>, vector<1x1x256xf32>
    %53 = vector.shape_cast %52 : vector<1x1x256xf32> to vector<1x256xf32>
    %54 = vector.broadcast %51 : vector<1x256xf32> to vector<128x256xf32>
    %55 = arith.subf %45, %54 : vector<128x256xf32>
    %cst_38 = arith.constant 9.99999974E-6 : f32
    %56 = vector.broadcast %cst_38 : f32 to vector<1x256xf32>
    %57 = arith.addf %53, %56 : vector<1x256xf32>
    %58 = math.rsqrt %57 : vector<1x256xf32>
    %59 = vector.broadcast %58 : vector<1x256xf32> to vector<128x256xf32>
    %60 = arith.mulf %55, %59 : vector<128x256xf32>
    %61 = vector.broadcast %47 : vector<1x256xf32> to vector<128x256xf32>
    %62 = arith.mulf %60, %61 : vector<128x256xf32>
    %63 = vector.broadcast %49 : vector<1x256xf32> to vector<128x256xf32>
    %64 = arith.addf %62, %63 : vector<128x256xf32>
    %cst_39 = arith.constant 0.000000e+00 : f32
    %65 = vector.broadcast %cst_39 : f32 to vector<128x256xf32>
    %66 = arith.maximumf %64, %65 : vector<128x256xf32>
    %c0_40 = arith.constant 0 : index
    %c0_41 = arith.constant 0 : index
    %c0_42 = arith.constant 0 : index
    %67 = vector.load %arg15[%c0_40, %c0_41, %c0_42] : memref<3x256x128xf32, #tpu.memory_space<vmem>>, vector<1x256x128xf32>
    %68 = vector.shape_cast %67 : vector<1x256x128xf32> to vector<256x128xf32>
    %cst_43 = arith.constant dense<0.000000e+00> : vector<128x128xf32>
    %69 = tpu.matmul %66, %68, %cst_43 {dimension_numbers = #tpu.dot_dimension_numbers<[1], [0], [0], [1], [0, 0, 1, 1], [], []>} : vector<128x256xf32>, vector<256x128xf32>, vector<128x128xf32> -> vector<128x128xf32>
    %c0_44 = arith.constant 0 : index
    %c0_45 = arith.constant 0 : index
    %c0_46 = arith.constant 0 : index
    %70 = vector.load %arg16[%c0_44, %c0_45, %c0_46] : memref<3x1x128xf32, #tpu.memory_space<vmem>>, vector<1x1x128xf32>
    %71 = vector.shape_cast %70 : vector<1x1x128xf32> to vector<1x128xf32>
    %72 = vector.broadcast %71 : vector<1x128xf32> to vector<128x128xf32>
    %73 = arith.addf %69, %72 : vector<128x128xf32>
    %c0_47 = arith.constant 0 : index
    %c0_48 = arith.constant 0 : index
    %c0_49 = arith.constant 0 : index
    %74 = vector.load %arg17[%c0_47, %c0_48, %c0_49] : memref<3x1x128xf32, #tpu.memory_space<vmem>>, vector<1x1x128xf32>
    %75 = vector.shape_cast %74 : vector<1x1x128xf32> to vector<1x128xf32>
    %c0_50 = arith.constant 0 : index
    %c0_51 = arith.constant 0 : index
    %c0_52 = arith.constant 0 : index
    %76 = vector.load %arg18[%c0_50, %c0_51, %c0_52] : memref<3x1x128xf32, #tpu.memory_space<vmem>>, vector<1x1x128xf32>
    %77 = vector.shape_cast %76 : vector<1x1x128xf32> to vector<1x128xf32>
    %c0_53 = arith.constant 0 : index
    %c0_54 = arith.constant 0 : index
    %c0_55 = arith.constant 0 : index
    %78 = vector.load %arg19[%c0_53, %c0_54, %c0_55] : memref<3x1x128xf32, #tpu.memory_space<vmem>>, vector<1x1x128xf32>
    %79 = vector.shape_cast %78 : vector<1x1x128xf32> to vector<1x128xf32>
    %c0_56 = arith.constant 0 : index
    %c0_57 = arith.constant 0 : index
    %c0_58 = arith.constant 0 : index
    %80 = vector.load %arg20[%c0_56, %c0_57, %c0_58] : memref<3x1x128xf32, #tpu.memory_space<vmem>>, vector<1x1x128xf32>
    %81 = vector.shape_cast %80 : vector<1x1x128xf32> to vector<1x128xf32>
    %82 = vector.broadcast %79 : vector<1x128xf32> to vector<128x128xf32>
    %83 = arith.subf %73, %82 : vector<128x128xf32>
    %cst_59 = arith.constant 9.99999974E-6 : f32
    %84 = vector.broadcast %cst_59 : f32 to vector<1x128xf32>
    %85 = arith.addf %81, %84 : vector<1x128xf32>
    %86 = math.rsqrt %85 : vector<1x128xf32>
    %87 = vector.broadcast %86 : vector<1x128xf32> to vector<128x128xf32>
    %88 = arith.mulf %83, %87 : vector<128x128xf32>
    %89 = vector.broadcast %75 : vector<1x128xf32> to vector<128x128xf32>
    %90 = arith.mulf %88, %89 : vector<128x128xf32>
    %91 = vector.broadcast %77 : vector<1x128xf32> to vector<128x128xf32>
    %92 = arith.addf %90, %91 : vector<128x128xf32>
    %cst_60 = arith.constant 0.000000e+00 : f32
    %93 = vector.broadcast %cst_60 : f32 to vector<128x128xf32>
    %94 = arith.maximumf %92, %93 : vector<128x128xf32>
    %c1 = arith.constant 1 : index
    %c0_61 = arith.constant 0 : index
    %c0_62 = arith.constant 0 : index
    %95 = vector.load %arg7[%c1, %c0_61, %c0_62] : memref<3x8x128xf32, #tpu.memory_space<vmem>>, vector<1x8x128xf32>
    %96 = vector.shape_cast %95 : vector<1x8x128xf32> to vector<8x128xf32>
    %cst_63 = arith.constant dense<0.000000e+00> : vector<256x128xf32>
    %97 = tpu.matmul %25, %96, %cst_63 {dimension_numbers = #tpu.dot_dimension_numbers<[1], [0], [0], [1], [0, 0, 1, 1], [], []>} : vector<256x8xf32>, vector<8x128xf32>, vector<256x128xf32> -> vector<256x128xf32>
    %cst_64 = arith.constant dense<0.000000e+00> : vector<256x128xf32>
    %98 = tpu.matmul %13, %94, %cst_64 {dimension_numbers = #tpu.dot_dimension_numbers<[1], [0], [0], [1], [0, 0, 1, 1], [], []>} : vector<256x128xf32>, vector<128x128xf32>, vector<256x128xf32> -> vector<256x128xf32>
    %99 = arith.addf %98, %97 : vector<256x128xf32>
    %cst_65 = arith.constant 0.000000e+00 : f32
    %100 = vector.broadcast %cst_65 : f32 to vector<256x128xf32>
    %101 = arith.maximumf %99, %100 : vector<256x128xf32>
    %cst_66 = arith.constant dense<0.000000e+00> : vector<128x128xf32>
    %102 = tpu.matmul %19, %101, %cst_66 {dimension_numbers = #tpu.dot_dimension_numbers<[1], [0], [0], [1], [0, 0, 1, 1], [], []>} : vector<128x256xf32>, vector<256x128xf32>, vector<128x128xf32> -> vector<128x128xf32>
    %c1_67 = arith.constant 1 : index
    %c0_68 = arith.constant 0 : index
    %c0_69 = arith.constant 0 : index
    %103 = vector.load %arg8[%c1_67, %c0_68, %c0_69] : memref<3x1x128xf32, #tpu.memory_space<vmem>>, vector<1x1x128xf32>
    %104 = vector.shape_cast %103 : vector<1x1x128xf32> to vector<1x128xf32>
    %105 = vector.broadcast %104 : vector<1x128xf32> to vector<128x128xf32>
    %106 = arith.mulf %94, %105 : vector<128x128xf32>
    %107 = arith.addf %106, %102 : vector<128x128xf32>
    %c1_70 = arith.constant 1 : index
    %c0_71 = arith.constant 0 : index
    %c0_72 = arith.constant 0 : index
    %108 = vector.load %arg9[%c1_70, %c0_71, %c0_72] : memref<3x128x256xf32, #tpu.memory_space<vmem>>, vector<1x128x256xf32>
    %109 = vector.shape_cast %108 : vector<1x128x256xf32> to vector<128x256xf32>
    %cst_73 = arith.constant dense<0.000000e+00> : vector<128x256xf32>
    %110 = tpu.matmul %107, %109, %cst_73 {dimension_numbers = #tpu.dot_dimension_numbers<[1], [0], [0], [1], [0, 0, 1, 1], [], []>} : vector<128x128xf32>, vector<128x256xf32>, vector<128x256xf32> -> vector<128x256xf32>
    %c1_74 = arith.constant 1 : index
    %c0_75 = arith.constant 0 : index
    %c0_76 = arith.constant 0 : index
    %111 = vector.load %arg10[%c1_74, %c0_75, %c0_76] : memref<3x1x256xf32, #tpu.memory_space<vmem>>, vector<1x1x256xf32>
    %112 = vector.shape_cast %111 : vector<1x1x256xf32> to vector<1x256xf32>
    %113 = vector.broadcast %112 : vector<1x256xf32> to vector<128x256xf32>
    %114 = arith.addf %110, %113 : vector<128x256xf32>
    %c1_77 = arith.constant 1 : index
    %c0_78 = arith.constant 0 : index
    %c0_79 = arith.constant 0 : index
    %115 = vector.load %arg11[%c1_77, %c0_78, %c0_79] : memref<3x1x256xf32, #tpu.memory_space<vmem>>, vector<1x1x256xf32>
    %116 = vector.shape_cast %115 : vector<1x1x256xf32> to vector<1x256xf32>
    %c1_80 = arith.constant 1 : index
    %c0_81 = arith.constant 0 : index
    %c0_82 = arith.constant 0 : index
    %117 = vector.load %arg12[%c1_80, %c0_81, %c0_82] : memref<3x1x256xf32, #tpu.memory_space<vmem>>, vector<1x1x256xf32>
    %118 = vector.shape_cast %117 : vector<1x1x256xf32> to vector<1x256xf32>
    %c1_83 = arith.constant 1 : index
    %c0_84 = arith.constant 0 : index
    %c0_85 = arith.constant 0 : index
    %119 = vector.load %arg13[%c1_83, %c0_84, %c0_85] : memref<3x1x256xf32, #tpu.memory_space<vmem>>, vector<1x1x256xf32>
    %120 = vector.shape_cast %119 : vector<1x1x256xf32> to vector<1x256xf32>
    %c1_86 = arith.constant 1 : index
    %c0_87 = arith.constant 0 : index
    %c0_88 = arith.constant 0 : index
    %121 = vector.load %arg14[%c1_86, %c0_87, %c0_88] : memref<3x1x256xf32, #tpu.memory_space<vmem>>, vector<1x1x256xf32>
    %122 = vector.shape_cast %121 : vector<1x1x256xf32> to vector<1x256xf32>
    %123 = vector.broadcast %120 : vector<1x256xf32> to vector<128x256xf32>
    %124 = arith.subf %114, %123 : vector<128x256xf32>
    %cst_89 = arith.constant 9.99999974E-6 : f32
    %125 = vector.broadcast %cst_89 : f32 to vector<1x256xf32>
    %126 = arith.addf %122, %125 : vector<1x256xf32>
    %127 = math.rsqrt %126 : vector<1x256xf32>
    %128 = vector.broadcast %127 : vector<1x256xf32> to vector<128x256xf32>
    %129 = arith.mulf %124, %128 : vector<128x256xf32>
    %130 = vector.broadcast %116 : vector<1x256xf32> to vector<128x256xf32>
    %131 = arith.mulf %129, %130 : vector<128x256xf32>
    %132 = vector.broadcast %118 : vector<1x256xf32> to vector<128x256xf32>
    %133 = arith.addf %131, %132 : vector<128x256xf32>
    %cst_90 = arith.constant 0.000000e+00 : f32
    %134 = vector.broadcast %cst_90 : f32 to vector<128x256xf32>
    %135 = arith.maximumf %133, %134 : vector<128x256xf32>
    %c1_91 = arith.constant 1 : index
    %c0_92 = arith.constant 0 : index
    %c0_93 = arith.constant 0 : index
    %136 = vector.load %arg15[%c1_91, %c0_92, %c0_93] : memref<3x256x128xf32, #tpu.memory_space<vmem>>, vector<1x256x128xf32>
    %137 = vector.shape_cast %136 : vector<1x256x128xf32> to vector<256x128xf32>
    %cst_94 = arith.constant dense<0.000000e+00> : vector<128x128xf32>
    %138 = tpu.matmul %135, %137, %cst_94 {dimension_numbers = #tpu.dot_dimension_numbers<[1], [0], [0], [1], [0, 0, 1, 1], [], []>} : vector<128x256xf32>, vector<256x128xf32>, vector<128x128xf32> -> vector<128x128xf32>
    %c1_95 = arith.constant 1 : index
    %c0_96 = arith.constant 0 : index
    %c0_97 = arith.constant 0 : index
    %139 = vector.load %arg16[%c1_95, %c0_96, %c0_97] : memref<3x1x128xf32, #tpu.memory_space<vmem>>, vector<1x1x128xf32>
    %140 = vector.shape_cast %139 : vector<1x1x128xf32> to vector<1x128xf32>
    %141 = vector.broadcast %140 : vector<1x128xf32> to vector<128x128xf32>
    %142 = arith.addf %138, %141 : vector<128x128xf32>
    %c1_98 = arith.constant 1 : index
    %c0_99 = arith.constant 0 : index
    %c0_100 = arith.constant 0 : index
    %143 = vector.load %arg17[%c1_98, %c0_99, %c0_100] : memref<3x1x128xf32, #tpu.memory_space<vmem>>, vector<1x1x128xf32>
    %144 = vector.shape_cast %143 : vector<1x1x128xf32> to vector<1x128xf32>
    %c1_101 = arith.constant 1 : index
    %c0_102 = arith.constant 0 : index
    %c0_103 = arith.constant 0 : index
    %145 = vector.load %arg18[%c1_101, %c0_102, %c0_103] : memref<3x1x128xf32, #tpu.memory_space<vmem>>, vector<1x1x128xf32>
    %146 = vector.shape_cast %145 : vector<1x1x128xf32> to vector<1x128xf32>
    %c1_104 = arith.constant 1 : index
    %c0_105 = arith.constant 0 : index
    %c0_106 = arith.constant 0 : index
    %147 = vector.load %arg19[%c1_104, %c0_105, %c0_106] : memref<3x1x128xf32, #tpu.memory_space<vmem>>, vector<1x1x128xf32>
    %148 = vector.shape_cast %147 : vector<1x1x128xf32> to vector<1x128xf32>
    %c1_107 = arith.constant 1 : index
    %c0_108 = arith.constant 0 : index
    %c0_109 = arith.constant 0 : index
    %149 = vector.load %arg20[%c1_107, %c0_108, %c0_109] : memref<3x1x128xf32, #tpu.memory_space<vmem>>, vector<1x1x128xf32>
    %150 = vector.shape_cast %149 : vector<1x1x128xf32> to vector<1x128xf32>
    %151 = vector.broadcast %148 : vector<1x128xf32> to vector<128x128xf32>
    %152 = arith.subf %142, %151 : vector<128x128xf32>
    %cst_110 = arith.constant 9.99999974E-6 : f32
    %153 = vector.broadcast %cst_110 : f32 to vector<1x128xf32>
    %154 = arith.addf %150, %153 : vector<1x128xf32>
    %155 = math.rsqrt %154 : vector<1x128xf32>
    %156 = vector.broadcast %155 : vector<1x128xf32> to vector<128x128xf32>
    %157 = arith.mulf %152, %156 : vector<128x128xf32>
    %158 = vector.broadcast %144 : vector<1x128xf32> to vector<128x128xf32>
    %159 = arith.mulf %157, %158 : vector<128x128xf32>
    %160 = vector.broadcast %146 : vector<1x128xf32> to vector<128x128xf32>
    %161 = arith.addf %159, %160 : vector<128x128xf32>
    %cst_111 = arith.constant 0.000000e+00 : f32
    %162 = vector.broadcast %cst_111 : f32 to vector<128x128xf32>
    %163 = arith.maximumf %161, %162 : vector<128x128xf32>
    %c2 = arith.constant 2 : index
    %c0_112 = arith.constant 0 : index
    %c0_113 = arith.constant 0 : index
    %164 = vector.load %arg7[%c2, %c0_112, %c0_113] : memref<3x8x128xf32, #tpu.memory_space<vmem>>, vector<1x8x128xf32>
    %165 = vector.shape_cast %164 : vector<1x8x128xf32> to vector<8x128xf32>
    %cst_114 = arith.constant dense<0.000000e+00> : vector<256x128xf32>
    %166 = tpu.matmul %25, %165, %cst_114 {dimension_numbers = #tpu.dot_dimension_numbers<[1], [0], [0], [1], [0, 0, 1, 1], [], []>} : vector<256x8xf32>, vector<8x128xf32>, vector<256x128xf32> -> vector<256x128xf32>
    %cst_115 = arith.constant dense<0.000000e+00> : vector<256x128xf32>
    %167 = tpu.matmul %13, %163, %cst_115 {dimension_numbers = #tpu.dot_dimension_numbers<[1], [0], [0], [1], [0, 0, 1, 1], [], []>} : vector<256x128xf32>, vector<128x128xf32>, vector<256x128xf32> -> vector<256x128xf32>
    %168 = arith.addf %167, %166 : vector<256x128xf32>
    %cst_116 = arith.constant 0.000000e+00 : f32
    %169 = vector.broadcast %cst_116 : f32 to vector<256x128xf32>
    %170 = arith.maximumf %168, %169 : vector<256x128xf32>
    %cst_117 = arith.constant dense<0.000000e+00> : vector<128x128xf32>
    %171 = tpu.matmul %19, %170, %cst_117 {dimension_numbers = #tpu.dot_dimension_numbers<[1], [0], [0], [1], [0, 0, 1, 1], [], []>} : vector<128x256xf32>, vector<256x128xf32>, vector<128x128xf32> -> vector<128x128xf32>
    %c2_118 = arith.constant 2 : index
    %c0_119 = arith.constant 0 : index
    %c0_120 = arith.constant 0 : index
    %172 = vector.load %arg8[%c2_118, %c0_119, %c0_120] : memref<3x1x128xf32, #tpu.memory_space<vmem>>, vector<1x1x128xf32>
    %173 = vector.shape_cast %172 : vector<1x1x128xf32> to vector<1x128xf32>
    %174 = vector.broadcast %173 : vector<1x128xf32> to vector<128x128xf32>
    %175 = arith.mulf %163, %174 : vector<128x128xf32>
    %176 = arith.addf %175, %171 : vector<128x128xf32>
    %c2_121 = arith.constant 2 : index
    %c0_122 = arith.constant 0 : index
    %c0_123 = arith.constant 0 : index
    %177 = vector.load %arg9[%c2_121, %c0_122, %c0_123] : memref<3x128x256xf32, #tpu.memory_space<vmem>>, vector<1x128x256xf32>
    %178 = vector.shape_cast %177 : vector<1x128x256xf32> to vector<128x256xf32>
    %cst_124 = arith.constant dense<0.000000e+00> : vector<128x256xf32>
    %179 = tpu.matmul %176, %178, %cst_124 {dimension_numbers = #tpu.dot_dimension_numbers<[1], [0], [0], [1], [0, 0, 1, 1], [], []>} : vector<128x128xf32>, vector<128x256xf32>, vector<128x256xf32> -> vector<128x256xf32>
    %c2_125 = arith.constant 2 : index
    %c0_126 = arith.constant 0 : index
    %c0_127 = arith.constant 0 : index
    %180 = vector.load %arg10[%c2_125, %c0_126, %c0_127] : memref<3x1x256xf32, #tpu.memory_space<vmem>>, vector<1x1x256xf32>
    %181 = vector.shape_cast %180 : vector<1x1x256xf32> to vector<1x256xf32>
    %182 = vector.broadcast %181 : vector<1x256xf32> to vector<128x256xf32>
    %183 = arith.addf %179, %182 : vector<128x256xf32>
    %c2_128 = arith.constant 2 : index
    %c0_129 = arith.constant 0 : index
    %c0_130 = arith.constant 0 : index
    %184 = vector.load %arg11[%c2_128, %c0_129, %c0_130] : memref<3x1x256xf32, #tpu.memory_space<vmem>>, vector<1x1x256xf32>
    %185 = vector.shape_cast %184 : vector<1x1x256xf32> to vector<1x256xf32>
    %c2_131 = arith.constant 2 : index
    %c0_132 = arith.constant 0 : index
    %c0_133 = arith.constant 0 : index
    %186 = vector.load %arg12[%c2_131, %c0_132, %c0_133] : memref<3x1x256xf32, #tpu.memory_space<vmem>>, vector<1x1x256xf32>
    %187 = vector.shape_cast %186 : vector<1x1x256xf32> to vector<1x256xf32>
    %c2_134 = arith.constant 2 : index
    %c0_135 = arith.constant 0 : index
    %c0_136 = arith.constant 0 : index
    %188 = vector.load %arg13[%c2_134, %c0_135, %c0_136] : memref<3x1x256xf32, #tpu.memory_space<vmem>>, vector<1x1x256xf32>
    %189 = vector.shape_cast %188 : vector<1x1x256xf32> to vector<1x256xf32>
    %c2_137 = arith.constant 2 : index
    %c0_138 = arith.constant 0 : index
    %c0_139 = arith.constant 0 : index
    %190 = vector.load %arg14[%c2_137, %c0_138, %c0_139] : memref<3x1x256xf32, #tpu.memory_space<vmem>>, vector<1x1x256xf32>
    %191 = vector.shape_cast %190 : vector<1x1x256xf32> to vector<1x256xf32>
    %192 = vector.broadcast %189 : vector<1x256xf32> to vector<128x256xf32>
    %193 = arith.subf %183, %192 : vector<128x256xf32>
    %cst_140 = arith.constant 9.99999974E-6 : f32
    %194 = vector.broadcast %cst_140 : f32 to vector<1x256xf32>
    %195 = arith.addf %191, %194 : vector<1x256xf32>
    %196 = math.rsqrt %195 : vector<1x256xf32>
    %197 = vector.broadcast %196 : vector<1x256xf32> to vector<128x256xf32>
    %198 = arith.mulf %193, %197 : vector<128x256xf32>
    %199 = vector.broadcast %185 : vector<1x256xf32> to vector<128x256xf32>
    %200 = arith.mulf %198, %199 : vector<128x256xf32>
    %201 = vector.broadcast %187 : vector<1x256xf32> to vector<128x256xf32>
    %202 = arith.addf %200, %201 : vector<128x256xf32>
    %cst_141 = arith.constant 0.000000e+00 : f32
    %203 = vector.broadcast %cst_141 : f32 to vector<128x256xf32>
    %204 = arith.maximumf %202, %203 : vector<128x256xf32>
    %c2_142 = arith.constant 2 : index
    %c0_143 = arith.constant 0 : index
    %c0_144 = arith.constant 0 : index
    %205 = vector.load %arg15[%c2_142, %c0_143, %c0_144] : memref<3x256x128xf32, #tpu.memory_space<vmem>>, vector<1x256x128xf32>
    %206 = vector.shape_cast %205 : vector<1x256x128xf32> to vector<256x128xf32>
    %cst_145 = arith.constant dense<0.000000e+00> : vector<128x128xf32>
    %207 = tpu.matmul %204, %206, %cst_145 {dimension_numbers = #tpu.dot_dimension_numbers<[1], [0], [0], [1], [0, 0, 1, 1], [], []>} : vector<128x256xf32>, vector<256x128xf32>, vector<128x128xf32> -> vector<128x128xf32>
    %c2_146 = arith.constant 2 : index
    %c0_147 = arith.constant 0 : index
    %c0_148 = arith.constant 0 : index
    %208 = vector.load %arg16[%c2_146, %c0_147, %c0_148] : memref<3x1x128xf32, #tpu.memory_space<vmem>>, vector<1x1x128xf32>
    %209 = vector.shape_cast %208 : vector<1x1x128xf32> to vector<1x128xf32>
    %210 = vector.broadcast %209 : vector<1x128xf32> to vector<128x128xf32>
    %211 = arith.addf %207, %210 : vector<128x128xf32>
    %c2_149 = arith.constant 2 : index
    %c0_150 = arith.constant 0 : index
    %c0_151 = arith.constant 0 : index
    %212 = vector.load %arg17[%c2_149, %c0_150, %c0_151] : memref<3x1x128xf32, #tpu.memory_space<vmem>>, vector<1x1x128xf32>
    %213 = vector.shape_cast %212 : vector<1x1x128xf32> to vector<1x128xf32>
    %c2_152 = arith.constant 2 : index
    %c0_153 = arith.constant 0 : index
    %c0_154 = arith.constant 0 : index
    %214 = vector.load %arg18[%c2_152, %c0_153, %c0_154] : memref<3x1x128xf32, #tpu.memory_space<vmem>>, vector<1x1x128xf32>
    %215 = vector.shape_cast %214 : vector<1x1x128xf32> to vector<1x128xf32>
    %c2_155 = arith.constant 2 : index
    %c0_156 = arith.constant 0 : index
    %c0_157 = arith.constant 0 : index
    %216 = vector.load %arg19[%c2_155, %c0_156, %c0_157] : memref<3x1x128xf32, #tpu.memory_space<vmem>>, vector<1x1x128xf32>
    %217 = vector.shape_cast %216 : vector<1x1x128xf32> to vector<1x128xf32>
    %c2_158 = arith.constant 2 : index
    %c0_159 = arith.constant 0 : index
    %c0_160 = arith.constant 0 : index
    %218 = vector.load %arg20[%c2_158, %c0_159, %c0_160] : memref<3x1x128xf32, #tpu.memory_space<vmem>>, vector<1x1x128xf32>
    %219 = vector.shape_cast %218 : vector<1x1x128xf32> to vector<1x128xf32>
    %220 = vector.broadcast %217 : vector<1x128xf32> to vector<128x128xf32>
    %221 = arith.subf %211, %220 : vector<128x128xf32>
    %cst_161 = arith.constant 9.99999974E-6 : f32
    %222 = vector.broadcast %cst_161 : f32 to vector<1x128xf32>
    %223 = arith.addf %219, %222 : vector<1x128xf32>
    %224 = math.rsqrt %223 : vector<1x128xf32>
    %225 = vector.broadcast %224 : vector<1x128xf32> to vector<128x128xf32>
    %226 = arith.mulf %221, %225 : vector<128x128xf32>
    %227 = vector.broadcast %213 : vector<1x128xf32> to vector<128x128xf32>
    %228 = arith.mulf %226, %227 : vector<128x128xf32>
    %229 = vector.broadcast %215 : vector<1x128xf32> to vector<128x128xf32>
    %230 = arith.addf %228, %229 : vector<128x128xf32>
    %c0_162 = arith.constant 0 : index
    %c0_163 = arith.constant 0 : index
    %231 = vector.load %arg21[%c0_162, %c0_163] : memref<128x128xf32, #tpu.memory_space<vmem>>, vector<128x128xf32>
    tpu.vector_store %arg21[%c0_162, %c0_163], %230 {strides = array<i32>} : memref<128x128xf32, #tpu.memory_space<vmem>>, vector<128x128xf32>,
    %232 = tpu.iota {dimensions = array<i32: 0>} : vector<8x128xi32>
    %c0_164 = arith.constant 0 : index
    %c0_165 = arith.constant 0 : index
    %233 = vector.load %arg5[%c0_164, %c0_165] : memref<1x128xi32, #tpu.memory_space<vmem>>, vector<1x128xi32>
    %234 = vector.broadcast %233 : vector<1x128xi32> to vector<8x128xi32>
    %235 = arith.cmpi eq, %232, %234 : vector<8x128xi32>
    %236 = arith.extui %235 : vector<8x128xi1> to vector<8x128xi32>
    %237 = arith.sitofp %236 : vector<8x128xi32> to vector<8x128xf32>
    %cst_166 = arith.constant dense<0.000000e+00> : vector<8x128xf32>
    %238 = tpu.matmul %237, %230, %cst_166 {dimension_numbers = #tpu.dot_dimension_numbers<[1], [0], [0], [1], [0, 0, 1, 1], [], []>} : vector<8x128xf32>, vector<128x128xf32>, vector<8x128xf32> -> vector<8x128xf32>
    %cst_167 = arith.constant dense<0.000000e+00> : vector<8xf32>
    %239 = vector.multi_reduction <add>, %237, %cst_167 [1] : vector<8x128xf32> to vector<8xf32>
    %240 = vector.shape_cast %239 : vector<8xf32> to vector<8x1xf32>
    %cst_168 = arith.constant 9.99999971E-10 : f32
    %241 = vector.broadcast %cst_168 : f32 to vector<8x1xf32>
    %242 = arith.addf %240, %241 : vector<8x1xf32>
    %243 = vector.broadcast %242 : vector<8x1xf32> to vector<8x128xf32>
    %244 = arith.divf %238, %243 : vector<8x128xf32>
    %c0_169 = arith.constant 0 : index
    %c0_170 = arith.constant 0 : index
    %245 = vector.load %arg22[%c0_169, %c0_170] : memref<8x128xf32, #tpu.memory_space<vmem>>, vector<8x128xf32>
    tpu.vector_store %arg22[%c0_169, %c0_170], %244 {strides = array<i32>} : memref<8x128xf32, #tpu.memory_space<vmem>>, vector<8x128xf32>,
    return
  }
  func.func @transform_0(%arg0: i32) -> (i32, i32) {
    %c0_i32 = arith.constant 0 : i32
    %c0_i32_0 = arith.constant 0 : i32
    %c0_i32_1 = arith.constant 0 : i32
    return %c0_i32, %c0_i32_0 : i32, i32
  }
  func.func @transform_1(%arg0: i32) -> (i32, i32) {
    %c0_i32 = arith.constant 0 : i32
    %c0_i32_0 = arith.constant 0 : i32
    %c0_i32_1 = arith.constant 0 : i32
    return %c0_i32, %c0_i32_0 : i32, i32
  }
  func.func @transform_2(%arg0: i32) -> (i32, i32) {
    %c0_i32 = arith.constant 0 : i32
    %c0_i32_0 = arith.constant 0 : i32
    %c0_i32_1 = arith.constant 0 : i32
    return %c0_i32, %c0_i32_0 : i32, i32
  }
  func.func @transform_3(%arg0: i32) -> (i32, i32) {
    %c0_i32 = arith.constant 0 : i32
    %c0_i32_0 = arith.constant 0 : i32
    %c0_i32_1 = arith.constant 0 : i32
    return %c0_i32, %c0_i32_0 : i32, i32
  }
  func.func @transform_4(%arg0: i32) -> (i32, i32) {
    %c0_i32 = arith.constant 0 : i32
    %c0_i32_0 = arith.constant 0 : i32
    %c0_i32_1 = arith.constant 0 : i32
    return %c0_i32, %c0_i32_0 : i32, i32
  }
  func.func @transform_5(%arg0: i32) -> (i32, i32) {
    %c0_i32 = arith.constant 0 : i32
    %c0_i32_0 = arith.constant 0 : i32
    %c0_i32_1 = arith.constant 0 : i32
    return %c0_i32, %c0_i32_0 : i32, i32
  }
  func.func @transform_6(%arg0: i32) -> (i32, i32, i32) {
    %c0_i32 = arith.constant 0 : i32
    %c0_i32_0 = arith.constant 0 : i32
    %c0_i32_1 = arith.constant 0 : i32
    %c0_i32_2 = arith.constant 0 : i32
    return %c0_i32, %c0_i32_0, %c0_i32_1 : i32, i32, i32
  }
  func.func @transform_7(%arg0: i32) -> (i32, i32, i32) {
    %c0_i32 = arith.constant 0 : i32
    %c0_i32_0 = arith.constant 0 : i32
    %c0_i32_1 = arith.constant 0 : i32
    %c0_i32_2 = arith.constant 0 : i32
    return %c0_i32, %c0_i32_0, %c0_i32_1 : i32, i32, i32
  }
  func.func @transform_8(%arg0: i32) -> (i32, i32, i32) {
    %c0_i32 = arith.constant 0 : i32
    %c0_i32_0 = arith.constant 0 : i32
    %c0_i32_1 = arith.constant 0 : i32
    %c0_i32_2 = arith.constant 0 : i32
    return %c0_i32, %c0_i32_0, %c0_i32_1 : i32, i32, i32
  }
  func.func @transform_9(%arg0: i32) -> (i32, i32, i32) {
    %c0_i32 = arith.constant 0 : i32
    %c0_i32_0 = arith.constant 0 : i32
    %c0_i32_1 = arith.constant 0 : i32
    %c0_i32_2 = arith.constant 0 : i32
    return %c0_i32, %c0_i32_0, %c0_i32_1 : i32, i32, i32
  }
  func.func @transform_10(%arg0: i32) -> (i32, i32, i32) {
    %c0_i32 = arith.constant 0 : i32
    %c0_i32_0 = arith.constant 0 : i32
    %c0_i32_1 = arith.constant 0 : i32
    %c0_i32_2 = arith.constant 0 : i32
    return %c0_i32, %c0_i32_0, %c0_i32_1 : i32, i32, i32
  }
  func.func @transform_11(%arg0: i32) -> (i32, i32, i32) {
    %c0_i32 = arith.constant 0 : i32
    %c0_i32_0 = arith.constant 0 : i32
    %c0_i32_1 = arith.constant 0 : i32
    %c0_i32_2 = arith.constant 0 : i32
    return %c0_i32, %c0_i32_0, %c0_i32_1 : i32, i32, i32
  }
  func.func @transform_12(%arg0: i32) -> (i32, i32, i32) {
    %c0_i32 = arith.constant 0 : i32
    %c0_i32_0 = arith.constant 0 : i32
    %c0_i32_1 = arith.constant 0 : i32
    %c0_i32_2 = arith.constant 0 : i32
    return %c0_i32, %c0_i32_0, %c0_i32_1 : i32, i32, i32
  }
  func.func @transform_13(%arg0: i32) -> (i32, i32, i32) {
    %c0_i32 = arith.constant 0 : i32
    %c0_i32_0 = arith.constant 0 : i32
    %c0_i32_1 = arith.constant 0 : i32
    %c0_i32_2 = arith.constant 0 : i32
    return %c0_i32, %c0_i32_0, %c0_i32_1 : i32, i32, i32
  }
  func.func @transform_14(%arg0: i32) -> (i32, i32, i32) {
    %c0_i32 = arith.constant 0 : i32
    %c0_i32_0 = arith.constant 0 : i32
    %c0_i32_1 = arith.constant 0 : i32
    %c0_i32_2 = arith.constant 0 : i32
    return %c0_i32, %c0_i32_0, %c0_i32_1 : i32, i32, i32
  }
  func.func @transform_15(%arg0: i32) -> (i32, i32, i32) {
    %c0_i32 = arith.constant 0 : i32
    %c0_i32_0 = arith.constant 0 : i32
    %c0_i32_1 = arith.constant 0 : i32
    %c0_i32_2 = arith.constant 0 : i32
    return %c0_i32, %c0_i32_0, %c0_i32_1 : i32, i32, i32
  }
  func.func @transform_16(%arg0: i32) -> (i32, i32, i32) {
    %c0_i32 = arith.constant 0 : i32
    %c0_i32_0 = arith.constant 0 : i32
    %c0_i32_1 = arith.constant 0 : i32
    %c0_i32_2 = arith.constant 0 : i32
    return %c0_i32, %c0_i32_0, %c0_i32_1 : i32, i32, i32
  }
  func.func @transform_17(%arg0: i32) -> (i32, i32, i32) {
    %c0_i32 = arith.constant 0 : i32
    %c0_i32_0 = arith.constant 0 : i32
    %c0_i32_1 = arith.constant 0 : i32
    %c0_i32_2 = arith.constant 0 : i32
    return %c0_i32, %c0_i32_0, %c0_i32_1 : i32, i32, i32
  }
  func.func @transform_18(%arg0: i32) -> (i32, i32, i32) {
    %c0_i32 = arith.constant 0 : i32
    %c0_i32_0 = arith.constant 0 : i32
    %c0_i32_1 = arith.constant 0 : i32
    %c0_i32_2 = arith.constant 0 : i32
    return %c0_i32, %c0_i32_0, %c0_i32_1 : i32, i32, i32
  }
  func.func @transform_19(%arg0: i32) -> (i32, i32, i32) {
    %c0_i32 = arith.constant 0 : i32
    %c0_i32_0 = arith.constant 0 : i32
    %c0_i32_1 = arith.constant 0 : i32
    %c0_i32_2 = arith.constant 0 : i32
    return %c0_i32, %c0_i32_0, %c0_i32_1 : i32, i32, i32
  }
  func.func @transform_20(%arg0: i32) -> (i32, i32) {
    %c0_i32 = arith.constant 0 : i32
    %c0_i32_0 = arith.constant 0 : i32
    %c0_i32_1 = arith.constant 0 : i32
    return %c0_i32, %c0_i32_0 : i32, i32
  }
  func.func @transform_21(%arg0: i32) -> (i32, i32) {
    %c0_i32 = arith.constant 0 : i32
    %c0_i32_0 = arith.constant 0 : i32
    %c0_i32_1 = arith.constant 0 : i32
    return %c0_i32, %c0_i32_0 : i32, i32
  }
}

</mosaic_0001>

<llo_original>
// kernel: tpu_custom_call.1
$region0: #{tpu_custom_call.1}
  #allocation0 [shape = 'u32[]', space=smem, size = 0x4, offset = 0x4, fixed_abs, tag = 'smem constant byte address 0x4 - core index']
  #allocation1 [shape = 'u32[72,128]{1,0:T(1,128)}', space=vmem, size = 0x9000, scoped, tag = 'internal scratch']
  %s0 = inlined_call_operand.vmem [shape: s32[128,1], index: 0, kind: input, shape index: {}]
  %s1 = inlined_call_operand.vmem [shape: s32[256,1], index: 1, kind: input, shape index: {}]
  %s2 = inlined_call_operand.vmem [shape: s32[1,256], index: 2, kind: input, shape index: {}]
  %s3 = inlined_call_operand.vmem [shape: s32[256,1], index: 3, kind: input, shape index: {}]
  %s4 = inlined_call_operand.vmem [shape: s32[1,128], index: 4, kind: input, shape index: {}]
  %s5 = inlined_call_operand.vmem [shape: f32[16,128], index: 5, kind: input, shape index: {}]
  %s6 = inlined_call_operand.vmem [shape: f32[3,8,128], index: 6, kind: input, shape index: {}]
  %s7 = inlined_call_operand.vmem [shape: f32[3,1,128], index: 7, kind: input, shape index: {}]
  %s8 = inlined_call_operand.hbm [shape: f32[3,128,256], index: 8, kind: input, shape index: {}]
  %s9 = inlined_call_operand.vmem [shape: f32[3,1,256], index: 9, kind: input, shape index: {}]
  %s10 = inlined_call_operand.vmem [shape: f32[3,1,256], index: 10, kind: input, shape index: {}]
  %s11 = inlined_call_operand.vmem [shape: f32[3,1,256], index: 11, kind: input, shape index: {}]
  %s12 = inlined_call_operand.vmem [shape: f32[3,1,256], index: 12, kind: input, shape index: {}]
  %s13 = inlined_call_operand.vmem [shape: f32[3,1,256], index: 13, kind: input, shape index: {}]
  %s14 = inlined_call_operand.hbm [shape: f32[3,256,128], index: 14, kind: input, shape index: {}]
  %s15 = inlined_call_operand.vmem [shape: f32[3,1,128], index: 15, kind: input, shape index: {}]
  %s16 = inlined_call_operand.vmem [shape: f32[3,1,128], index: 16, kind: input, shape index: {}]
  %s17 = inlined_call_operand.vmem [shape: f32[3,1,128], index: 17, kind: input, shape index: {}]
  %s18 = inlined_call_operand.vmem [shape: f32[3,1,128], index: 18, kind: input, shape index: {}]
  %s19 = inlined_call_operand.vmem [shape: f32[3,1,128], index: 19, kind: input, shape index: {}]
  %s20 = inlined_call_operand.hbm [shape: f32[128,128], index: 20, kind: output, shape index: {0}]
  %s21 = inlined_call_operand.hbm [shape: f32[8,128], index: 21, kind: output, shape index: {1}]
  %22 = xla_tuple %s20, %s21
  %s23 = sld [smem:[#allocation0]]
  $region106: #{tpu_custom_call.1} parent=0
    _
  %s25 = ssub.s32 1, %s23
  %s26 = scalar_select 0, %s25, %s23
  $region1: #{tpu_custom_call.1} parent=0
    #allocation2 [shape = 'u8[393216]{0}', space=vmem, size = 0x60000, scoped, tag = 'input window, operand 8, single buffered']
    #allocation3 [shape = 's32[1]{0}', space=sflag, size = 0x4, scoped, tag = 'scoped memory for tpu_custom_call.1']
    #allocation4 [shape = 's32[1]{0}', space=sflag, size = 0x4, scoped, tag = 'scoped memory for tpu_custom_call.1']
    #allocation5 [shape = 'u8[393216]{0}', space=vmem, size = 0x60000, scoped, tag = 'input window, operand 14, single buffered']
    #allocation6 [shape = 's32[1]{0}', space=sflag, size = 0x4, scoped, tag = 'scoped memory for tpu_custom_call.1']
    #allocation7 [shape = 'u8[65536]{0}', space=vmem, size = 0x10000, scoped, tag = 'output window, operand 0, single buffered']
    #allocation8 [shape = 'u8[4096]{0}', space=vmem, size = 0x1000, scoped, tag = 'output window, operand 1, single buffered']
    #allocation9 [shape = 's32[1]{0}', space=sflag, size = 0x4, scoped, tag = 'scoped memory for tpu_custom_call.1']
    %27 = vsyncpa [#allocation3], 0
    %28 = vsyncpa [#allocation6], 0
    %29 = vsyncpa [#allocation4], 0
    %30 = vsyncpa [#allocation9], 0
    // Predicated region
    $region2: #{tpu_custom_call.1} parent=1 // pred_check
      _
    $region3: #{tpu_custom_call.1} parent=1 // pred_check_branch
      %32 = sbr.rel (0) target = $region5
    $region4: #{tpu_custom_call.1} parent=1 // pred_region
      _
    $region5: #{tpu_custom_call.1} parent=1 // pred_fallthru
      _
    // Predicated region
    $region6: #{tpu_custom_call.1} parent=1 // pred_check
      _
    $region7: #{tpu_custom_call.1} parent=1 // pred_check_branch
      %34 = sbr.rel (0) target = $region9
    $region8: #{tpu_custom_call.1} parent=1 // pred_region
      _
    $region9: #{tpu_custom_call.1} parent=1 // pred_fallthru
      _
    // Predicated region
    $region10: #{tpu_custom_call.1} parent=1 // pred_check
      _
    $region11: #{tpu_custom_call.1} parent=1 // pred_check_branch
      %36 = sbr.rel (0) target = $region13
    $region12: #{tpu_custom_call.1} parent=1 // pred_region
      _
    $region13: #{tpu_custom_call.1} parent=1 // pred_fallthru
      _
    // Predicated region
    $region14: #{tpu_custom_call.1} parent=1 // pred_check
      _
    $region15: #{tpu_custom_call.1} parent=1 // pred_check_branch
      %38 = sbr.rel (0) target = $region17
    $region16: #{tpu_custom_call.1} parent=1 // pred_region
      _
    $region17: #{tpu_custom_call.1} parent=1 // pred_fallthru
      _
    // Predicated region
    $region18: #{tpu_custom_call.1} parent=1 // pred_check
      _
    $region19: #{tpu_custom_call.1} parent=1 // pred_check_branch
      %40 = sbr.rel (0) target = $region21
    $region20: #{tpu_custom_call.1} parent=1 // pred_region
      _
    $region21: #{tpu_custom_call.1} parent=1 // pred_fallthru
      _
    // Predicated region
    $region22: #{tpu_custom_call.1} parent=1 // pred_check
      _
    $region23: #{tpu_custom_call.1} parent=1 // pred_check_branch
      %42 = sbr.rel (0) target = $region25
    $region24: #{tpu_custom_call.1} parent=1 // pred_region
      _
    $region25: #{tpu_custom_call.1} parent=1 // pred_fallthru
      _
    // Predicated region
    $region26: #{tpu_custom_call.1} parent=1 // pred_check
      _
    $region27: #{tpu_custom_call.1} parent=1 // pred_check_branch
      %44 = sbr.rel (0) target = $region29
    $region28: #{tpu_custom_call.1} parent=1 // pred_region
      _
    $region29: #{tpu_custom_call.1} parent=1 // pred_fallthru
      _
    // Predicated region
    $region30: #{tpu_custom_call.1} parent=1 // pred_check
      _
    $region31: #{tpu_custom_call.1} parent=1 // pred_check_branch
      %46 = sbr.rel (0) target = $region33
    $region32: #{tpu_custom_call.1} parent=1 // pred_region
      _
    $region33: #{tpu_custom_call.1} parent=1 // pred_fallthru
      _
    // Predicated region
    $region34: #{tpu_custom_call.1} parent=1 // pred_check
      _
    $region35: #{tpu_custom_call.1} parent=1 // pred_check_branch
      %48 = sbr.rel (0) target = $region37
    $region36: #{tpu_custom_call.1} parent=1 // pred_region
      %50 = vsyncadd [#allocation3], 0
      %s51 = sshll.u32 %s8, 4
      %s52 = int_to_ptr.hbm [resolvable:$true] %s51
      %s53 = sshll.u32 [#allocation2], 4
      %s54 = int_to_ptr.vmem [resolvable:$true] %s53
      %59 = dma.hbm_to_vmem [thread:$0]  %s52, 12288, %s54, [#allocation3], 256, 256, 16
    $region37: #{tpu_custom_call.1} parent=1 // pred_fallthru
      _
    // Predicated region
    $region38: #{tpu_custom_call.1} parent=1 // pred_check
      _
    $region39: #{tpu_custom_call.1} parent=1 // pred_check_branch
      %61 = sbr.rel (0) target = $region41
    $region40: #{tpu_custom_call.1} parent=1 // pred_region
      _
    $region41: #{tpu_custom_call.1} parent=1 // pred_fallthru
      _
    // Predicated region
    $region42: #{tpu_custom_call.1} parent=1 // pred_check
      _
    $region43: #{tpu_custom_call.1} parent=1 // pred_check_branch
      %63 = sbr.rel (0) target = $region45
    $region44: #{tpu_custom_call.1} parent=1 // pred_region
      _
    $region45: #{tpu_custom_call.1} parent=1 // pred_fallthru
      _
    // Predicated region
    $region46: #{tpu_custom_call.1} parent=1 // pred_check
      _
    $region47: #{tpu_custom_call.1} parent=1 // pred_check_branch
      %65 = sbr.rel (0) target = $region49
    $region48: #{tpu_custom_call.1} parent=1 // pred_region
      _
    $region49: #{tpu_custom_call.1} parent=1 // pred_fallthru
      _
    // Predicated region
    $region50: #{tpu_custom_call.1} parent=1 // pred_check
      _
    $region51: #{tpu_custom_call.1} parent=1 // pred_check_branch
      %67 = sbr.rel (0) target = $region53
    $region52: #{tpu_custom_call.1} parent=1 // pred_region
      _
    $region53: #{tpu_custom_call.1} parent=1 // pred_fallthru
      _
    // Predicated region
    $region54: #{tpu_custom_call.1} parent=1 // pred_check
      _
    $region55: #{tpu_custom_call.1} parent=1 // pred_check_branch
      %69 = sbr.rel (0) target = $region57
    $region56: #{tpu_custom_call.1} parent=1 // pred_region
      _
    $region57: #{tpu_custom_call.1} parent=1 // pred_fallthru
      _
    // Predicated region
    $region58: #{tpu_custom_call.1} parent=1 // pred_check
      _
    $region59: #{tpu_custom_call.1} parent=1 // pred_check_branch
      %71 = sbr.rel (0) target = $region61
    $region60: #{tpu_custom_call.1} parent=1 // pred_region
      %73 = vsyncadd [#allocation6], 0
      %s74 = sshll.u32 %s14, 4
      %s75 = int_to_ptr.hbm [resolvable:$true] %s74
      %s76 = sshll.u32 [#allocation5], 4
      %s77 = int_to_ptr.vmem [resolvable:$true] %s76
      %82 = dma.hbm_to_vmem [thread:$0]  %s75, 12288, %s77, [#allocation6], 128, 128, 8
    $region61: #{tpu_custom_call.1} parent=1 // pred_fallthru
      _
    // Predicated region
    $region62: #{tpu_custom_call.1} parent=1 // pred_check
      _
    $region63: #{tpu_custom_call.1} parent=1 // pred_check_branch
      %84 = sbr.rel (0) target = $region65
    $region64: #{tpu_custom_call.1} parent=1 // pred_region
      _
    $region65: #{tpu_custom_call.1} parent=1 // pred_fallthru
      _
    // Predicated region
    $region66: #{tpu_custom_call.1} parent=1 // pred_check
      _
    $region67: #{tpu_custom_call.1} parent=1 // pred_check_branch
      %86 = sbr.rel (0) target = $region69
    $region68: #{tpu_custom_call.1} parent=1 // pred_region
      _
    $region69: #{tpu_custom_call.1} parent=1 // pred_fallthru
      _
    // Predicated region
    $region70: #{tpu_custom_call.1} parent=1 // pred_check
      _
    $region71: #{tpu_custom_call.1} parent=1 // pred_check_branch
      %88 = sbr.rel (0) target = $region73
    $region72: #{tpu_custom_call.1} parent=1 // pred_region
      _
    $region73: #{tpu_custom_call.1} parent=1 // pred_fallthru
      _
    // Predicated region
    $region74: #{tpu_custom_call.1} parent=1 // pred_check
      _
    $region75: #{tpu_custom_call.1} parent=1 // pred_check_branch
      %90 = sbr.rel (0) target = $region77
    $region76: #{tpu_custom_call.1} parent=1 // pred_region
      _
    $region77: #{tpu_custom_call.1} parent=1 // pred_fallthru
      _
    // Predicated region
    $region78: #{tpu_custom_call.1} parent=1 // pred_check
      _
    $region79: #{tpu_custom_call.1} parent=1 // pred_check_branch
      %92 = sbr.rel (0) target = $region81
    $region80: #{tpu_custom_call.1} parent=1 // pred_region
      _
    $region81: #{tpu_custom_call.1} parent=1 // pred_fallthru
      _
    // Predicated region
    $region82: #{tpu_custom_call.1} parent=1 // pred_check
      _
    $region83: #{tpu_custom_call.1} parent=1 // pred_check_branch
      %94 = sbr.rel (0) target = $region85
    $region84: #{tpu_custom_call.1} parent=1 // pred_region
      %96 = dma.done [#allocation3], 12288
    $region85: #{tpu_custom_call.1} parent=1 // pred_fallthru
      _
    // Predicated region
    $region86: #{tpu_custom_call.1} parent=1 // pred_check
      _
    $region87: #{tpu_custom_call.1} parent=1 // pred_check_branch
      %98 = sbr.rel (0) target = $region89
    $region88: #{tpu_custom_call.1} parent=1 // pred_region
      %100 = dma.done [#allocation6], 12288
    $region89: #{tpu_custom_call.1} parent=1 // pred_fallthru
      _
    %v101 = vlaneseq
    %v102 = vand.u32 %v101, 127
    %v103 = vld [vmem:[%s0] sm:$0xff]
    %v104 = vld [vmem:[%s0 + $0x8] sm:$0xff]
    %v105 = vld [vmem:[%s0 + $0x10] sm:$0xff]
    %v106 = vld [vmem:[%s0 + $0x18] sm:$0xff]
    %v107 = vld [vmem:[%s0 + $0x20] sm:$0xff]
    %v108 = vld [vmem:[%s0 + $0x28] sm:$0xff]
    %v109 = vld [vmem:[%s0 + $0x30] sm:$0xff]
    %v110 = vld [vmem:[%s0 + $0x38] sm:$0xff]
    %v111 = vld [vmem:[%s0 + $0x40] sm:$0xff]
    %v112 = vld [vmem:[%s0 + $0x48] sm:$0xff]
    %v113 = vld [vmem:[%s0 + $0x50] sm:$0xff]
    %v114 = vld [vmem:[%s0 + $0x58] sm:$0xff]
    %v115 = vld [vmem:[%s0 + $0x60] sm:$0xff]
    %v116 = vld [vmem:[%s0 + $0x68] sm:$0xff]
    %v117 = vld [vmem:[%s0 + $0x70] sm:$0xff]
    %v118 = vld [vmem:[%s0 + $0x78] sm:$0xff]
    %119 = vset.pattern.permute.xlu0 0
    %120 = vperm.xlu0 %119, %v103
    %v121 = vpop.permute.xlu0 %120
    %122 = vset.pattern.permute.xlu0 0
    %123 = vperm.xlu0 %122, %v104
    %v124 = vpop.permute.xlu0 %123
    %125 = vset.pattern.permute.xlu0 0
    %126 = vperm.xlu0 %125, %v105
    %v127 = vpop.permute.xlu0 %126
    %128 = vset.pattern.permute.xlu0 0
    %129 = vperm.xlu0 %128, %v106
    %v130 = vpop.permute.xlu0 %129
    %131 = vset.pattern.permute.xlu0 0
    %132 = vperm.xlu0 %131, %v107
    %v133 = vpop.permute.xlu0 %132
    %134 = vset.pattern.permute.xlu0 0
    %135 = vperm.xlu0 %134, %v108
    %v136 = vpop.permute.xlu0 %135
    %137 = vset.pattern.permute.xlu0 0
    %138 = vperm.xlu0 %137, %v109
    %v139 = vpop.permute.xlu0 %138
    %140 = vset.pattern.permute.xlu0 0
    %141 = vperm.xlu0 %140, %v110
    %v142 = vpop.permute.xlu0 %141
    %143 = vset.pattern.permute.xlu0 0
    %144 = vperm.xlu0 %143, %v111
    %v145 = vpop.permute.xlu0 %144
    %146 = vset.pattern.permute.xlu0 0
    %147 = vperm.xlu0 %146, %v112
    %v148 = vpop.permute.xlu0 %147
    %149 = vset.pattern.permute.xlu0 0
    %150 = vperm.xlu0 %149, %v113
    %v151 = vpop.permute.xlu0 %150
    %152 = vset.pattern.permute.xlu0 0
    %153 = vperm.xlu0 %152, %v114
    %v154 = vpop.permute.xlu0 %153
    %155 = vset.pattern.permute.xlu0 0
    %156 = vperm.xlu0 %155, %v115
    %v157 = vpop.permute.xlu0 %156
    %158 = vset.pattern.permute.xlu0 0
    %159 = vperm.xlu0 %158, %v116
    %v160 = vpop.permute.xlu0 %159
    %161 = vset.pattern.permute.xlu0 0
    %162 = vperm.xlu0 %161, %v117
    %v163 = vpop.permute.xlu0 %162
    %164 = vset.pattern.permute.xlu0 0
    %165 = vperm.xlu0 %164, %v118
    %v166 = vpop.permute.xlu0 %165
    %vm167 = vcmp.eq.s32.totalorder %v102, %v121
    %vm168 = vcmp.eq.s32.totalorder %v102, %v124
    %vm169 = vcmp.eq.s32.totalorder %v102, %v127
    %vm170 = vcmp.eq.s32.totalorder %v102, %v130
    %vm171 = vcmp.eq.s32.totalorder %v102, %v133
    %vm172 = vcmp.eq.s32.totalorder %v102, %v136
    %vm173 = vcmp.eq.s32.totalorder %v102, %v139
    %vm174 = vcmp.eq.s32.totalorder %v102, %v142
    %vm175 = vcmp.eq.s32.totalorder %v102, %v145
    %vm176 = vcmp.eq.s32.totalorder %v102, %v148
    %vm177 = vcmp.eq.s32.totalorder %v102, %v151
    %vm178 = vcmp.eq.s32.totalorder %v102, %v154
    %vm179 = vcmp.eq.s32.totalorder %v102, %v157
    %vm180 = vcmp.eq.s32.totalorder %v102, %v160
    %vm181 = vcmp.eq.s32.totalorder %v102, %v163
    %vm182 = vcmp.eq.s32.totalorder %v102, %v166
    %v183 = vsel %vm167, 1, 0
    %v184 = vsel %vm168, 1, 0
    %v185 = vsel %vm169, 1, 0
    %v186 = vsel %vm170, 1, 0
    %v187 = vsel %vm171, 1, 0
    %v188 = vsel %vm172, 1, 0
    %v189 = vsel %vm173, 1, 0
    %v190 = vsel %vm174, 1, 0
    %v191 = vsel %vm175, 1, 0
    %v192 = vsel %vm176, 1, 0
    %v193 = vsel %vm177, 1, 0
    %v194 = vsel %vm178, 1, 0
    %v195 = vsel %vm179, 1, 0
    %v196 = vsel %vm180, 1, 0
    %v197 = vsel %vm181, 1, 0
    %v198 = vsel %vm182, 1, 0
    %v199 = vcvt.s32.f32 %v183
    %v200 = vcvt.s32.f32 %v184
    %v201 = vcvt.s32.f32 %v185
    %v202 = vcvt.s32.f32 %v186
    %v203 = vcvt.s32.f32 %v187
    %v204 = vcvt.s32.f32 %v188
    %v205 = vcvt.s32.f32 %v189
    %v206 = vcvt.s32.f32 %v190
    %v207 = vcvt.s32.f32 %v191
    %v208 = vcvt.s32.f32 %v192
    %v209 = vcvt.s32.f32 %v193
    %v210 = vcvt.s32.f32 %v194
    %v211 = vcvt.s32.f32 %v195
    %v212 = vcvt.s32.f32 %v196
    %v213 = vcvt.s32.f32 %v197
    %v214 = vcvt.s32.f32 %v198
    %v215 = vld [vmem:[%s5] sm:$0xff]
    %v216 = vld [vmem:[%s5 + $0x8] sm:$0xff]
    %vm217 = vcmask 130048
    %v219 = vsel %vm217, %v199, 0
    %v222 = vsel %vm217, %v200, 0
    %v225 = vsel %vm217, %v201, 0
    %v228 = vsel %vm217, %v202, 0
    %v231 = vsel %vm217, %v203, 0
    %v234 = vsel %vm217, %v204, 0
    %v237 = vsel %vm217, %v205, 0
    %v240 = vsel %vm217, %v206, 0
    %v243 = vsel %vm217, %v207, 0
    %v246 = vsel %vm217, %v208, 0
    %v249 = vsel %vm217, %v209, 0
    %v252 = vsel %vm217, %v210, 0
    %v255 = vsel %vm217, %v211, 0
    %v258 = vsel %vm217, %v212, 0
    %v261 = vsel %vm217, %v213, 0
    %v264 = vsel %vm217, %v214, 0
    %266 = vmatpush.msra.mxu0 0.0
    %267 = vmatpush.msra.mxu0 0.0
    %268 = vmatpush.msra.mxu0 0.0
    %269 = vmatpush.msra.mxu0 0.0
    %270 = vmatpush.msra.mxu0 0.0
    %271 = vmatpush.msra.mxu0 0.0
    %272 = vmatpush.msra.mxu0 0.0
    %273 = vmatpush.msra.mxu0 0.0
    %274 = vmatpush.msra.mxu0 0.0
    %275 = vmatpush.msra.mxu0 0.0
    %276 = vmatpush.msra.mxu0 0.0
    %277 = vmatpush.msra.mxu0 0.0
    %278 = vmatpush.msra.mxu0 0.0
    %279 = vmatpush.msra.mxu0 0.0
    %280 = vmatpush.msra.mxu0 %v216
    %281 = vmatpush.msra.mxu0 %v215
    %282 = vmatmul.f32.gmra.mxu0 %v219
    %v283 = vpop.f32.mrf.mxu0
    %v284 = vadd.f32 0.0, %v283
    %285 = vmatmul.f32.gmra.mxu0 %v222
    %v286 = vpop.f32.mrf.mxu0
    %v287 = vadd.f32 0.0, %v286
    %288 = vmatmul.f32.gmra.mxu0 %v225
    %v289 = vpop.f32.mrf.mxu0
    %v290 = vadd.f32 0.0, %v289
    %291 = vmatmul.f32.gmra.mxu0 %v228
    %v292 = vpop.f32.mrf.mxu0
    %v293 = vadd.f32 0.0, %v292
    %294 = vmatmul.f32.gmra.mxu0 %v231
    %v295 = vpop.f32.mrf.mxu0
    %v296 = vadd.f32 0.0, %v295
    %297 = vmatmul.f32.gmra.mxu0 %v234
    %v298 = vpop.f32.mrf.mxu0
    %v299 = vadd.f32 0.0, %v298
    %300 = vmatmul.f32.gmra.mxu0 %v237
    %v301 = vpop.f32.mrf.mxu0
    %v302 = vadd.f32 0.0, %v301
    %303 = vmatmul.f32.gmra.mxu0 %v240
    %v304 = vpop.f32.mrf.mxu0
    %v305 = vadd.f32 0.0, %v304
    %306 = vmatmul.f32.gmra.mxu0 %v243
    %v307 = vpop.f32.mrf.mxu0
    %v308 = vadd.f32 0.0, %v307
    %309 = vmatmul.f32.gmra.mxu0 %v246
    %v310 = vpop.f32.mrf.mxu0
    %v311 = vadd.f32 0.0, %v310
    %312 = vmatmul.f32.gmra.mxu0 %v249
    %v313 = vpop.f32.mrf.mxu0
    %v314 = vadd.f32 0.0, %v313
    %315 = vmatmul.f32.gmra.mxu0 %v252
    %v316 = vpop.f32.mrf.mxu0
    %v317 = vadd.f32 0.0, %v316
    %318 = vmatmul.f32.gmra.mxu0 %v255
    %v319 = vpop.f32.mrf.mxu0
    %v320 = vadd.f32 0.0, %v319
    %321 = vmatmul.f32.gmra.mxu0 %v258
    %v322 = vpop.f32.mrf.mxu0
    %v323 = vadd.f32 0.0, %v322
    %324 = vmatmul.f32.gmra.mxu0 %v261
    %v325 = vpop.f32.mrf.mxu0
    %v326 = vadd.f32 0.0, %v325
    %327 = vmatmul.f32.gmra.mxu0 %v264
    %v328 = vpop.f32.mrf.mxu0
    %v329 = vadd.f32 0.0, %v328
    %330 = vdwg.mxu0
    %v331 = vld [vmem:[%s1] sm:$0xff]
    %v332 = vld [vmem:[%s1 + $0x8] sm:$0xff]
    %v333 = vld [vmem:[%s1 + $0x10] sm:$0xff]
    %v334 = vld [vmem:[%s1 + $0x18] sm:$0xff]
    %v335 = vld [vmem:[%s1 + $0x20] sm:$0xff]
    %v336 = vld [vmem:[%s1 + $0x28] sm:$0xff]
    %v337 = vld [vmem:[%s1 + $0x30] sm:$0xff]
    %v338 = vld [vmem:[%s1 + $0x38] sm:$0xff]
    %v339 = vld [vmem:[%s1 + $0x40] sm:$0xff]
    %v340 = vld [vmem:[%s1 + $0x48] sm:$0xff]
    %v341 = vld [vmem:[%s1 + $0x50] sm:$0xff]
    %v342 = vld [vmem:[%s1 + $0x58] sm:$0xff]
    %v343 = vld [vmem:[%s1 + $0x60] sm:$0xff]
    %v344 = vld [vmem:[%s1 + $0x68] sm:$0xff]
    %v345 = vld [vmem:[%s1 + $0x70] sm:$0xff]
    %v346 = vld [vmem:[%s1 + $0x78] sm:$0xff]
    %v347 = vld [vmem:[%s1 + $0x80] sm:$0xff]
    %v348 = vld [vmem:[%s1 + $0x88] sm:$0xff]
    %v349 = vld [vmem:[%s1 + $0x90] sm:$0xff]
    %v350 = vld [vmem:[%s1 + $0x98] sm:$0xff]
    %v351 = vld [vmem:[%s1 + $0xa0] sm:$0xff]
    %v352 = vld [vmem:[%s1 + $0xa8] sm:$0xff]
    %v353 = vld [vmem:[%s1 + $0xb0] sm:$0xff]
    %v354 = vld [vmem:[%s1 + $0xb8] sm:$0xff]
    %v355 = vld [vmem:[%s1 + $0xc0] sm:$0xff]
    %v356 = vld [vmem:[%s1 + $0xc8] sm:$0xff]
    %v357 = vld [vmem:[%s1 + $0xd0] sm:$0xff]
    %v358 = vld [vmem:[%s1 + $0xd8] sm:$0xff]
    %v359 = vld [vmem:[%s1 + $0xe0] sm:$0xff]
    %v360 = vld [vmem:[%s1 + $0xe8] sm:$0xff]
    %v361 = vld [vmem:[%s1 + $0xf0] sm:$0xff]
    %v362 = vld [vmem:[%s1 + $0xf8] sm:$0xff]
    %363 = vset.pattern.permute.xlu0 0
    %364 = vperm.xlu0 %363, %v331
    %v365 = vpop.permute.xlu0 %364
    %366 = vset.pattern.permute.xlu0 0
    %367 = vperm.xlu0 %366, %v332
    %v368 = vpop.permute.xlu0 %367
    %369 = vset.pattern.permute.xlu0 0
    %370 = vperm.xlu0 %369, %v333
    %v371 = vpop.permute.xlu0 %370
    %372 = vset.pattern.permute.xlu0 0
    %373 = vperm.xlu0 %372, %v334
    %v374 = vpop.permute.xlu0 %373
    %375 = vset.pattern.permute.xlu0 0
    %376 = vperm.xlu0 %375, %v335
    %v377 = vpop.permute.xlu0 %376
    %378 = vset.pattern.permute.xlu0 0
    %379 = vperm.xlu0 %378, %v336
    %v380 = vpop.permute.xlu0 %379
    %381 = vset.pattern.permute.xlu0 0
    %382 = vperm.xlu0 %381, %v337
    %v383 = vpop.permute.xlu0 %382
    %384 = vset.pattern.permute.xlu0 0
    %385 = vperm.xlu0 %384, %v338
    %v386 = vpop.permute.xlu0 %385
    %387 = vset.pattern.permute.xlu0 0
    %388 = vperm.xlu0 %387, %v339
    %v389 = vpop.permute.xlu0 %388
    %390 = vset.pattern.permute.xlu0 0
    %391 = vperm.xlu0 %390, %v340
    %v392 = vpop.permute.xlu0 %391
    %393 = vset.pattern.permute.xlu0 0
    %394 = vperm.xlu0 %393, %v341
    %v395 = vpop.permute.xlu0 %394
    %396 = vset.pattern.permute.xlu0 0
    %397 = vperm.xlu0 %396, %v342
    %v398 = vpop.permute.xlu0 %397
    %399 = vset.pattern.permute.xlu0 0
    %400 = vperm.xlu0 %399, %v343
    %v401 = vpop.permute.xlu0 %400
    %402 = vset.pattern.permute.xlu0 0
    %403 = vperm.xlu0 %402, %v344
    %v404 = vpop.permute.xlu0 %403
    %405 = vset.pattern.permute.xlu0 0
    %406 = vperm.xlu0 %405, %v345
    %v407 = vpop.permute.xlu0 %406
    %408 = vset.pattern.permute.xlu0 0
    %409 = vperm.xlu0 %408, %v346
    %v410 = vpop.permute.xlu0 %409
    %411 = vset.pattern.permute.xlu0 0
    %412 = vperm.xlu0 %411, %v347
    %v413 = vpop.permute.xlu0 %412
    %414 = vset.pattern.permute.xlu0 0
    %415 = vperm.xlu0 %414, %v348
    %v416 = vpop.permute.xlu0 %415
    %417 = vset.pattern.permute.xlu0 0
    %418 = vperm.xlu0 %417, %v349
    %v419 = vpop.permute.xlu0 %418
    %420 = vset.pattern.permute.xlu0 0
    %421 = vperm.xlu0 %420, %v350
    %v422 = vpop.permute.xlu0 %421
    %423 = vset.pattern.permute.xlu0 0
    %424 = vperm.xlu0 %423, %v351
    %v425 = vpop.permute.xlu0 %424
    %426 = vset.pattern.permute.xlu0 0
    %427 = vperm.xlu0 %426, %v352
    %v428 = vpop.permute.xlu0 %427
    %429 = vset.pattern.permute.xlu0 0
    %430 = vperm.xlu0 %429, %v353
    %v431 = vpop.permute.xlu0 %430
    %432 = vset.pattern.permute.xlu0 0
    %433 = vperm.xlu0 %432, %v354
    %v434 = vpop.permute.xlu0 %433
    %435 = vset.pattern.permute.xlu0 0
    %436 = vperm.xlu0 %435, %v355
    %v437 = vpop.permute.xlu0 %436
    %438 = vset.pattern.permute.xlu0 0
    %439 = vperm.xlu0 %438, %v356
    %v440 = vpop.permute.xlu0 %439
    %441 = vset.pattern.permute.xlu0 0
    %442 = vperm.xlu0 %441, %v357
    %v443 = vpop.permute.xlu0 %442
    %444 = vset.pattern.permute.xlu0 0
    %445 = vperm.xlu0 %444, %v358
    %v446 = vpop.permute.xlu0 %445
    %447 = vset.pattern.permute.xlu0 0
    %448 = vperm.xlu0 %447, %v359
    %v449 = vpop.permute.xlu0 %448
    %450 = vset.pattern.permute.xlu0 0
    %451 = vperm.xlu0 %450, %v360
    %v452 = vpop.permute.xlu0 %451
    %453 = vset.pattern.permute.xlu0 0
    %454 = vperm.xlu0 %453, %v361
    %v455 = vpop.permute.xlu0 %454
    %456 = vset.pattern.permute.xlu0 0
    %457 = vperm.xlu0 %456, %v362
    %v458 = vpop.permute.xlu0 %457
    %vm459 = vcmp.eq.s32.totalorder %v102, %v365
    %vm460 = vcmp.eq.s32.totalorder %v102, %v368
    %vm461 = vcmp.eq.s32.totalorder %v102, %v371
    %vm462 = vcmp.eq.s32.totalorder %v102, %v374
    %vm463 = vcmp.eq.s32.totalorder %v102, %v377
    %vm464 = vcmp.eq.s32.totalorder %v102, %v380
    %vm465 = vcmp.eq.s32.totalorder %v102, %v383
    %vm466 = vcmp.eq.s32.totalorder %v102, %v386
    %vm467 = vcmp.eq.s32.totalorder %v102, %v389
    %vm468 = vcmp.eq.s32.totalorder %v102, %v392
    %vm469 = vcmp.eq.s32.totalorder %v102, %v395
    %vm470 = vcmp.eq.s32.totalorder %v102, %v398
    %vm471 = vcmp.eq.s32.totalorder %v102, %v401
    %vm472 = vcmp.eq.s32.totalorder %v102, %v404
    %vm473 = vcmp.eq.s32.totalorder %v102, %v407
    %vm474 = vcmp.eq.s32.totalorder %v102, %v410
    %vm475 = vcmp.eq.s32.totalorder %v102, %v413
    %vm476 = vcmp.eq.s32.totalorder %v102, %v416
    %vm477 = vcmp.eq.s32.totalorder %v102, %v419
    %vm478 = vcmp.eq.s32.totalorder %v102, %v422
    %vm479 = vcmp.eq.s32.totalorder %v102, %v425
    %vm480 = vcmp.eq.s32.totalorder %v102, %v428
    %vm481 = vcmp.eq.s32.totalorder %v102, %v431
    %vm482 = vcmp.eq.s32.totalorder %v102, %v434
    %vm483 = vcmp.eq.s32.totalorder %v102, %v437
    %vm484 = vcmp.eq.s32.totalorder %v102, %v440
    %vm485 = vcmp.eq.s32.totalorder %v102, %v443
    %vm486 = vcmp.eq.s32.totalorder %v102, %v446
    %vm487 = vcmp.eq.s32.totalorder %v102, %v449
    %vm488 = vcmp.eq.s32.totalorder %v102, %v452
    %vm489 = vcmp.eq.s32.totalorder %v102, %v455
    %vm490 = vcmp.eq.s32.totalorder %v102, %v458
    %v491 = vsel %vm459, 1, 0
    %v492 = vsel %vm460, 1, 0
    %v493 = vsel %vm461, 1, 0
    %v494 = vsel %vm462, 1, 0
    %v495 = vsel %vm463, 1, 0
    %v496 = vsel %vm464, 1, 0
    %v497 = vsel %vm465, 1, 0
    %v498 = vsel %vm466, 1, 0
    %v499 = vsel %vm467, 1, 0
    %v500 = vsel %vm468, 1, 0
    %v501 = vsel %vm469, 1, 0
    %v502 = vsel %vm470, 1, 0
    %v503 = vsel %vm471, 1, 0
    %v504 = vsel %vm472, 1, 0
    %v505 = vsel %vm473, 1, 0
    %v506 = vsel %vm474, 1, 0
    %v507 = vsel %vm475, 1, 0
    %v508 = vsel %vm476, 1, 0
    %v509 = vsel %vm477, 1, 0
    %v510 = vsel %vm478, 1, 0
    %v511 = vsel %vm479, 1, 0
    %v512 = vsel %vm480, 1, 0
    %v513 = vsel %vm481, 1, 0
    %v514 = vsel %vm482, 1, 0
    %v515 = vsel %vm483, 1, 0
    %v516 = vsel %vm484, 1, 0
    %v517 = vsel %vm485, 1, 0
    %v518 = vsel %vm486, 1, 0
    %v519 = vsel %vm487, 1, 0
    %v520 = vsel %vm488, 1, 0
    %v521 = vsel %vm489, 1, 0
    %v522 = vsel %vm490, 1, 0
    %v523 = vcvt.s32.f32 %v491
    %v524 = vcvt.s32.f32 %v492
    %v525 = vcvt.s32.f32 %v493
    %v526 = vcvt.s32.f32 %v494
    %v527 = vcvt.s32.f32 %v495
    %v528 = vcvt.s32.f32 %v496
    %v529 = vcvt.s32.f32 %v497
    %v530 = vcvt.s32.f32 %v498
    %v531 = vcvt.s32.f32 %v499
    %v532 = vcvt.s32.f32 %v500
    %v533 = vcvt.s32.f32 %v501
    %v534 = vcvt.s32.f32 %v502
    %v535 = vcvt.s32.f32 %v503
    %v536 = vcvt.s32.f32 %v504
    %v537 = vcvt.s32.f32 %v505
    %v538 = vcvt.s32.f32 %v506
    %v539 = vcvt.s32.f32 %v507
    %v540 = vcvt.s32.f32 %v508
    %v541 = vcvt.s32.f32 %v509
    %v542 = vcvt.s32.f32 %v510
    %v543 = vcvt.s32.f32 %v511
    %v544 = vcvt.s32.f32 %v512
    %v545 = vcvt.s32.f32 %v513
    %v546 = vcvt.s32.f32 %v514
    %v547 = vcvt.s32.f32 %v515
    %v548 = vcvt.s32.f32 %v516
    %v549 = vcvt.s32.f32 %v517
    %v550 = vcvt.s32.f32 %v518
    %v551 = vcvt.s32.f32 %v519
    %v552 = vcvt.s32.f32 %v520
    %v553 = vcvt.s32.f32 %v521
    %v554 = vcvt.s32.f32 %v522
    %v555 = vlaneseq
    %v556 = vshrl.u32 %v555, 7
    %v557 = vadd.s32 %v556, 8
    %v558 = vadd.s32 %v556, 16
    %v559 = vadd.s32 %v556, 24
    %v560 = vadd.s32 %v556, 32
    %v561 = vadd.s32 %v556, 40
    %v562 = vadd.s32 %v556, 48
    %v563 = vadd.s32 %v556, 56
    %v564 = vadd.s32 %v556, 64
    %v565 = vadd.s32 %v556, 72
    %v566 = vadd.s32 %v556, 80
    %v567 = vadd.s32 %v556, 88
    %v568 = vadd.s32 %v556, 96
    %v569 = vadd.s32 %v556, 104
    %v570 = vadd.s32 %v556, 112
    %v571 = vadd.s32 %v556, 120
    %v572 = vld [vmem:[%s2] sm:$0x3]
    %v573 = vperm.slane %v572, 0
    %v574 = vperm.slane %v572, 1
    %vm575 = vcmp.eq.s32.totalorder %v556, %v573
    %vm576 = vcmp.eq.s32.totalorder %v556, %v574
    %vm577 = vcmp.eq.s32.totalorder %v557, %v573
    %vm578 = vcmp.eq.s32.totalorder %v557, %v574
    %vm579 = vcmp.eq.s32.totalorder %v558, %v573
    %vm580 = vcmp.eq.s32.totalorder %v558, %v574
    %vm581 = vcmp.eq.s32.totalorder %v559, %v573
    %vm582 = vcmp.eq.s32.totalorder %v559, %v574
    %vm583 = vcmp.eq.s32.totalorder %v560, %v573
    %vm584 = vcmp.eq.s32.totalorder %v560, %v574
    %vm585 = vcmp.eq.s32.totalorder %v561, %v573
    %vm586 = vcmp.eq.s32.totalorder %v561, %v574
    %vm587 = vcmp.eq.s32.totalorder %v562, %v573
    %vm588 = vcmp.eq.s32.totalorder %v562, %v574
    %vm589 = vcmp.eq.s32.totalorder %v563, %v573
    %vm590 = vcmp.eq.s32.totalorder %v563, %v574
    %vm591 = vcmp.eq.s32.totalorder %v564, %v573
    %vm592 = vcmp.eq.s32.totalorder %v564, %v574
    %vm593 = vcmp.eq.s32.totalorder %v565, %v573
    %vm594 = vcmp.eq.s32.totalorder %v565, %v574
    %vm595 = vcmp.eq.s32.totalorder %v566, %v573
    %vm596 = vcmp.eq.s32.totalorder %v566, %v574
    %vm597 = vcmp.eq.s32.totalorder %v567, %v573
    %vm598 = vcmp.eq.s32.totalorder %v567, %v574
    %vm599 = vcmp.eq.s32.totalorder %v568, %v573
    %vm600 = vcmp.eq.s32.totalorder %v568, %v574
    %vm601 = vcmp.eq.s32.totalorder %v569, %v573
    %vm602 = vcmp.eq.s32.totalorder %v569, %v574
    %vm603 = vcmp.eq.s32.totalorder %v570, %v573
    %vm604 = vcmp.eq.s32.totalorder %v570, %v574
    %vm605 = vcmp.eq.s32.totalorder %v571, %v573
    %vm606 = vcmp.eq.s32.totalorder %v571, %v574
    %v607 = vsel %vm575, 1, 0
    %v608 = vsel %vm576, 1, 0
    %v609 = vsel %vm577, 1, 0
    %v610 = vsel %vm578, 1, 0
    %v611 = vsel %vm579, 1, 0
    %v612 = vsel %vm580, 1, 0
    %v613 = vsel %vm581, 1, 0
    %v614 = vsel %vm582, 1, 0
    %v615 = vsel %vm583, 1, 0
    %v616 = vsel %vm584, 1, 0
    %v617 = vsel %vm585, 1, 0
    %v618 = vsel %vm586, 1, 0
    %v619 = vsel %vm587, 1, 0
    %v620 = vsel %vm588, 1, 0
    %v621 = vsel %vm589, 1, 0
    %v622 = vsel %vm590, 1, 0
    %v623 = vsel %vm591, 1, 0
    %v624 = vsel %vm592, 1, 0
    %v625 = vsel %vm593, 1, 0
    %v626 = vsel %vm594, 1, 0
    %v627 = vsel %vm595, 1, 0
    %v628 = vsel %vm596, 1, 0
    %v629 = vsel %vm597, 1, 0
    %v630 = vsel %vm598, 1, 0
    %v631 = vsel %vm599, 1, 0
    %v632 = vsel %vm600, 1, 0
    %v633 = vsel %vm601, 1, 0
    %v634 = vsel %vm602, 1, 0
    %v635 = vsel %vm603, 1, 0
    %v636 = vsel %vm604, 1, 0
    %v637 = vsel %vm605, 1, 0
    %v638 = vsel %vm606, 1, 0
    %v639 = vcvt.s32.f32 %v607
    %v640 = vcvt.s32.f32 %v608
    %v641 = vcvt.s32.f32 %v609
    %v642 = vcvt.s32.f32 %v610
    %v643 = vcvt.s32.f32 %v611
    %v644 = vcvt.s32.f32 %v612
    %v645 = vcvt.s32.f32 %v613
    %v646 = vcvt.s32.f32 %v614
    %v647 = vcvt.s32.f32 %v615
    %v648 = vcvt.s32.f32 %v616
    %v649 = vcvt.s32.f32 %v617
    %v650 = vcvt.s32.f32 %v618
    %v651 = vcvt.s32.f32 %v619
    %v652 = vcvt.s32.f32 %v620
    %v653 = vcvt.s32.f32 %v621
    %v654 = vcvt.s32.f32 %v622
    %v655 = vcvt.s32.f32 %v623
    %v656 = vcvt.s32.f32 %v624
    %v657 = vcvt.s32.f32 %v625
    %v658 = vcvt.s32.f32 %v626
    %v659 = vcvt.s32.f32 %v627
    %v660 = vcvt.s32.f32 %v628
    %v661 = vcvt.s32.f32 %v629
    %v662 = vcvt.s32.f32 %v630
    %v663 = vcvt.s32.f32 %v631
    %v664 = vcvt.s32.f32 %v632
    %v665 = vcvt.s32.f32 %v633
    %v666 = vcvt.s32.f32 %v634
    %v667 = vcvt.s32.f32 %v635
    %v668 = vcvt.s32.f32 %v636
    %v669 = vcvt.s32.f32 %v637
    %v670 = vcvt.s32.f32 %v638
    %v671 = vld [vmem:[%s3] sm:$0xff]
    %v672 = vld [vmem:[%s3 + $0x8] sm:$0xff]
    %v673 = vld [vmem:[%s3 + $0x10] sm:$0xff]
    %v674 = vld [vmem:[%s3 + $0x18] sm:$0xff]
    %v675 = vld [vmem:[%s3 + $0x20] sm:$0xff]
    %v676 = vld [vmem:[%s3 + $0x28] sm:$0xff]
    %v677 = vld [vmem:[%s3 + $0x30] sm:$0xff]
    %v678 = vld [vmem:[%s3 + $0x38] sm:$0xff]
    %v679 = vld [vmem:[%s3 + $0x40] sm:$0xff]
    %v680 = vld [vmem:[%s3 + $0x48] sm:$0xff]
    %v681 = vld [vmem:[%s3 + $0x50] sm:$0xff]
    %v682 = vld [vmem:[%s3 + $0x58] sm:$0xff]
    %v683 = vld [vmem:[%s3 + $0x60] sm:$0xff]
    %v684 = vld [vmem:[%s3 + $0x68] sm:$0xff]
    %v685 = vld [vmem:[%s3 + $0x70] sm:$0xff]
    %v686 = vld [vmem:[%s3 + $0x78] sm:$0xff]
    %v687 = vld [vmem:[%s3 + $0x80] sm:$0xff]
    %v688 = vld [vmem:[%s3 + $0x88] sm:$0xff]
    %v689 = vld [vmem:[%s3 + $0x90] sm:$0xff]
    %v690 = vld [vmem:[%s3 + $0x98] sm:$0xff]
    %v691 = vld [vmem:[%s3 + $0xa0] sm:$0xff]
    %v692 = vld [vmem:[%s3 + $0xa8] sm:$0xff]
    %v693 = vld [vmem:[%s3 + $0xb0] sm:$0xff]
    %v694 = vld [vmem:[%s3 + $0xb8] sm:$0xff]
    %v695 = vld [vmem:[%s3 + $0xc0] sm:$0xff]
    %v696 = vld [vmem:[%s3 + $0xc8] sm:$0xff]
    %v697 = vld [vmem:[%s3 + $0xd0] sm:$0xff]
    %v698 = vld [vmem:[%s3 + $0xd8] sm:$0xff]
    %v699 = vld [vmem:[%s3 + $0xe0] sm:$0xff]
    %v700 = vld [vmem:[%s3 + $0xe8] sm:$0xff]
    %v701 = vld [vmem:[%s3 + $0xf0] sm:$0xff]
    %v702 = vld [vmem:[%s3 + $0xf8] sm:$0xff]
    %703 = vset.pattern.permute.xlu0 0
    %704 = vperm.xlu0 %703, %v671
    %v705 = vpop.permute.xlu0 %704
    %706 = vset.pattern.permute.xlu0 0
    %707 = vperm.xlu0 %706, %v672
    %v708 = vpop.permute.xlu0 %707
    %709 = vset.pattern.permute.xlu0 0
    %710 = vperm.xlu0 %709, %v673
    %v711 = vpop.permute.xlu0 %710
    %712 = vset.pattern.permute.xlu0 0
    %713 = vperm.xlu0 %712, %v674
    %v714 = vpop.permute.xlu0 %713
    %715 = vset.pattern.permute.xlu0 0
    %716 = vperm.xlu0 %715, %v675
    %v717 = vpop.permute.xlu0 %716
    %718 = vset.pattern.permute.xlu0 0
    %719 = vperm.xlu0 %718, %v676
    %v720 = vpop.permute.xlu0 %719
    %721 = vset.pattern.permute.xlu0 0
    %722 = vperm.xlu0 %721, %v677
    %v723 = vpop.permute.xlu0 %722
    %724 = vset.pattern.permute.xlu0 0
    %725 = vperm.xlu0 %724, %v678
    %v726 = vpop.permute.xlu0 %725
    %727 = vset.pattern.permute.xlu0 0
    %728 = vperm.xlu0 %727, %v679
    %v729 = vpop.permute.xlu0 %728
    %730 = vset.pattern.permute.xlu0 0
    %731 = vperm.xlu0 %730, %v680
    %v732 = vpop.permute.xlu0 %731
    %733 = vset.pattern.permute.xlu0 0
    %734 = vperm.xlu0 %733, %v681
    %v735 = vpop.permute.xlu0 %734
    %736 = vset.pattern.permute.xlu0 0
    %737 = vperm.xlu0 %736, %v682
    %v738 = vpop.permute.xlu0 %737
    %739 = vset.pattern.permute.xlu0 0
    %740 = vperm.xlu0 %739, %v683
    %v741 = vpop.permute.xlu0 %740
    %742 = vset.pattern.permute.xlu0 0
    %743 = vperm.xlu0 %742, %v684
    %v744 = vpop.permute.xlu0 %743
    %745 = vset.pattern.permute.xlu0 0
    %746 = vperm.xlu0 %745, %v685
    %v747 = vpop.permute.xlu0 %746
    %748 = vset.pattern.permute.xlu0 0
    %749 = vperm.xlu0 %748, %v686
    %v750 = vpop.permute.xlu0 %749
    %751 = vset.pattern.permute.xlu0 0
    %752 = vperm.xlu0 %751, %v687
    %v753 = vpop.permute.xlu0 %752
    %754 = vset.pattern.permute.xlu0 0
    %755 = vperm.xlu0 %754, %v688
    %v756 = vpop.permute.xlu0 %755
    %757 = vset.pattern.permute.xlu0 0
    %758 = vperm.xlu0 %757, %v689
    %v759 = vpop.permute.xlu0 %758
    %760 = vset.pattern.permute.xlu0 0
    %761 = vperm.xlu0 %760, %v690
    %v762 = vpop.permute.xlu0 %761
    %763 = vset.pattern.permute.xlu0 0
    %764 = vperm.xlu0 %763, %v691
    %v765 = vpop.permute.xlu0 %764
    %766 = vset.pattern.permute.xlu0 0
    %767 = vperm.xlu0 %766, %v692
    %v768 = vpop.permute.xlu0 %767
    %769 = vset.pattern.permute.xlu0 0
    %770 = vperm.xlu0 %769, %v693
    %v771 = vpop.permute.xlu0 %770
    %772 = vset.pattern.permute.xlu0 0
    %773 = vperm.xlu0 %772, %v694
    %v774 = vpop.permute.xlu0 %773
    %775 = vset.pattern.permute.xlu0 0
    %776 = vperm.xlu0 %775, %v695
    %v777 = vpop.permute.xlu0 %776
    %778 = vset.pattern.permute.xlu0 0
    %779 = vperm.xlu0 %778, %v696
    %v780 = vpop.permute.xlu0 %779
    %781 = vset.pattern.permute.xlu0 0
    %782 = vperm.xlu0 %781, %v697
    %v783 = vpop.permute.xlu0 %782
    %784 = vset.pattern.permute.xlu0 0
    %785 = vperm.xlu0 %784, %v698
    %v786 = vpop.permute.xlu0 %785
    %787 = vset.pattern.permute.xlu0 0
    %788 = vperm.xlu0 %787, %v699
    %v789 = vpop.permute.xlu0 %788
    %790 = vset.pattern.permute.xlu0 0
    %791 = vperm.xlu0 %790, %v700
    %v792 = vpop.permute.xlu0 %791
    %793 = vset.pattern.permute.xlu0 0
    %794 = vperm.xlu0 %793, %v701
    %v795 = vpop.permute.xlu0 %794
    %796 = vset.pattern.permute.xlu0 0
    %797 = vperm.xlu0 %796, %v702
    %v798 = vpop.permute.xlu0 %797
    %vm799 = vcmp.eq.s32.totalorder %v102, %v705
    %vm800 = vcmp.eq.s32.totalorder %v102, %v708
    %vm801 = vcmp.eq.s32.totalorder %v102, %v711
    %vm802 = vcmp.eq.s32.totalorder %v102, %v714
    %vm803 = vcmp.eq.s32.totalorder %v102, %v717
    %vm804 = vcmp.eq.s32.totalorder %v102, %v720
    %vm805 = vcmp.eq.s32.totalorder %v102, %v723
    %vm806 = vcmp.eq.s32.totalorder %v102, %v726
    %vm807 = vcmp.eq.s32.totalorder %v102, %v729
    %vm808 = vcmp.eq.s32.totalorder %v102, %v732
    %vm809 = vcmp.eq.s32.totalorder %v102, %v735
    %vm810 = vcmp.eq.s32.totalorder %v102, %v738
    %vm811 = vcmp.eq.s32.totalorder %v102, %v741
    %vm812 = vcmp.eq.s32.totalorder %v102, %v744
    %vm813 = vcmp.eq.s32.totalorder %v102, %v747
    %vm814 = vcmp.eq.s32.totalorder %v102, %v750
    %vm815 = vcmp.eq.s32.totalorder %v102, %v753
    %vm816 = vcmp.eq.s32.totalorder %v102, %v756
    %vm817 = vcmp.eq.s32.totalorder %v102, %v759
    %vm818 = vcmp.eq.s32.totalorder %v102, %v762
    %vm819 = vcmp.eq.s32.totalorder %v102, %v765
    %vm820 = vcmp.eq.s32.totalorder %v102, %v768
    %vm821 = vcmp.eq.s32.totalorder %v102, %v771
    %vm822 = vcmp.eq.s32.totalorder %v102, %v774
    %vm823 = vcmp.eq.s32.totalorder %v102, %v777
    %vm824 = vcmp.eq.s32.totalorder %v102, %v780
    %vm825 = vcmp.eq.s32.totalorder %v102, %v783
    %vm826 = vcmp.eq.s32.totalorder %v102, %v786
    %vm827 = vcmp.eq.s32.totalorder %v102, %v789
    %vm828 = vcmp.eq.s32.totalorder %v102, %v792
    %vm829 = vcmp.eq.s32.totalorder %v102, %v795
    %vm830 = vcmp.eq.s32.totalorder %v102, %v798
    %v831 = vsel %vm799, 1, 0
    %v832 = vsel %vm800, 1, 0
    %v833 = vsel %vm801, 1, 0
    %v834 = vsel %vm802, 1, 0
    %v835 = vsel %vm803, 1, 0
    %v836 = vsel %vm804, 1, 0
    %v837 = vsel %vm805, 1, 0
    %v838 = vsel %vm806, 1, 0
    %v839 = vsel %vm807, 1, 0
    %v840 = vsel %vm808, 1, 0
    %v841 = vsel %vm809, 1, 0
    %v842 = vsel %vm810, 1, 0
    %v843 = vsel %vm811, 1, 0
    %v844 = vsel %vm812, 1, 0
    %v845 = vsel %vm813, 1, 0
    %v846 = vsel %vm814, 1, 0
    %v847 = vsel %vm815, 1, 0
    %v848 = vsel %vm816, 1, 0
    %v849 = vsel %vm817, 1, 0
    %v850 = vsel %vm818, 1, 0
    %v851 = vsel %vm819, 1, 0
    %v852 = vsel %vm820, 1, 0
    %v853 = vsel %vm821, 1, 0
    %v854 = vsel %vm822, 1, 0
    %v855 = vsel %vm823, 1, 0
    %v856 = vsel %vm824, 1, 0
    %v857 = vsel %vm825, 1, 0
    %v858 = vsel %vm826, 1, 0
    %v859 = vsel %vm827, 1, 0
    %v860 = vsel %vm828, 1, 0
    %v861 = vsel %vm829, 1, 0
    %v862 = vsel %vm830, 1, 0
    %v863 = vcvt.s32.f32 %v831
    %v864 = vcvt.s32.f32 %v832
    %v865 = vcvt.s32.f32 %v833
    %v866 = vcvt.s32.f32 %v834
    %v867 = vcvt.s32.f32 %v835
    %v868 = vcvt.s32.f32 %v836
    %v869 = vcvt.s32.f32 %v837
    %v870 = vcvt.s32.f32 %v838
    %v871 = vcvt.s32.f32 %v839
    %v872 = vcvt.s32.f32 %v840
    %v873 = vcvt.s32.f32 %v841
    %v874 = vcvt.s32.f32 %v842
    %v875 = vcvt.s32.f32 %v843
    %v876 = vcvt.s32.f32 %v844
    %v877 = vcvt.s32.f32 %v845
    %v878 = vcvt.s32.f32 %v846
    %v879 = vcvt.s32.f32 %v847
    %v880 = vcvt.s32.f32 %v848
    %v881 = vcvt.s32.f32 %v849
    %v882 = vcvt.s32.f32 %v850
    %v883 = vcvt.s32.f32 %v851
    %v884 = vcvt.s32.f32 %v852
    %v885 = vcvt.s32.f32 %v853
    %v886 = vcvt.s32.f32 %v854
    %v887 = vcvt.s32.f32 %v855
    %v888 = vcvt.s32.f32 %v856
    %v889 = vcvt.s32.f32 %v857
    %v890 = vcvt.s32.f32 %v858
    %v891 = vcvt.s32.f32 %v859
    %v892 = vcvt.s32.f32 %v860
    %v893 = vcvt.s32.f32 %v861
    %v894 = vcvt.s32.f32 %v862
    %v895 = vld [vmem:[%s6] sm:$0xff]
    %vm896 = vcmask 64512
    %v898 = vsel %vm896, %v863, 0
    %v901 = vsel %vm896, %v864, 0
    %v904 = vsel %vm896, %v865, 0
    %v907 = vsel %vm896, %v866, 0
    %v910 = vsel %vm896, %v867, 0
    %v913 = vsel %vm896, %v868, 0
    %v916 = vsel %vm896, %v869, 0
    %v919 = vsel %vm896, %v870, 0
    %v922 = vsel %vm896, %v871, 0
    %v925 = vsel %vm896, %v872, 0
    %v928 = vsel %vm896, %v873, 0
    %v931 = vsel %vm896, %v874, 0
    %v934 = vsel %vm896, %v875, 0
    %v937 = vsel %vm896, %v876, 0
    %v940 = vsel %vm896, %v877, 0
    %v943 = vsel %vm896, %v878, 0
    %v946 = vsel %vm896, %v879, 0
    %v949 = vsel %vm896, %v880, 0
    %v952 = vsel %vm896, %v881, 0
    %v955 = vsel %vm896, %v882, 0
    %v958 = vsel %vm896, %v883, 0
    %v961 = vsel %vm896, %v884, 0
    %v964 = vsel %vm896, %v885, 0
    %v967 = vsel %vm896, %v886, 0
    %v970 = vsel %vm896, %v887, 0
    %v973 = vsel %vm896, %v888, 0
    %v976 = vsel %vm896, %v889, 0
    %v979 = vsel %vm896, %v890, 0
    %v982 = vsel %vm896, %v891, 0
    %v985 = vsel %vm896, %v892, 0
    %v988 = vsel %vm896, %v893, 0
    %v991 = vsel %vm896, %v894, 0
    %993 = vmatpush.msra.mxu0 0.0
    %994 = vmatpush.msra.mxu0 0.0
    %995 = vmatpush.msra.mxu0 0.0
    %996 = vmatpush.msra.mxu0 0.0
    %997 = vmatpush.msra.mxu0 0.0
    %998 = vmatpush.msra.mxu0 0.0
    %999 = vmatpush.msra.mxu0 0.0
    %1000 = vmatpush.msra.mxu0 0.0
    %1001 = vmatpush.msra.mxu0 0.0
    %1002 = vmatpush.msra.mxu0 0.0
    %1003 = vmatpush.msra.mxu0 0.0
    %1004 = vmatpush.msra.mxu0 0.0
    %1005 = vmatpush.msra.mxu0 0.0
    %1006 = vmatpush.msra.mxu0 0.0
    %1007 = vmatpush.msra.mxu0 0.0
    %1008 = vmatpush.msra.mxu0 %v895
    %1009 = vmatmul.f32.gmra.mxu0 %v898
    %v1010 = vpop.f32.mrf.mxu0
    %v1011 = vadd.f32 0.0, %v1010
    %1012 = vmatmul.f32.gmra.mxu0 %v901
    %v1013 = vpop.f32.mrf.mxu0
    %v1014 = vadd.f32 0.0, %v1013
    %1015 = vmatmul.f32.gmra.mxu0 %v904
    %v1016 = vpop.f32.mrf.mxu0
    %v1017 = vadd.f32 0.0, %v1016
    %1018 = vmatmul.f32.gmra.mxu0 %v907
    %v1019 = vpop.f32.mrf.mxu0
    %v1020 = vadd.f32 0.0, %v1019
    %1021 = vmatmul.f32.gmra.mxu0 %v910
    %v1022 = vpop.f32.mrf.mxu0
    %v1023 = vadd.f32 0.0, %v1022
    %1024 = vmatmul.f32.gmra.mxu0 %v913
    %v1025 = vpop.f32.mrf.mxu0
    %v1026 = vadd.f32 0.0, %v1025
    %1027 = vmatmul.f32.gmra.mxu0 %v916
    %v1028 = vpop.f32.mrf.mxu0
    %v1029 = vadd.f32 0.0, %v1028
    %1030 = vmatmul.f32.gmra.mxu0 %v919
    %v1031 = vpop.f32.mrf.mxu0
    %v1032 = vadd.f32 0.0, %v1031
    %1033 = vmatmul.f32.gmra.mxu0 %v922
    %v1034 = vpop.f32.mrf.mxu0
    %v1035 = vadd.f32 0.0, %v1034
    %1036 = vmatmul.f32.gmra.mxu0 %v925
    %v1037 = vpop.f32.mrf.mxu0
    %v1038 = vadd.f32 0.0, %v1037
    %1039 = vmatmul.f32.gmra.mxu0 %v928
    %v1040 = vpop.f32.mrf.mxu0
    %v1041 = vadd.f32 0.0, %v1040
    %1042 = vmatmul.f32.gmra.mxu0 %v931
    %v1043 = vpop.f32.mrf.mxu0
    %v1044 = vadd.f32 0.0, %v1043
    %1045 = vmatmul.f32.gmra.mxu0 %v934
    %v1046 = vpop.f32.mrf.mxu0
    %v1047 = vadd.f32 0.0, %v1046
    %1048 = vmatmul.f32.gmra.mxu0 %v937
    %v1049 = vpop.f32.mrf.mxu0
    %v1050 = vadd.f32 0.0, %v1049
    %1051 = vmatmul.f32.gmra.mxu0 %v940
    %v1052 = vpop.f32.mrf.mxu0
    %v1053 = vadd.f32 0.0, %v1052
    %1054 = vmatmul.f32.gmra.mxu0 %v943
    %v1055 = vpop.f32.mrf.mxu0
    %v1056 = vadd.f32 0.0, %v1055
    %1057 = vmatmul.f32.gmra.mxu0 %v946
    %v1058 = vpop.f32.mrf.mxu0
    %v1059 = vadd.f32 0.0, %v1058
    %1060 = vmatmul.f32.gmra.mxu0 %v949
    %v1061 = vpop.f32.mrf.mxu0
    %v1062 = vadd.f32 0.0, %v1061
    %1063 = vmatmul.f32.gmra.mxu0 %v952
    %v1064 = vpop.f32.mrf.mxu0
    %v1065 = vadd.f32 0.0, %v1064
    %1066 = vmatmul.f32.gmra.mxu0 %v955
    %v1067 = vpop.f32.mrf.mxu0
    %v1068 = vadd.f32 0.0, %v1067
    %1069 = vmatmul.f32.gmra.mxu0 %v958
    %v1070 = vpop.f32.mrf.mxu0
    %v1071 = vadd.f32 0.0, %v1070
    %1072 = vmatmul.f32.gmra.mxu0 %v961
    %v1073 = vpop.f32.mrf.mxu0
    %v1074 = vadd.f32 0.0, %v1073
    %1075 = vmatmul.f32.gmra.mxu0 %v964
    %v1076 = vpop.f32.mrf.mxu0
    %v1077 = vadd.f32 0.0, %v1076
    %1078 = vmatmul.f32.gmra.mxu0 %v967
    %v1079 = vpop.f32.mrf.mxu0
    %v1080 = vadd.f32 0.0, %v1079
    %1081 = vmatmul.f32.gmra.mxu0 %v970
    %v1082 = vpop.f32.mrf.mxu0
    %v1083 = vadd.f32 0.0, %v1082
    %1084 = vmatmul.f32.gmra.mxu0 %v973
    %v1085 = vpop.f32.mrf.mxu0
    %v1086 = vadd.f32 0.0, %v1085
    %1087 = vmatmul.f32.gmra.mxu0 %v976
    %v1088 = vpop.f32.mrf.mxu0
    %v1089 = vadd.f32 0.0, %v1088
    %1090 = vmatmul.f32.gmra.mxu0 %v979
    %v1091 = vpop.f32.mrf.mxu0
    %v1092 = vadd.f32 0.0, %v1091
    %1093 = vmatmul.f32.gmra.mxu0 %v982
    %v1094 = vpop.f32.mrf.mxu0
    %v1095 = vadd.f32 0.0, %v1094
    %1096 = vmatmul.f32.gmra.mxu0 %v985
    %v1097 = vpop.f32.mrf.mxu0
    %v1098 = vadd.f32 0.0, %v1097
    %1099 = vmatmul.f32.gmra.mxu0 %v988
    %v1100 = vpop.f32.mrf.mxu0
    %v1101 = vadd.f32 0.0, %v1100
    %1102 = vmatmul.f32.gmra.mxu0 %v991
    %v1103 = vpop.f32.mrf.mxu0
    %v1104 = vadd.f32 0.0, %v1103
    %1105 = vdwg.mxu0
    %1106 = vmatpush.msra.mxu0 %v329
    %1107 = vmatpush.msra.mxu0 %v326
    %1108 = vmatpush.msra.mxu0 %v323
    %1109 = vmatpush.msra.mxu0 %v320
    %1110 = vmatpush.msra.mxu0 %v317
    %1111 = vmatpush.msra.mxu0 %v314
    %1112 = vmatpush.msra.mxu0 %v311
    %1113 = vmatpush.msra.mxu0 %v308
    %1114 = vmatpush.msra.mxu0 %v305
    %1115 = vmatpush.msra.mxu0 %v302
    %1116 = vmatpush.msra.mxu0 %v299
    %1117 = vmatpush.msra.mxu0 %v296
    %1118 = vmatpush.msra.mxu0 %v293
    %1119 = vmatpush.msra.mxu0 %v290
    %1120 = vmatpush.msra.mxu0 %v287
    %1121 = vmatpush.msra.mxu0 %v284
    %1122 = vmatmul.f32.gmra.mxu0 %v523
    %v1123 = vpop.f32.mrf.mxu0
    %v1124 = vadd.f32 %v1011, %v1123
    %1125 = vmatmul.f32.gmra.mxu0 %v524
    %v1126 = vpop.f32.mrf.mxu0
    %v1127 = vadd.f32 %v1014, %v1126
    %1128 = vmatmul.f32.gmra.mxu0 %v525
    %v1129 = vpop.f32.mrf.mxu0
    %v1130 = vadd.f32 %v1017, %v1129
    %1131 = vmatmul.f32.gmra.mxu0 %v526
    %v1132 = vpop.f32.mrf.mxu0
    %v1133 = vadd.f32 %v1020, %v1132
    %1134 = vmatmul.f32.gmra.mxu0 %v527
    %v1135 = vpop.f32.mrf.mxu0
    %v1136 = vadd.f32 %v1023, %v1135
    %1137 = vmatmul.f32.gmra.mxu0 %v528
    %v1138 = vpop.f32.mrf.mxu0
    %v1139 = vadd.f32 %v1026, %v1138
    %1140 = vmatmul.f32.gmra.mxu0 %v529
    %v1141 = vpop.f32.mrf.mxu0
    %v1142 = vadd.f32 %v1029, %v1141
    %1143 = vmatmul.f32.gmra.mxu0 %v530
    %v1144 = vpop.f32.mrf.mxu0
    %v1145 = vadd.f32 %v1032, %v1144
    %1146 = vmatmul.f32.gmra.mxu0 %v531
    %v1147 = vpop.f32.mrf.mxu0
    %v1148 = vadd.f32 %v1035, %v1147
    %1149 = vmatmul.f32.gmra.mxu0 %v532
    %v1150 = vpop.f32.mrf.mxu0
    %v1151 = vadd.f32 %v1038, %v1150
    %1152 = vmatmul.f32.gmra.mxu0 %v533
    %v1153 = vpop.f32.mrf.mxu0
    %v1154 = vadd.f32 %v1041, %v1153
    %1155 = vmatmul.f32.gmra.mxu0 %v534
    %v1156 = vpop.f32.mrf.mxu0
    %v1157 = vadd.f32 %v1044, %v1156
    %1158 = vmatmul.f32.gmra.mxu0 %v535
    %v1159 = vpop.f32.mrf.mxu0
    %v1160 = vadd.f32 %v1047, %v1159
    %1161 = vmatmul.f32.gmra.mxu0 %v536
    %v1162 = vpop.f32.mrf.mxu0
    %v1163 = vadd.f32 %v1050, %v1162
    %1164 = vmatmul.f32.gmra.mxu0 %v537
    %v1165 = vpop.f32.mrf.mxu0
    %v1166 = vadd.f32 %v1053, %v1165
    %1167 = vmatmul.f32.gmra.mxu0 %v538
    %v1168 = vpop.f32.mrf.mxu0
    %v1169 = vadd.f32 %v1056, %v1168
    %1170 = vmatmul.f32.gmra.mxu0 %v539
    %v1171 = vpop.f32.mrf.mxu0
    %v1172 = vadd.f32 %v1059, %v1171
    %1173 = vmatmul.f32.gmra.mxu0 %v540
    %v1174 = vpop.f32.mrf.mxu0
    %v1175 = vadd.f32 %v1062, %v1174
    %1176 = vmatmul.f32.gmra.mxu0 %v541
    %v1177 = vpop.f32.mrf.mxu0
    %v1178 = vadd.f32 %v1065, %v1177
    %1179 = vmatmul.f32.gmra.mxu0 %v542
    %v1180 = vpop.f32.mrf.mxu0
    %v1181 = vadd.f32 %v1068, %v1180
    %1182 = vmatmul.f32.gmra.mxu0 %v543
    %v1183 = vpop.f32.mrf.mxu0
    %v1184 = vadd.f32 %v1071, %v1183
    %1185 = vmatmul.f32.gmra.mxu0 %v544
    %v1186 = vpop.f32.mrf.mxu0
    %v1187 = vadd.f32 %v1074, %v1186
    %1188 = vmatmul.f32.gmra.mxu0 %v545
    %v1189 = vpop.f32.mrf.mxu0
    %v1190 = vadd.f32 %v1077, %v1189
    %1191 = vmatmul.f32.gmra.mxu0 %v546
    %v1192 = vpop.f32.mrf.mxu0
    %v1193 = vadd.f32 %v1080, %v1192
    %1194 = vmatmul.f32.gmra.mxu0 %v547
    %v1195 = vpop.f32.mrf.mxu0
    %v1196 = vadd.f32 %v1083, %v1195
    %1197 = vmatmul.f32.gmra.mxu0 %v548
    %v1198 = vpop.f32.mrf.mxu0
    %v1199 = vadd.f32 %v1086, %v1198
    %1200 = vmatmul.f32.gmra.mxu0 %v549
    %v1201 = vpop.f32.mrf.mxu0
    %v1202 = vadd.f32 %v1089, %v1201
    %1203 = vmatmul.f32.gmra.mxu0 %v550
    %v1204 = vpop.f32.mrf.mxu0
    %v1205 = vadd.f32 %v1092, %v1204
    %1206 = vmatmul.f32.gmra.mxu0 %v551
    %v1207 = vpop.f32.mrf.mxu0
    %v1208 = vadd.f32 %v1095, %v1207
    %1209 = vmatmul.f32.gmra.mxu0 %v552
    %v1210 = vpop.f32.mrf.mxu0
    %v1211 = vadd.f32 %v1098, %v1210
    %1212 = vmatmul.f32.gmra.mxu0 %v553
    %v1213 = vpop.f32.mrf.mxu0
    %v1214 = vadd.f32 %v1101, %v1213
    %1215 = vmatmul.f32.gmra.mxu0 %v554
    %v1216 = vpop.f32.mrf.mxu0
    %v1217 = vadd.f32 %v1104, %v1216
    %1218 = vdwg.mxu0
    %v1219 = vmax.f32 %v1124, 0.0
    %v1220 = vmax.f32 %v1127, 0.0
    %v1221 = vmax.f32 %v1130, 0.0
    %v1222 = vmax.f32 %v1133, 0.0
    %v1223 = vmax.f32 %v1136, 0.0
    %v1224 = vmax.f32 %v1139, 0.0
    %v1225 = vmax.f32 %v1142, 0.0
    %v1226 = vmax.f32 %v1145, 0.0
    %v1227 = vmax.f32 %v1148, 0.0
    %v1228 = vmax.f32 %v1151, 0.0
    %v1229 = vmax.f32 %v1154, 0.0
    %v1230 = vmax.f32 %v1157, 0.0
    %v1231 = vmax.f32 %v1160, 0.0
    %v1232 = vmax.f32 %v1163, 0.0
    %v1233 = vmax.f32 %v1166, 0.0
    %v1234 = vmax.f32 %v1169, 0.0
    %v1235 = vmax.f32 %v1172, 0.0
    %v1236 = vmax.f32 %v1175, 0.0
    %v1237 = vmax.f32 %v1178, 0.0
    %v1238 = vmax.f32 %v1181, 0.0
    %v1239 = vmax.f32 %v1184, 0.0
    %v1240 = vmax.f32 %v1187, 0.0
    %v1241 = vmax.f32 %v1190, 0.0
    %v1242 = vmax.f32 %v1193, 0.0
    %v1243 = vmax.f32 %v1196, 0.0
    %v1244 = vmax.f32 %v1199, 0.0
    %v1245 = vmax.f32 %v1202, 0.0
    %v1246 = vmax.f32 %v1205, 0.0
    %v1247 = vmax.f32 %v1208, 0.0
    %v1248 = vmax.f32 %v1211, 0.0
    %v1249 = vmax.f32 %v1214, 0.0
    %v1250 = vmax.f32 %v1217, 0.0
    %1251 = vmatpush.msra.mxu0 %v1234
    %1252 = vmatpush.msra.mxu0 %v1233
    %1253 = vmatpush.msra.mxu0 %v1232
    %1254 = vmatpush.msra.mxu0 %v1231
    %1255 = vmatpush.msra.mxu0 %v1230
    %1256 = vmatpush.msra.mxu0 %v1229
    %1257 = vmatpush.msra.mxu0 %v1228
    %1258 = vmatpush.msra.mxu0 %v1227
    %1259 = vmatpush.msra.mxu0 %v1226
    %1260 = vmatpush.msra.mxu0 %v1225
    %1261 = vmatpush.msra.mxu0 %v1224
    %1262 = vmatpush.msra.mxu0 %v1223
    %1263 = vmatpush.msra.mxu0 %v1222
    %1264 = vmatpush.msra.mxu0 %v1221
    %1265 = vmatpush.msra.mxu0 %v1220
    %1266 = vmatpush.msra.mxu0 %v1219
    %1267 = vmatmul.f32.gmra.mxu0 %v639
    %v1268 = vpop.f32.mrf.mxu0
    %v1269 = vadd.f32 0.0, %v1268
    %1270 = vmatmul.f32.gmra.mxu0 %v641
    %v1271 = vpop.f32.mrf.mxu0
    %v1272 = vadd.f32 0.0, %v1271
    %1273 = vmatmul.f32.gmra.mxu0 %v643
    %v1274 = vpop.f32.mrf.mxu0
    %v1275 = vadd.f32 0.0, %v1274
    %1276 = vmatmul.f32.gmra.mxu0 %v645
    %v1277 = vpop.f32.mrf.mxu0
    %v1278 = vadd.f32 0.0, %v1277
    %1279 = vmatmul.f32.gmra.mxu0 %v647
    %v1280 = vpop.f32.mrf.mxu0
    %v1281 = vadd.f32 0.0, %v1280
    %1282 = vmatmul.f32.gmra.mxu0 %v649
    %v1283 = vpop.f32.mrf.mxu0
    %v1284 = vadd.f32 0.0, %v1283
    %1285 = vmatmul.f32.gmra.mxu0 %v651
    %v1286 = vpop.f32.mrf.mxu0
    %v1287 = vadd.f32 0.0, %v1286
    %1288 = vmatmul.f32.gmra.mxu0 %v653
    %v1289 = vpop.f32.mrf.mxu0
    %v1290 = vadd.f32 0.0, %v1289
    %1291 = vmatmul.f32.gmra.mxu0 %v655
    %v1292 = vpop.f32.mrf.mxu0
    %v1293 = vadd.f32 0.0, %v1292
    %1294 = vmatmul.f32.gmra.mxu0 %v657
    %v1295 = vpop.f32.mrf.mxu0
    %v1296 = vadd.f32 0.0, %v1295
    %1297 = vmatmul.f32.gmra.mxu0 %v659
    %v1298 = vpop.f32.mrf.mxu0
    %v1299 = vadd.f32 0.0, %v1298
    %1300 = vmatmul.f32.gmra.mxu0 %v661
    %v1301 = vpop.f32.mrf.mxu0
    %v1302 = vadd.f32 0.0, %v1301
    %1303 = vmatmul.f32.gmra.mxu0 %v663
    %v1304 = vpop.f32.mrf.mxu0
    %v1305 = vadd.f32 0.0, %v1304
    %1306 = vmatmul.f32.gmra.mxu0 %v665
    %v1307 = vpop.f32.mrf.mxu0
    %v1308 = vadd.f32 0.0, %v1307
    %1309 = vmatmul.f32.gmra.mxu0 %v667
    %v1310 = vpop.f32.mrf.mxu0
    %v1311 = vadd.f32 0.0, %v1310
    %1312 = vmatmul.f32.gmra.mxu0 %v669
    %v1313 = vpop.f32.mrf.mxu0
    %v1314 = vadd.f32 0.0, %v1313
    %1315 = vdwg.mxu0
    %1316 = vmatpush.msra.mxu0 %v1250
    %1317 = vmatpush.msra.mxu0 %v1249
    %1318 = vmatpush.msra.mxu0 %v1248
    %1319 = vmatpush.msra.mxu0 %v1247
    %1320 = vmatpush.msra.mxu0 %v1246
    %1321 = vmatpush.msra.mxu0 %v1245
    %1322 = vmatpush.msra.mxu0 %v1244
    %1323 = vmatpush.msra.mxu0 %v1243
    %1324 = vmatpush.msra.mxu0 %v1242
    %1325 = vmatpush.msra.mxu0 %v1241
    %1326 = vmatpush.msra.mxu0 %v1240
    %1327 = vmatpush.msra.mxu0 %v1239
    %1328 = vmatpush.msra.mxu0 %v1238
    %1329 = vmatpush.msra.mxu0 %v1237
    %1330 = vmatpush.msra.mxu0 %v1236
    %1331 = vmatpush.msra.mxu0 %v1235
    %1332 = vmatmul.f32.gmra.mxu0 %v640
    %v1333 = vpop.f32.mrf.mxu0
    %v1334 = vadd.f32 %v1269, %v1333
    %1335 = vmatmul.f32.gmra.mxu0 %v642
    %v1336 = vpop.f32.mrf.mxu0
    %v1337 = vadd.f32 %v1272, %v1336
    %1338 = vmatmul.f32.gmra.mxu0 %v644
    %v1339 = vpop.f32.mrf.mxu0
    %v1340 = vadd.f32 %v1275, %v1339
    %1341 = vmatmul.f32.gmra.mxu0 %v646
    %v1342 = vpop.f32.mrf.mxu0
    %v1343 = vadd.f32 %v1278, %v1342
    %1344 = vmatmul.f32.gmra.mxu0 %v648
    %v1345 = vpop.f32.mrf.mxu0
    %v1346 = vadd.f32 %v1281, %v1345
    %1347 = vmatmul.f32.gmra.mxu0 %v650
    %v1348 = vpop.f32.mrf.mxu0
    %v1349 = vadd.f32 %v1284, %v1348
    %1350 = vmatmul.f32.gmra.mxu0 %v652
    %v1351 = vpop.f32.mrf.mxu0
    %v1352 = vadd.f32 %v1287, %v1351
    %1353 = vmatmul.f32.gmra.mxu0 %v654
    %v1354 = vpop.f32.mrf.mxu0
    %v1355 = vadd.f32 %v1290, %v1354
    %1356 = vmatmul.f32.gmra.mxu0 %v656
    %v1357 = vpop.f32.mrf.mxu0
    %v1358 = vadd.f32 %v1293, %v1357
    %1359 = vmatmul.f32.gmra.mxu0 %v658
    %v1360 = vpop.f32.mrf.mxu0
    %v1361 = vadd.f32 %v1296, %v1360
    %1362 = vmatmul.f32.gmra.mxu0 %v660
    %v1363 = vpop.f32.mrf.mxu0
    %v1364 = vadd.f32 %v1299, %v1363
    %1365 = vmatmul.f32.gmra.mxu0 %v662
    %v1366 = vpop.f32.mrf.mxu0
    %v1367 = vadd.f32 %v1302, %v1366
    %1368 = vmatmul.f32.gmra.mxu0 %v664
    %v1369 = vpop.f32.mrf.mxu0
    %v1370 = vadd.f32 %v1305, %v1369
    %1371 = vmatmul.f32.gmra.mxu0 %v666
    %v1372 = vpop.f32.mrf.mxu0
    %v1373 = vadd.f32 %v1308, %v1372
    %1374 = vmatmul.f32.gmra.mxu0 %v668
    %v1375 = vpop.f32.mrf.mxu0
    %v1376 = vadd.f32 %v1311, %v1375
    %1377 = vmatmul.f32.gmra.mxu0 %v670
    %v1378 = vpop.f32.mrf.mxu0
    %v1379 = vadd.f32 %v1314, %v1378
    %1380 = vdwg.mxu0
    %v1381 = vld [vmem:[%s7] sm:$0x1]
    %v1383 = vperm.slane %v1381, 0
    %v1385 = vmul.f32 %v284, %v1383
    %v1386 = vmul.f32 %v287, %v1383
    %v1387 = vmul.f32 %v290, %v1383
    %v1388 = vmul.f32 %v293, %v1383
    %v1389 = vmul.f32 %v296, %v1383
    %v1390 = vmul.f32 %v299, %v1383
    %v1391 = vmul.f32 %v302, %v1383
    %v1392 = vmul.f32 %v305, %v1383
    %v1393 = vmul.f32 %v308, %v1383
    %v1394 = vmul.f32 %v311, %v1383
    %v1395 = vmul.f32 %v314, %v1383
    %v1396 = vmul.f32 %v317, %v1383
    %v1397 = vmul.f32 %v320, %v1383
    %v1398 = vmul.f32 %v323, %v1383
    %v1399 = vmul.f32 %v326, %v1383
    %v1400 = vmul.f32 %v329, %v1383
    %v1401 = vadd.f32 %v1385, %v1334
    %v1402 = vadd.f32 %v1386, %v1337
    %v1403 = vadd.f32 %v1387, %v1340
    %v1404 = vadd.f32 %v1388, %v1343
    %v1405 = vadd.f32 %v1389, %v1346
    %v1406 = vadd.f32 %v1390, %v1349
    %v1407 = vadd.f32 %v1391, %v1352
    %v1408 = vadd.f32 %v1392, %v1355
    %v1409 = vadd.f32 %v1393, %v1358
    %v1410 = vadd.f32 %v1394, %v1361
    %v1411 = vadd.f32 %v1395, %v1364
    %v1412 = vadd.f32 %v1396, %v1367
    %v1413 = vadd.f32 %v1397, %v1370
    %v1414 = vadd.f32 %v1398, %v1373
    %v1415 = vadd.f32 %v1399, %v1376
    %v1416 = vadd.f32 %v1400, %v1379
    %v1417 = vld [vmem:[#allocation2] sm:$0xff]
    %v1418 = vld [vmem:[#allocation2 + $0x8] sm:$0xff]
    %v1419 = vld [vmem:[#allocation2 + $0x10] sm:$0xff]
    %v1420 = vld [vmem:[#allocation2 + $0x18] sm:$0xff]
    %v1421 = vld [vmem:[#allocation2 + $0x20] sm:$0xff]
    %v1422 = vld [vmem:[#allocation2 + $0x28] sm:$0xff]
    %v1423 = vld [vmem:[#allocation2 + $0x30] sm:$0xff]
    %v1424 = vld [vmem:[#allocation2 + $0x38] sm:$0xff]
    %v1425 = vld [vmem:[#allocation2 + $0x40] sm:$0xff]
    %v1426 = vld [vmem:[#allocation2 + $0x48] sm:$0xff]
    %v1427 = vld [vmem:[#allocation2 + $0x50] sm:$0xff]
    %v1428 = vld [vmem:[#allocation2 + $0x58] sm:$0xff]
    %v1429 = vld [vmem:[#allocation2 + $0x60] sm:$0xff]
    %v1430 = vld [vmem:[#allocation2 + $0x68] sm:$0xff]
    %v1431 = vld [vmem:[#allocation2 + $0x70] sm:$0xff]
    %v1432 = vld [vmem:[#allocation2 + $0x78] sm:$0xff]
    %v1433 = vld [vmem:[#allocation2 + $0x80] sm:$0xff]
    %v1434 = vld [vmem:[#allocation2 + $0x88] sm:$0xff]
    %v1435 = vld [vmem:[#allocation2 + $0x90] sm:$0xff]
    %v1436 = vld [vmem:[#allocation2 + $0x98] sm:$0xff]
    %v1437 = vld [vmem:[#allocation2 + $0xa0] sm:$0xff]
    %v1438 = vld [vmem:[#allocation2 + $0xa8] sm:$0xff]
    %v1439 = vld [vmem:[#allocation2 + $0xb0] sm:$0xff]
    %v1440 = vld [vmem:[#allocation2 + $0xb8] sm:$0xff]
    %v1441 = vld [vmem:[#allocation2 + $0xc0] sm:$0xff]
    %v1442 = vld [vmem:[#allocation2 + $0xc8] sm:$0xff]
    %v1443 = vld [vmem:[#allocation2 + $0xd0] sm:$0xff]
    %v1444 = vld [vmem:[#allocation2 + $0xd8] sm:$0xff]
    %v1445 = vld [vmem:[#allocation2 + $0xe0] sm:$0xff]
    %v1446 = vld [vmem:[#allocation2 + $0xe8] sm:$0xff]
    %v1447 = vld [vmem:[#allocation2 + $0xf0] sm:$0xff]
    %v1448 = vld [vmem:[#allocation2 + $0xf8] sm:$0xff]
    %v1449 = vld [vmem:[%s9] sm:$0x3]
    %v1451 = vperm.slane %v1449, 0
    %v1452 = vperm.slane %v1449, 1
    %1455 = vmatpush.msra.mxu0 %v1447
    %1456 = vmatpush.msra.mxu0 %v1445
    %1457 = vmatpush.msra.mxu0 %v1443
    %1458 = vmatpush.msra.mxu0 %v1441
    %1459 = vmatpush.msra.mxu0 %v1439
    %1460 = vmatpush.msra.mxu0 %v1437
    %1461 = vmatpush.msra.mxu0 %v1435
    %1462 = vmatpush.msra.mxu0 %v1433
    %1463 = vmatpush.msra.mxu0 %v1431
    %1464 = vmatpush.msra.mxu0 %v1429
    %1465 = vmatpush.msra.mxu0 %v1427
    %1466 = vmatpush.msra.mxu0 %v1425
    %1467 = vmatpush.msra.mxu0 %v1423
    %1468 = vmatpush.msra.mxu0 %v1421
    %1469 = vmatpush.msra.mxu0 %v1419
    %1470 = vmatpush.msra.mxu0 %v1417
    %1471 = vmatmul.f32.gmra.mxu0 %v1401
    %v1472 = vpop.f32.mrf.mxu0
    %v1473 = vadd.f32 %v1451, %v1472
    %1474 = vmatmul.f32.gmra.mxu0 %v1402
    %v1475 = vpop.f32.mrf.mxu0
    %v1476 = vadd.f32 %v1451, %v1475
    %1477 = vmatmul.f32.gmra.mxu0 %v1403
    %v1478 = vpop.f32.mrf.mxu0
    %v1479 = vadd.f32 %v1451, %v1478
    %1480 = vmatmul.f32.gmra.mxu0 %v1404
    %v1481 = vpop.f32.mrf.mxu0
    %v1482 = vadd.f32 %v1451, %v1481
    %1483 = vmatmul.f32.gmra.mxu0 %v1405
    %v1484 = vpop.f32.mrf.mxu0
    %v1485 = vadd.f32 %v1451, %v1484
    %1486 = vmatmul.f32.gmra.mxu0 %v1406
    %v1487 = vpop.f32.mrf.mxu0
    %v1488 = vadd.f32 %v1451, %v1487
    %1489 = vmatmul.f32.gmra.mxu0 %v1407
    %v1490 = vpop.f32.mrf.mxu0
    %v1491 = vadd.f32 %v1451, %v1490
    %1492 = vmatmul.f32.gmra.mxu0 %v1408
    %v1493 = vpop.f32.mrf.mxu0
    %v1494 = vadd.f32 %v1451, %v1493
    %1495 = vmatmul.f32.gmra.mxu0 %v1409
    %v1496 = vpop.f32.mrf.mxu0
    %v1497 = vadd.f32 %v1451, %v1496
    %1498 = vmatmul.f32.gmra.mxu0 %v1410
    %v1499 = vpop.f32.mrf.mxu0
    %v1500 = vadd.f32 %v1451, %v1499
    %1501 = vmatmul.f32.gmra.mxu0 %v1411
    %v1502 = vpop.f32.mrf.mxu0
    %v1503 = vadd.f32 %v1451, %v1502
    %1504 = vmatmul.f32.gmra.mxu0 %v1412
    %v1505 = vpop.f32.mrf.mxu0
    %v1506 = vadd.f32 %v1451, %v1505
    %1507 = vmatmul.f32.gmra.mxu0 %v1413
    %v1508 = vpop.f32.mrf.mxu0
    %v1509 = vadd.f32 %v1451, %v1508
    %1510 = vmatmul.f32.gmra.mxu0 %v1414
    %v1511 = vpop.f32.mrf.mxu0
    %v1512 = vadd.f32 %v1451, %v1511
    %1513 = vmatmul.f32.gmra.mxu0 %v1415
    %v1514 = vpop.f32.mrf.mxu0
    %v1515 = vadd.f32 %v1451, %v1514
    %1516 = vmatmul.f32.gmra.mxu0 %v1416
    %v1517 = vpop.f32.mrf.mxu0
    %v1518 = vadd.f32 %v1451, %v1517
    %1519 = vdwg.mxu0
    %1520 = vmatpush.msra.mxu0 %v1448
    %1521 = vmatpush.msra.mxu0 %v1446
    %1522 = vmatpush.msra.mxu0 %v1444
    %1523 = vmatpush.msra.mxu0 %v1442
    %1524 = vmatpush.msra.mxu0 %v1440
    %1525 = vmatpush.msra.mxu0 %v1438
    %1526 = vmatpush.msra.mxu0 %v1436
    %1527 = vmatpush.msra.mxu0 %v1434
    %1528 = vmatpush.msra.mxu0 %v1432
    %1529 = vmatpush.msra.mxu0 %v1430
    %1530 = vmatpush.msra.mxu0 %v1428
    %1531 = vmatpush.msra.mxu0 %v1426
    %1532 = vmatpush.msra.mxu0 %v1424
    %1533 = vmatpush.msra.mxu0 %v1422
    %1534 = vmatpush.msra.mxu0 %v1420
    %1535 = vmatpush.msra.mxu0 %v1418
    %1536 = vmatmul.f32.gmra.mxu0 %v1401
    %v1537 = vpop.f32.mrf.mxu0
    %v1538 = vadd.f32 %v1452, %v1537
    %1539 = vmatmul.f32.gmra.mxu0 %v1402
    %v1540 = vpop.f32.mrf.mxu0
    %v1541 = vadd.f32 %v1452, %v1540
    %1542 = vmatmul.f32.gmra.mxu0 %v1403
    %v1543 = vpop.f32.mrf.mxu0
    %v1544 = vadd.f32 %v1452, %v1543
    %1545 = vmatmul.f32.gmra.mxu0 %v1404
    %v1546 = vpop.f32.mrf.mxu0
    %v1547 = vadd.f32 %v1452, %v1546
    %1548 = vmatmul.f32.gmra.mxu0 %v1405
    %v1549 = vpop.f32.mrf.mxu0
    %v1550 = vadd.f32 %v1452, %v1549
    %1551 = vmatmul.f32.gmra.mxu0 %v1406
    %v1552 = vpop.f32.mrf.mxu0
    %v1553 = vadd.f32 %v1452, %v1552
    %1554 = vmatmul.f32.gmra.mxu0 %v1407
    %v1555 = vpop.f32.mrf.mxu0
    %v1556 = vadd.f32 %v1452, %v1555
    %1557 = vmatmul.f32.gmra.mxu0 %v1408
    %v1558 = vpop.f32.mrf.mxu0
    %v1559 = vadd.f32 %v1452, %v1558
    %1560 = vmatmul.f32.gmra.mxu0 %v1409
    %v1561 = vpop.f32.mrf.mxu0
    %v1562 = vadd.f32 %v1452, %v1561
    %1563 = vmatmul.f32.gmra.mxu0 %v1410
    %v1564 = vpop.f32.mrf.mxu0
    %v1565 = vadd.f32 %v1452, %v1564
    %1566 = vmatmul.f32.gmra.mxu0 %v1411
    %v1567 = vpop.f32.mrf.mxu0
    %v1568 = vadd.f32 %v1452, %v1567
    %1569 = vmatmul.f32.gmra.mxu0 %v1412
    %v1570 = vpop.f32.mrf.mxu0
    %v1571 = vadd.f32 %v1452, %v1570
    %1572 = vmatmul.f32.gmra.mxu0 %v1413
    %v1573 = vpop.f32.mrf.mxu0
    %v1574 = vadd.f32 %v1452, %v1573
    %1575 = vmatmul.f32.gmra.mxu0 %v1414
    %v1576 = vpop.f32.mrf.mxu0
    %v1577 = vadd.f32 %v1452, %v1576
    %1578 = vmatmul.f32.gmra.mxu0 %v1415
    %v1579 = vpop.f32.mrf.mxu0
    %v1580 = vadd.f32 %v1452, %v1579
    %1581 = vmatmul.f32.gmra.mxu0 %v1416
    %v1582 = vpop.f32.mrf.mxu0
    %v1583 = vadd.f32 %v1452, %v1582
    %1584 = vdwg.mxu0
    %v1585 = vld [vmem:[%s10] sm:$0x3]
    %v1586 = vld [vmem:[%s11] sm:$0x3]
    %v1587 = vld [vmem:[%s12] sm:$0x3]
    %v1588 = vld [vmem:[%s13] sm:$0x3]
    %v1590 = vperm.slane %v1587, 0
    %v1591 = vperm.slane %v1587, 1
    %v1594 = vsub.f32 %v1473, %v1590
    %v1595 = vsub.f32 %v1538, %v1591
    %v1596 = vsub.f32 %v1476, %v1590
    %v1597 = vsub.f32 %v1541, %v1591
    %v1598 = vsub.f32 %v1479, %v1590
    %v1599 = vsub.f32 %v1544, %v1591
    %v1600 = vsub.f32 %v1482, %v1590
    %v1601 = vsub.f32 %v1547, %v1591
    %v1602 = vsub.f32 %v1485, %v1590
    %v1603 = vsub.f32 %v1550, %v1591
    %v1604 = vsub.f32 %v1488, %v1590
    %v1605 = vsub.f32 %v1553, %v1591
    %v1606 = vsub.f32 %v1491, %v1590
    %v1607 = vsub.f32 %v1556, %v1591
    %v1608 = vsub.f32 %v1494, %v1590
    %v1609 = vsub.f32 %v1559, %v1591
    %v1610 = vsub.f32 %v1497, %v1590
    %v1611 = vsub.f32 %v1562, %v1591
    %v1612 = vsub.f32 %v1500, %v1590
    %v1613 = vsub.f32 %v1565, %v1591
    %v1614 = vsub.f32 %v1503, %v1590
    %v1615 = vsub.f32 %v1568, %v1591
    %v1616 = vsub.f32 %v1506, %v1590
    %v1617 = vsub.f32 %v1571, %v1591
    %v1618 = vsub.f32 %v1509, %v1590
    %v1619 = vsub.f32 %v1574, %v1591
    %v1620 = vsub.f32 %v1512, %v1590
    %v1621 = vsub.f32 %v1577, %v1591
    %v1622 = vsub.f32 %v1515, %v1590
    %v1623 = vsub.f32 %v1580, %v1591
    %v1624 = vsub.f32 %v1518, %v1590
    %v1625 = vsub.f32 %v1583, %v1591
    %v1626 = vadd.f32 %v1588, 1e-05
    %v1627 = vrsqrt.pop %v1626
    %v1628 = vmul.f32 %v1627, %v1626
    %v1629 = vmul.f32 %v1628, %v1627
    %v1630 = vmul.f32 0.5, %v1629
    %v1631 = vsub.f32 1.5, %v1630
    %v1632 = vmul.f32 %v1627, %v1631
    %vm1633 = vweird.f32 %v1626
    %vm1634 = vweird.f32 %v1627
    %vm1635 = vmor %vm1633, %vm1634
    %v1636 = vsel %vm1635, %v1627, %v1632
    %v1638 = vperm.slane %v1636, 0
    %v1639 = vperm.slane %v1636, 1
    %v1642 = vmul.f32 %v1594, %v1638
    %v1643 = vmul.f32 %v1595, %v1639
    %v1644 = vmul.f32 %v1596, %v1638
    %v1645 = vmul.f32 %v1597, %v1639
    %v1646 = vmul.f32 %v1598, %v1638
    %v1647 = vmul.f32 %v1599, %v1639
    %v1648 = vmul.f32 %v1600, %v1638
    %v1649 = vmul.f32 %v1601, %v1639
    %v1650 = vmul.f32 %v1602, %v1638
    %v1651 = vmul.f32 %v1603, %v1639
    %v1652 = vmul.f32 %v1604, %v1638
    %v1653 = vmul.f32 %v1605, %v1639
    %v1654 = vmul.f32 %v1606, %v1638
    %v1655 = vmul.f32 %v1607, %v1639
    %v1656 = vmul.f32 %v1608, %v1638
    %v1657 = vmul.f32 %v1609, %v1639
    %v1658 = vmul.f32 %v1610, %v1638
    %v1659 = vmul.f32 %v1611, %v1639
    %v1660 = vmul.f32 %v1612, %v1638
    %v1661 = vmul.f32 %v1613, %v1639
    %v1662 = vmul.f32 %v1614, %v1638
    %v1663 = vmul.f32 %v1615, %v1639
    %v1664 = vmul.f32 %v1616, %v1638
    %v1665 = vmul.f32 %v1617, %v1639
    %v1666 = vmul.f32 %v1618, %v1638
    %v1667 = vmul.f32 %v1619, %v1639
    %v1668 = vmul.f32 %v1620, %v1638
    %v1669 = vmul.f32 %v1621, %v1639
    %v1670 = vmul.f32 %v1622, %v1638
    %v1671 = vmul.f32 %v1623, %v1639
    %v1672 = vmul.f32 %v1624, %v1638
    %v1673 = vmul.f32 %v1625, %v1639
    %v1675 = vperm.slane %v1585, 0
    %v1676 = vperm.slane %v1585, 1
    %v1679 = vmul.f32 %v1642, %v1675
    %v1680 = vmul.f32 %v1643, %v1676
    %v1681 = vmul.f32 %v1644, %v1675
    %v1682 = vmul.f32 %v1645, %v1676
    %v1683 = vmul.f32 %v1646, %v1675
    %v1684 = vmul.f32 %v1647, %v1676
    %v1685 = vmul.f32 %v1648, %v1675
    %v1686 = vmul.f32 %v1649, %v1676
    %v1687 = vmul.f32 %v1650, %v1675
    %v1688 = vmul.f32 %v1651, %v1676
    %v1689 = vmul.f32 %v1652, %v1675
    %v1690 = vmul.f32 %v1653, %v1676
    %v1691 = vmul.f32 %v1654, %v1675
    %v1692 = vmul.f32 %v1655, %v1676
    %v1693 = vmul.f32 %v1656, %v1675
    %v1694 = vmul.f32 %v1657, %v1676
    %v1695 = vmul.f32 %v1658, %v1675
    %v1696 = vmul.f32 %v1659, %v1676
    %v1697 = vmul.f32 %v1660, %v1675
    %v1698 = vmul.f32 %v1661, %v1676
    %v1699 = vmul.f32 %v1662, %v1675
    %v1700 = vmul.f32 %v1663, %v1676
    %v1701 = vmul.f32 %v1664, %v1675
    %v1702 = vmul.f32 %v1665, %v1676
    %v1703 = vmul.f32 %v1666, %v1675
    %v1704 = vmul.f32 %v1667, %v1676
    %v1705 = vmul.f32 %v1668, %v1675
    %v1706 = vmul.f32 %v1669, %v1676
    %v1707 = vmul.f32 %v1670, %v1675
    %v1708 = vmul.f32 %v1671, %v1676
    %v1709 = vmul.f32 %v1672, %v1675
    %v1710 = vmul.f32 %v1673, %v1676
    %v1712 = vperm.slane %v1586, 0
    %v1713 = vperm.slane %v1586, 1
    %v1716 = vadd.f32 %v1679, %v1712
    %v1717 = vadd.f32 %v1680, %v1713
    %v1718 = vadd.f32 %v1681, %v1712
    %v1719 = vadd.f32 %v1682, %v1713
    %v1720 = vadd.f32 %v1683, %v1712
    %v1721 = vadd.f32 %v1684, %v1713
    %v1722 = vadd.f32 %v1685, %v1712
    %v1723 = vadd.f32 %v1686, %v1713
    %v1724 = vadd.f32 %v1687, %v1712
    %v1725 = vadd.f32 %v1688, %v1713
    %v1726 = vadd.f32 %v1689, %v1712
    %v1727 = vadd.f32 %v1690, %v1713
    %v1728 = vadd.f32 %v1691, %v1712
    %v1729 = vadd.f32 %v1692, %v1713
    %v1730 = vadd.f32 %v1693, %v1712
    %v1731 = vadd.f32 %v1694, %v1713
    %v1732 = vadd.f32 %v1695, %v1712
    %v1733 = vadd.f32 %v1696, %v1713
    %v1734 = vadd.f32 %v1697, %v1712
    %v1735 = vadd.f32 %v1698, %v1713
    %v1736 = vadd.f32 %v1699, %v1712
    %v1737 = vadd.f32 %v1700, %v1713
    %v1738 = vadd.f32 %v1701, %v1712
    %v1739 = vadd.f32 %v1702, %v1713
    %v1740 = vadd.f32 %v1703, %v1712
    %v1741 = vadd.f32 %v1704, %v1713
    %v1742 = vadd.f32 %v1705, %v1712
    %v1743 = vadd.f32 %v1706, %v1713
    %v1744 = vadd.f32 %v1707, %v1712
    %v1745 = vadd.f32 %v1708, %v1713
    %v1746 = vadd.f32 %v1709, %v1712
    %v1747 = vadd.f32 %v1710, %v1713
    %v1748 = vmax.f32 %v1716, 0.0
    %v1749 = vmax.f32 %v1717, 0.0
    %v1750 = vmax.f32 %v1718, 0.0
    %v1751 = vmax.f32 %v1719, 0.0
    %v1752 = vmax.f32 %v1720, 0.0
    %v1753 = vmax.f32 %v1721, 0.0
    %v1754 = vmax.f32 %v1722, 0.0
    %v1755 = vmax.f32 %v1723, 0.0
    %v1756 = vmax.f32 %v1724, 0.0
    %v1757 = vmax.f32 %v1725, 0.0
    %v1758 = vmax.f32 %v1726, 0.0
    %v1759 = vmax.f32 %v1727, 0.0
    %v1760 = vmax.f32 %v1728, 0.0
    %v1761 = vmax.f32 %v1729, 0.0
    %v1762 = vmax.f32 %v1730, 0.0
    %v1763 = vmax.f32 %v1731, 0.0
    %v1764 = vmax.f32 %v1732, 0.0
    %v1765 = vmax.f32 %v1733, 0.0
    %v1766 = vmax.f32 %v1734, 0.0
    %v1767 = vmax.f32 %v1735, 0.0
    %v1768 = vmax.f32 %v1736, 0.0
    %v1769 = vmax.f32 %v1737, 0.0
    %v1770 = vmax.f32 %v1738, 0.0
    %v1771 = vmax.f32 %v1739, 0.0
    %v1772 = vmax.f32 %v1740, 0.0
    %v1773 = vmax.f32 %v1741, 0.0
    %v1774 = vmax.f32 %v1742, 0.0
    %v1775 = vmax.f32 %v1743, 0.0
    %v1776 = vmax.f32 %v1744, 0.0
    %v1777 = vmax.f32 %v1745, 0.0
    %v1778 = vmax.f32 %v1746, 0.0
    %v1779 = vmax.f32 %v1747, 0.0
    %v1780 = vld [vmem:[#allocation5] sm:$0xff]
    %v1781 = vld [vmem:[#allocation5 + $0x8] sm:$0xff]
    %v1782 = vld [vmem:[#allocation5 + $0x10] sm:$0xff]
    %v1783 = vld [vmem:[#allocation5 + $0x18] sm:$0xff]
    %v1784 = vld [vmem:[#allocation5 + $0x20] sm:$0xff]
    %v1785 = vld [vmem:[#allocation5 + $0x28] sm:$0xff]
    %v1786 = vld [vmem:[#allocation5 + $0x30] sm:$0xff]
    %v1787 = vld [vmem:[#allocation5 + $0x38] sm:$0xff]
    %v1788 = vld [vmem:[#allocation5 + $0x40] sm:$0xff]
    %v1789 = vld [vmem:[#allocation5 + $0x48] sm:$0xff]
    %v1790 = vld [vmem:[#allocation5 + $0x50] sm:$0xff]
    %v1791 = vld [vmem:[#allocation5 + $0x58] sm:$0xff]
    %v1792 = vld [vmem:[#allocation5 + $0x60] sm:$0xff]
    %v1793 = vld [vmem:[#allocation5 + $0x68] sm:$0xff]
    %v1794 = vld [vmem:[#allocation5 + $0x70] sm:$0xff]
    %v1795 = vld [vmem:[#allocation5 + $0x78] sm:$0xff]
    %v1796 = vld [vmem:[#allocation5 + $0x80] sm:$0xff]
    %v1797 = vld [vmem:[#allocation5 + $0x88] sm:$0xff]
    %v1798 = vld [vmem:[#allocation5 + $0x90] sm:$0xff]
    %v1799 = vld [vmem:[#allocation5 + $0x98] sm:$0xff]
    %v1800 = vld [vmem:[#allocation5 + $0xa0] sm:$0xff]
    %v1801 = vld [vmem:[#allocation5 + $0xa8] sm:$0xff]
    %v1802 = vld [vmem:[#allocation5 + $0xb0] sm:$0xff]
    %v1803 = vld [vmem:[#allocation5 + $0xb8] sm:$0xff]
    %v1804 = vld [vmem:[#allocation5 + $0xc0] sm:$0xff]
    %v1805 = vld [vmem:[#allocation5 + $0xc8] sm:$0xff]
    %v1806 = vld [vmem:[#allocation5 + $0xd0] sm:$0xff]
    %v1807 = vld [vmem:[#allocation5 + $0xd8] sm:$0xff]
    %v1808 = vld [vmem:[#allocation5 + $0xe0] sm:$0xff]
    %v1809 = vld [vmem:[#allocation5 + $0xe8] sm:$0xff]
    %v1810 = vld [vmem:[#allocation5 + $0xf0] sm:$0xff]
    %v1811 = vld [vmem:[#allocation5 + $0xf8] sm:$0xff]
    %v1812 = vld [vmem:[%s15] sm:$0x1]
    %v1814 = vperm.slane %v1812, 0
    %1816 = vmatpush.msra.mxu0 %v1795
    %1817 = vmatpush.msra.mxu0 %v1794
    %1818 = vmatpush.msra.mxu0 %v1793
    %1819 = vmatpush.msra.mxu0 %v1792
    %1820 = vmatpush.msra.mxu0 %v1791
    %1821 = vmatpush.msra.mxu0 %v1790
    %1822 = vmatpush.msra.mxu0 %v1789
    %1823 = vmatpush.msra.mxu0 %v1788
    %1824 = vmatpush.msra.mxu0 %v1787
    %1825 = vmatpush.msra.mxu0 %v1786
    %1826 = vmatpush.msra.mxu0 %v1785
    %1827 = vmatpush.msra.mxu0 %v1784
    %1828 = vmatpush.msra.mxu0 %v1783
    %1829 = vmatpush.msra.mxu0 %v1782
    %1830 = vmatpush.msra.mxu0 %v1781
    %1831 = vmatpush.msra.mxu0 %v1780
    %1832 = vmatmul.f32.gmra.mxu0 %v1748
    %v1833 = vpop.f32.mrf.mxu0
    %v1834 = vadd.f32 %v1814, %v1833
    %1835 = vmatmul.f32.gmra.mxu0 %v1750
    %v1836 = vpop.f32.mrf.mxu0
    %v1837 = vadd.f32 %v1814, %v1836
    %1838 = vmatmul.f32.gmra.mxu0 %v1752
    %v1839 = vpop.f32.mrf.mxu0
    %v1840 = vadd.f32 %v1814, %v1839
    %1841 = vmatmul.f32.gmra.mxu0 %v1754
    %v1842 = vpop.f32.mrf.mxu0
    %v1843 = vadd.f32 %v1814, %v1842
    %1844 = vmatmul.f32.gmra.mxu0 %v1756
    %v1845 = vpop.f32.mrf.mxu0
    %v1846 = vadd.f32 %v1814, %v1845
    %1847 = vmatmul.f32.gmra.mxu0 %v1758
    %v1848 = vpop.f32.mrf.mxu0
    %v1849 = vadd.f32 %v1814, %v1848
    %1850 = vmatmul.f32.gmra.mxu0 %v1760
    %v1851 = vpop.f32.mrf.mxu0
    %v1852 = vadd.f32 %v1814, %v1851
    %1853 = vmatmul.f32.gmra.mxu0 %v1762
    %v1854 = vpop.f32.mrf.mxu0
    %v1855 = vadd.f32 %v1814, %v1854
    %1856 = vmatmul.f32.gmra.mxu0 %v1764
    %v1857 = vpop.f32.mrf.mxu0
    %v1858 = vadd.f32 %v1814, %v1857
    %1859 = vmatmul.f32.gmra.mxu0 %v1766
    %v1860 = vpop.f32.mrf.mxu0
    %v1861 = vadd.f32 %v1814, %v1860
    %1862 = vmatmul.f32.gmra.mxu0 %v1768
    %v1863 = vpop.f32.mrf.mxu0
    %v1864 = vadd.f32 %v1814, %v1863
    %1865 = vmatmul.f32.gmra.mxu0 %v1770
    %v1866 = vpop.f32.mrf.mxu0
    %v1867 = vadd.f32 %v1814, %v1866
    %1868 = vmatmul.f32.gmra.mxu0 %v1772
    %v1869 = vpop.f32.mrf.mxu0
    %v1870 = vadd.f32 %v1814, %v1869
    %1871 = vmatmul.f32.gmra.mxu0 %v1774
    %v1872 = vpop.f32.mrf.mxu0
    %v1873 = vadd.f32 %v1814, %v1872
    %1874 = vmatmul.f32.gmra.mxu0 %v1776
    %v1875 = vpop.f32.mrf.mxu0
    %v1876 = vadd.f32 %v1814, %v1875
    %1877 = vmatmul.f32.gmra.mxu0 %v1778
    %v1878 = vpop.f32.mrf.mxu0
    %v1879 = vadd.f32 %v1814, %v1878
    %1880 = vdwg.mxu0
    %1881 = vmatpush.msra.mxu0 %v1811
    %1882 = vmatpush.msra.mxu0 %v1810
    %1883 = vmatpush.msra.mxu0 %v1809
    %1884 = vmatpush.msra.mxu0 %v1808
    %1885 = vmatpush.msra.mxu0 %v1807
    %1886 = vmatpush.msra.mxu0 %v1806
    %1887 = vmatpush.msra.mxu0 %v1805
    %1888 = vmatpush.msra.mxu0 %v1804
    %1889 = vmatpush.msra.mxu0 %v1803
    %1890 = vmatpush.msra.mxu0 %v1802
    %1891 = vmatpush.msra.mxu0 %v1801
    %1892 = vmatpush.msra.mxu0 %v1800
    %1893 = vmatpush.msra.mxu0 %v1799
    %1894 = vmatpush.msra.mxu0 %v1798
    %1895 = vmatpush.msra.mxu0 %v1797
    %1896 = vmatpush.msra.mxu0 %v1796
    %1897 = vmatmul.f32.gmra.mxu0 %v1749
    %v1898 = vpop.f32.mrf.mxu0
    %v1899 = vadd.f32 %v1834, %v1898
    %1900 = vmatmul.f32.gmra.mxu0 %v1751
    %v1901 = vpop.f32.mrf.mxu0
    %v1902 = vadd.f32 %v1837, %v1901
    %1903 = vmatmul.f32.gmra.mxu0 %v1753
    %v1904 = vpop.f32.mrf.mxu0
    %v1905 = vadd.f32 %v1840, %v1904
    %1906 = vmatmul.f32.gmra.mxu0 %v1755
    %v1907 = vpop.f32.mrf.mxu0
    %v1908 = vadd.f32 %v1843, %v1907
    %1909 = vmatmul.f32.gmra.mxu0 %v1757
    %v1910 = vpop.f32.mrf.mxu0
    %v1911 = vadd.f32 %v1846, %v1910
    %1912 = vmatmul.f32.gmra.mxu0 %v1759
    %v1913 = vpop.f32.mrf.mxu0
    %v1914 = vadd.f32 %v1849, %v1913
    %1915 = vmatmul.f32.gmra.mxu0 %v1761
    %v1916 = vpop.f32.mrf.mxu0
    %v1917 = vadd.f32 %v1852, %v1916
    %1918 = vmatmul.f32.gmra.mxu0 %v1763
    %v1919 = vpop.f32.mrf.mxu0
    %v1920 = vadd.f32 %v1855, %v1919
    %1921 = vmatmul.f32.gmra.mxu0 %v1765
    %v1922 = vpop.f32.mrf.mxu0
    %v1923 = vadd.f32 %v1858, %v1922
    %1924 = vmatmul.f32.gmra.mxu0 %v1767
    %v1925 = vpop.f32.mrf.mxu0
    %v1926 = vadd.f32 %v1861, %v1925
    %1927 = vmatmul.f32.gmra.mxu0 %v1769
    %v1928 = vpop.f32.mrf.mxu0
    %v1929 = vadd.f32 %v1864, %v1928
    %1930 = vmatmul.f32.gmra.mxu0 %v1771
    %v1931 = vpop.f32.mrf.mxu0
    %v1932 = vadd.f32 %v1867, %v1931
    %1933 = vmatmul.f32.gmra.mxu0 %v1773
    %v1934 = vpop.f32.mrf.mxu0
    %v1935 = vadd.f32 %v1870, %v1934
    %1936 = vmatmul.f32.gmra.mxu0 %v1775
    %v1937 = vpop.f32.mrf.mxu0
    %v1938 = vadd.f32 %v1873, %v1937
    %1939 = vmatmul.f32.gmra.mxu0 %v1777
    %v1940 = vpop.f32.mrf.mxu0
    %v1941 = vadd.f32 %v1876, %v1940
    %1942 = vmatmul.f32.gmra.mxu0 %v1779
    %v1943 = vpop.f32.mrf.mxu0
    %v1944 = vadd.f32 %v1879, %v1943
    %1945 = vdwg.mxu0
    %v1946 = vld [vmem:[%s16] sm:$0x1]
    %v1947 = vld [vmem:[%s17] sm:$0x1]
    %v1948 = vld [vmem:[%s18] sm:$0x1]
    %v1949 = vld [vmem:[%s19] sm:$0x1]
    %v1951 = vperm.slane %v1948, 0
    %v1953 = vsub.f32 %v1899, %v1951
    %v1954 = vsub.f32 %v1902, %v1951
    %v1955 = vsub.f32 %v1905, %v1951
    %v1956 = vsub.f32 %v1908, %v1951
    %v1957 = vsub.f32 %v1911, %v1951
    %v1958 = vsub.f32 %v1914, %v1951
    %v1959 = vsub.f32 %v1917, %v1951
    %v1960 = vsub.f32 %v1920, %v1951
    %v1961 = vsub.f32 %v1923, %v1951
    %v1962 = vsub.f32 %v1926, %v1951
    %v1963 = vsub.f32 %v1929, %v1951
    %v1964 = vsub.f32 %v1932, %v1951
    %v1965 = vsub.f32 %v1935, %v1951
    %v1966 = vsub.f32 %v1938, %v1951
    %v1967 = vsub.f32 %v1941, %v1951
    %v1968 = vsub.f32 %v1944, %v1951
    %v1969 = vadd.f32 %v1949, 1e-05
    %v1970 = vrsqrt.pop %v1969
    %v1971 = vmul.f32 %v1970, %v1969
    %v1972 = vmul.f32 %v1971, %v1970
    %v1973 = vmul.f32 0.5, %v1972
    %v1974 = vsub.f32 1.5, %v1973
    %v1975 = vmul.f32 %v1970, %v1974
    %vm1976 = vweird.f32 %v1969
    %vm1977 = vweird.f32 %v1970
    %vm1978 = vmor %vm1976, %vm1977
    %v1979 = vsel %vm1978, %v1970, %v1975
    %v1981 = vperm.slane %v1979, 0
    %v1983 = vmul.f32 %v1953, %v1981
    %v1984 = vmul.f32 %v1954, %v1981
    %v1985 = vmul.f32 %v1955, %v1981
    %v1986 = vmul.f32 %v1956, %v1981
    %v1987 = vmul.f32 %v1957, %v1981
    %v1988 = vmul.f32 %v1958, %v1981
    %v1989 = vmul.f32 %v1959, %v1981
    %v1990 = vmul.f32 %v1960, %v1981
    %v1991 = vmul.f32 %v1961, %v1981
    %v1992 = vmul.f32 %v1962, %v1981
    %v1993 = vmul.f32 %v1963, %v1981
    %v1994 = vmul.f32 %v1964, %v1981
    %v1995 = vmul.f32 %v1965, %v1981
    %v1996 = vmul.f32 %v1966, %v1981
    %v1997 = vmul.f32 %v1967, %v1981
    %v1998 = vmul.f32 %v1968, %v1981
    %v2000 = vperm.slane %v1946, 0
    %v2002 = vmul.f32 %v1983, %v2000
    %v2003 = vmul.f32 %v1984, %v2000
    %v2004 = vmul.f32 %v1985, %v2000
    %v2005 = vmul.f32 %v1986, %v2000
    %v2006 = vmul.f32 %v1987, %v2000
    %v2007 = vmul.f32 %v1988, %v2000
    %v2008 = vmul.f32 %v1989, %v2000
    %v2009 = vmul.f32 %v1990, %v2000
    %v2010 = vmul.f32 %v1991, %v2000
    %v2011 = vmul.f32 %v1992, %v2000
    %v2012 = vmul.f32 %v1993, %v2000
    %v2013 = vmul.f32 %v1994, %v2000
    %v2014 = vmul.f32 %v1995, %v2000
    %v2015 = vmul.f32 %v1996, %v2000
    %v2016 = vmul.f32 %v1997, %v2000
    %v2017 = vmul.f32 %v1998, %v2000
    %v2019 = vperm.slane %v1947, 0
    %v2021 = vadd.f32 %v2002, %v2019
    %v2022 = vadd.f32 %v2003, %v2019
    %v2023 = vadd.f32 %v2004, %v2019
    %v2024 = vadd.f32 %v2005, %v2019
    %v2025 = vadd.f32 %v2006, %v2019
    %v2026 = vadd.f32 %v2007, %v2019
    %v2027 = vadd.f32 %v2008, %v2019
    %v2028 = vadd.f32 %v2009, %v2019
    %v2029 = vadd.f32 %v2010, %v2019
    %v2030 = vadd.f32 %v2011, %v2019
    %v2031 = vadd.f32 %v2012, %v2019
    %v2032 = vadd.f32 %v2013, %v2019
    %v2033 = vadd.f32 %v2014, %v2019
    %v2034 = vadd.f32 %v2015, %v2019
    %v2035 = vadd.f32 %v2016, %v2019
    %v2036 = vadd.f32 %v2017, %v2019
    %v2037 = vmax.f32 %v2021, 0.0
    %v2038 = vmax.f32 %v2022, 0.0
    %v2039 = vmax.f32 %v2023, 0.0
    %v2040 = vmax.f32 %v2024, 0.0
    %v2041 = vmax.f32 %v2025, 0.0
    %v2042 = vmax.f32 %v2026, 0.0
    %v2043 = vmax.f32 %v2027, 0.0
    %v2044 = vmax.f32 %v2028, 0.0
    %v2045 = vmax.f32 %v2029, 0.0
    %v2046 = vmax.f32 %v2030, 0.0
    %v2047 = vmax.f32 %v2031, 0.0
    %v2048 = vmax.f32 %v2032, 0.0
    %v2049 = vmax.f32 %v2033, 0.0
    %v2050 = vmax.f32 %v2034, 0.0
    %v2051 = vmax.f32 %v2035, 0.0
    %v2052 = vmax.f32 %v2036, 0.0
    %s2053 = scalar_lea.vmem %s6, 8
    %v2054 = vld [vmem:[%s2053] sm:$0xff]
    %2055 = vmatpush.msra.mxu0 0.0
    %2056 = vmatpush.msra.mxu0 0.0
    %2057 = vmatpush.msra.mxu0 0.0
    %2058 = vmatpush.msra.mxu0 0.0
    %2059 = vmatpush.msra.mxu0 0.0
    %2060 = vmatpush.msra.mxu0 0.0
    %2061 = vmatpush.msra.mxu0 0.0
    %2062 = vmatpush.msra.mxu0 0.0
    %2063 = vmatpush.msra.mxu0 0.0
    %2064 = vmatpush.msra.mxu0 0.0
    %2065 = vmatpush.msra.mxu0 0.0
    %2066 = vmatpush.msra.mxu0 0.0
    %2067 = vmatpush.msra.mxu0 0.0
    %2068 = vmatpush.msra.mxu0 0.0
    %2069 = vmatpush.msra.mxu0 0.0
    %2070 = vmatpush.msra.mxu0 %v2054
    %2071 = vmatmul.f32.gmra.mxu0 %v898
    %v2072 = vpop.f32.mrf.mxu0
    %v2073 = vadd.f32 0.0, %v2072
    %2074 = vmatmul.f32.gmra.mxu0 %v901
    %v2075 = vpop.f32.mrf.mxu0
    %v2076 = vadd.f32 0.0, %v2075
    %2077 = vmatmul.f32.gmra.mxu0 %v904
    %v2078 = vpop.f32.mrf.mxu0
    %v2079 = vadd.f32 0.0, %v2078
    %2080 = vmatmul.f32.gmra.mxu0 %v907
    %v2081 = vpop.f32.mrf.mxu0
    %v2082 = vadd.f32 0.0, %v2081
    %2083 = vmatmul.f32.gmra.mxu0 %v910
    %v2084 = vpop.f32.mrf.mxu0
    %v2085 = vadd.f32 0.0, %v2084
    %2086 = vmatmul.f32.gmra.mxu0 %v913
    %v2087 = vpop.f32.mrf.mxu0
    %v2088 = vadd.f32 0.0, %v2087
    %2089 = vmatmul.f32.gmra.mxu0 %v916
    %v2090 = vpop.f32.mrf.mxu0
    %v2091 = vadd.f32 0.0, %v2090
    %2092 = vmatmul.f32.gmra.mxu0 %v919
    %v2093 = vpop.f32.mrf.mxu0
    %v2094 = vadd.f32 0.0, %v2093
    %2095 = vmatmul.f32.gmra.mxu0 %v922
    %v2096 = vpop.f32.mrf.mxu0
    %v2097 = vadd.f32 0.0, %v2096
    %2098 = vmatmul.f32.gmra.mxu0 %v925
    %v2099 = vpop.f32.mrf.mxu0
    %v2100 = vadd.f32 0.0, %v2099
    %2101 = vmatmul.f32.gmra.mxu0 %v928
    %v2102 = vpop.f32.mrf.mxu0
    %v2103 = vadd.f32 0.0, %v2102
    %2104 = vmatmul.f32.gmra.mxu0 %v931
    %v2105 = vpop.f32.mrf.mxu0
    %v2106 = vadd.f32 0.0, %v2105
    %2107 = vmatmul.f32.gmra.mxu0 %v934
    %v2108 = vpop.f32.mrf.mxu0
    %v2109 = vadd.f32 0.0, %v2108
    %2110 = vmatmul.f32.gmra.mxu0 %v937
    %v2111 = vpop.f32.mrf.mxu0
    %v2112 = vadd.f32 0.0, %v2111
    %2113 = vmatmul.f32.gmra.mxu0 %v940
    %v2114 = vpop.f32.mrf.mxu0
    %v2115 = vadd.f32 0.0, %v2114
    %2116 = vmatmul.f32.gmra.mxu0 %v943
    %v2117 = vpop.f32.mrf.mxu0
    %v2118 = vadd.f32 0.0, %v2117
    %2119 = vmatmul.f32.gmra.mxu0 %v946
    %v2120 = vpop.f32.mrf.mxu0
    %v2121 = vadd.f32 0.0, %v2120
    %2122 = vmatmul.f32.gmra.mxu0 %v949
    %v2123 = vpop.f32.mrf.mxu0
    %v2124 = vadd.f32 0.0, %v2123
    %2125 = vmatmul.f32.gmra.mxu0 %v952
    %v2126 = vpop.f32.mrf.mxu0
    %v2127 = vadd.f32 0.0, %v2126
    %2128 = vmatmul.f32.gmra.mxu0 %v955
    %v2129 = vpop.f32.mrf.mxu0
    %v2130 = vadd.f32 0.0, %v2129
    %2131 = vmatmul.f32.gmra.mxu0 %v958
    %v2132 = vpop.f32.mrf.mxu0
    %v2133 = vadd.f32 0.0, %v2132
    %2134 = vmatmul.f32.gmra.mxu0 %v961
    %v2135 = vpop.f32.mrf.mxu0
    %v2136 = vadd.f32 0.0, %v2135
    %2137 = vmatmul.f32.gmra.mxu0 %v964
    %v2138 = vpop.f32.mrf.mxu0
    %v2139 = vadd.f32 0.0, %v2138
    %2140 = vmatmul.f32.gmra.mxu0 %v967
    %v2141 = vpop.f32.mrf.mxu0
    %v2142 = vadd.f32 0.0, %v2141
    %2143 = vmatmul.f32.gmra.mxu0 %v970
    %v2144 = vpop.f32.mrf.mxu0
    %v2145 = vadd.f32 0.0, %v2144
    %2146 = vmatmul.f32.gmra.mxu0 %v973
    %v2147 = vpop.f32.mrf.mxu0
    %v2148 = vadd.f32 0.0, %v2147
    %2149 = vmatmul.f32.gmra.mxu0 %v976
    %v2150 = vpop.f32.mrf.mxu0
    %v2151 = vadd.f32 0.0, %v2150
    %2152 = vmatmul.f32.gmra.mxu0 %v979
    %v2153 = vpop.f32.mrf.mxu0
    %v2154 = vadd.f32 0.0, %v2153
    %2155 = vmatmul.f32.gmra.mxu0 %v982
    %v2156 = vpop.f32.mrf.mxu0
    %v2157 = vadd.f32 0.0, %v2156
    %2158 = vmatmul.f32.gmra.mxu0 %v985
    %v2159 = vpop.f32.mrf.mxu0
    %v2160 = vadd.f32 0.0, %v2159
    %2161 = vmatmul.f32.gmra.mxu0 %v988
    %v2162 = vpop.f32.mrf.mxu0
    %v2163 = vadd.f32 0.0, %v2162
    %2164 = vmatmul.f32.gmra.mxu0 %v991
    %v2165 = vpop.f32.mrf.mxu0
    %v2166 = vadd.f32 0.0, %v2165
    %2167 = vdwg.mxu0
    %2168 = vmatpush.msra.mxu0 %v2052
    %2169 = vmatpush.msra.mxu0 %v2051
    %2170 = vmatpush.msra.mxu0 %v2050
    %2171 = vmatpush.msra.mxu0 %v2049
    %2172 = vmatpush.msra.mxu0 %v2048
    %2173 = vmatpush.msra.mxu0 %v2047
    %2174 = vmatpush.msra.mxu0 %v2046
    %2175 = vmatpush.msra.mxu0 %v2045
    %2176 = vmatpush.msra.mxu0 %v2044
    %2177 = vmatpush.msra.mxu0 %v2043
    %2178 = vmatpush.msra.mxu0 %v2042
    %2179 = vmatpush.msra.mxu0 %v2041
    %2180 = vmatpush.msra.mxu0 %v2040
    %2181 = vmatpush.msra.mxu0 %v2039
    %2182 = vmatpush.msra.mxu0 %v2038
    %2183 = vmatpush.msra.mxu0 %v2037
    %2184 = vmatmul.f32.gmra.mxu0 %v523
    %v2185 = vpop.f32.mrf.mxu0
    %v2186 = vadd.f32 %v2073, %v2185
    %2187 = vmatmul.f32.gmra.mxu0 %v524
    %v2188 = vpop.f32.mrf.mxu0
    %v2189 = vadd.f32 %v2076, %v2188
    %2190 = vmatmul.f32.gmra.mxu0 %v525
    %v2191 = vpop.f32.mrf.mxu0
    %v2192 = vadd.f32 %v2079, %v2191
    %2193 = vmatmul.f32.gmra.mxu0 %v526
    %v2194 = vpop.f32.mrf.mxu0
    %v2195 = vadd.f32 %v2082, %v2194
    %2196 = vmatmul.f32.gmra.mxu0 %v527
    %v2197 = vpop.f32.mrf.mxu0
    %v2198 = vadd.f32 %v2085, %v2197
    %2199 = vmatmul.f32.gmra.mxu0 %v528
    %v2200 = vpop.f32.mrf.mxu0
    %v2201 = vadd.f32 %v2088, %v2200
    %2202 = vmatmul.f32.gmra.mxu0 %v529
    %v2203 = vpop.f32.mrf.mxu0
    %v2204 = vadd.f32 %v2091, %v2203
    %2205 = vmatmul.f32.gmra.mxu0 %v530
    %v2206 = vpop.f32.mrf.mxu0
    %v2207 = vadd.f32 %v2094, %v2206
    %2208 = vmatmul.f32.gmra.mxu0 %v531
    %v2209 = vpop.f32.mrf.mxu0
    %v2210 = vadd.f32 %v2097, %v2209
    %2211 = vmatmul.f32.gmra.mxu0 %v532
    %v2212 = vpop.f32.mrf.mxu0
    %v2213 = vadd.f32 %v2100, %v2212
    %2214 = vmatmul.f32.gmra.mxu0 %v533
    %v2215 = vpop.f32.mrf.mxu0
    %v2216 = vadd.f32 %v2103, %v2215
    %2217 = vmatmul.f32.gmra.mxu0 %v534
    %v2218 = vpop.f32.mrf.mxu0
    %v2219 = vadd.f32 %v2106, %v2218
    %2220 = vmatmul.f32.gmra.mxu0 %v535
    %v2221 = vpop.f32.mrf.mxu0
    %v2222 = vadd.f32 %v2109, %v2221
    %2223 = vmatmul.f32.gmra.mxu0 %v536
    %v2224 = vpop.f32.mrf.mxu0
    %v2225 = vadd.f32 %v2112, %v2224
    %2226 = vmatmul.f32.gmra.mxu0 %v537
    %v2227 = vpop.f32.mrf.mxu0
    %v2228 = vadd.f32 %v2115, %v2227
    %2229 = vmatmul.f32.gmra.mxu0 %v538
    %v2230 = vpop.f32.mrf.mxu0
    %v2231 = vadd.f32 %v2118, %v2230
    %2232 = vmatmul.f32.gmra.mxu0 %v539
    %v2233 = vpop.f32.mrf.mxu0
    %v2234 = vadd.f32 %v2121, %v2233
    %2235 = vmatmul.f32.gmra.mxu0 %v540
    %v2236 = vpop.f32.mrf.mxu0
    %v2237 = vadd.f32 %v2124, %v2236
    %2238 = vmatmul.f32.gmra.mxu0 %v541
    %v2239 = vpop.f32.mrf.mxu0
    %v2240 = vadd.f32 %v2127, %v2239
    %2241 = vmatmul.f32.gmra.mxu0 %v542
    %v2242 = vpop.f32.mrf.mxu0
    %v2243 = vadd.f32 %v2130, %v2242
    %2244 = vmatmul.f32.gmra.mxu0 %v543
    %v2245 = vpop.f32.mrf.mxu0
    %v2246 = vadd.f32 %v2133, %v2245
    %2247 = vmatmul.f32.gmra.mxu0 %v544
    %v2248 = vpop.f32.mrf.mxu0
    %v2249 = vadd.f32 %v2136, %v2248
    %2250 = vmatmul.f32.gmra.mxu0 %v545
    %v2251 = vpop.f32.mrf.mxu0
    %v2252 = vadd.f32 %v2139, %v2251
    %2253 = vmatmul.f32.gmra.mxu0 %v546
    %v2254 = vpop.f32.mrf.mxu0
    %v2255 = vadd.f32 %v2142, %v2254
    %2256 = vmatmul.f32.gmra.mxu0 %v547
    %v2257 = vpop.f32.mrf.mxu0
    %v2258 = vadd.f32 %v2145, %v2257
    %2259 = vmatmul.f32.gmra.mxu0 %v548
    %v2260 = vpop.f32.mrf.mxu0
    %v2261 = vadd.f32 %v2148, %v2260
    %2262 = vmatmul.f32.gmra.mxu0 %v549
    %v2263 = vpop.f32.mrf.mxu0
    %v2264 = vadd.f32 %v2151, %v2263
    %2265 = vmatmul.f32.gmra.mxu0 %v550
    %v2266 = vpop.f32.mrf.mxu0
    %v2267 = vadd.f32 %v2154, %v2266
    %2268 = vmatmul.f32.gmra.mxu0 %v551
    %v2269 = vpop.f32.mrf.mxu0
    %v2270 = vadd.f32 %v2157, %v2269
    %2271 = vmatmul.f32.gmra.mxu0 %v552
    %v2272 = vpop.f32.mrf.mxu0
    %v2273 = vadd.f32 %v2160, %v2272
    %2274 = vmatmul.f32.gmra.mxu0 %v553
    %v2275 = vpop.f32.mrf.mxu0
    %v2276 = vadd.f32 %v2163, %v2275
    %2277 = vmatmul.f32.gmra.mxu0 %v554
    %v2278 = vpop.f32.mrf.mxu0
    %v2279 = vadd.f32 %v2166, %v2278
    %2280 = vdwg.mxu0
    %v2281 = vmax.f32 %v2186, 0.0
    %v2282 = vmax.f32 %v2189, 0.0
    %v2283 = vmax.f32 %v2192, 0.0
    %v2284 = vmax.f32 %v2195, 0.0
    %v2285 = vmax.f32 %v2198, 0.0
    %v2286 = vmax.f32 %v2201, 0.0
    %v2287 = vmax.f32 %v2204, 0.0
    %v2288 = vmax.f32 %v2207, 0.0
    %v2289 = vmax.f32 %v2210, 0.0
    %v2290 = vmax.f32 %v2213, 0.0
    %v2291 = vmax.f32 %v2216, 0.0
    %v2292 = vmax.f32 %v2219, 0.0
    %v2293 = vmax.f32 %v2222, 0.0
    %v2294 = vmax.f32 %v2225, 0.0
    %v2295 = vmax.f32 %v2228, 0.0
    %v2296 = vmax.f32 %v2231, 0.0
    %v2297 = vmax.f32 %v2234, 0.0
    %v2298 = vmax.f32 %v2237, 0.0
    %v2299 = vmax.f32 %v2240, 0.0
    %v2300 = vmax.f32 %v2243, 0.0
    %v2301 = vmax.f32 %v2246, 0.0
    %v2302 = vmax.f32 %v2249, 0.0
    %v2303 = vmax.f32 %v2252, 0.0
    %v2304 = vmax.f32 %v2255, 0.0
    %v2305 = vmax.f32 %v2258, 0.0
    %v2306 = vmax.f32 %v2261, 0.0
    %v2307 = vmax.f32 %v2264, 0.0
    %v2308 = vmax.f32 %v2267, 0.0
    %v2309 = vmax.f32 %v2270, 0.0
    %v2310 = vmax.f32 %v2273, 0.0
    %v2311 = vmax.f32 %v2276, 0.0
    %v2312 = vmax.f32 %v2279, 0.0
    %2313 = vmatpush.msra.mxu0 %v2296
    %2314 = vmatpush.msra.mxu0 %v2295
    %2315 = vmatpush.msra.mxu0 %v2294
    %2316 = vmatpush.msra.mxu0 %v2293
    %2317 = vmatpush.msra.mxu0 %v2292
    %2318 = vmatpush.msra.mxu0 %v2291
    %2319 = vmatpush.msra.mxu0 %v2290
    %2320 = vmatpush.msra.mxu0 %v2289
    %2321 = vmatpush.msra.mxu0 %v2288
    %2322 = vmatpush.msra.mxu0 %v2287
    %2323 = vmatpush.msra.mxu0 %v2286
    %2324 = vmatpush.msra.mxu0 %v2285
    %2325 = vmatpush.msra.mxu0 %v2284
    %2326 = vmatpush.msra.mxu0 %v2283
    %2327 = vmatpush.msra.mxu0 %v2282
    %2328 = vmatpush.msra.mxu0 %v2281
    %2329 = vmatmul.f32.gmra.mxu0 %v639
    %v2330 = vpop.f32.mrf.mxu0
    %v2331 = vadd.f32 0.0, %v2330
    %2332 = vmatmul.f32.gmra.mxu0 %v641
    %v2333 = vpop.f32.mrf.mxu0
    %v2334 = vadd.f32 0.0, %v2333
    %2335 = vmatmul.f32.gmra.mxu0 %v643
    %v2336 = vpop.f32.mrf.mxu0
    %v2337 = vadd.f32 0.0, %v2336
    %2338 = vmatmul.f32.gmra.mxu0 %v645
    %v2339 = vpop.f32.mrf.mxu0
    %v2340 = vadd.f32 0.0, %v2339
    %2341 = vmatmul.f32.gmra.mxu0 %v647
    %v2342 = vpop.f32.mrf.mxu0
    %v2343 = vadd.f32 0.0, %v2342
    %2344 = vmatmul.f32.gmra.mxu0 %v649
    %v2345 = vpop.f32.mrf.mxu0
    %v2346 = vadd.f32 0.0, %v2345
    %2347 = vmatmul.f32.gmra.mxu0 %v651
    %v2348 = vpop.f32.mrf.mxu0
    %v2349 = vadd.f32 0.0, %v2348
    %2350 = vmatmul.f32.gmra.mxu0 %v653
    %v2351 = vpop.f32.mrf.mxu0
    %v2352 = vadd.f32 0.0, %v2351
    %2353 = vmatmul.f32.gmra.mxu0 %v655
    %v2354 = vpop.f32.mrf.mxu0
    %v2355 = vadd.f32 0.0, %v2354
    %2356 = vmatmul.f32.gmra.mxu0 %v657
    %v2357 = vpop.f32.mrf.mxu0
    %v2358 = vadd.f32 0.0, %v2357
    %2359 = vmatmul.f32.gmra.mxu0 %v659
    %v2360 = vpop.f32.mrf.mxu0
    %v2361 = vadd.f32 0.0, %v2360
    %2362 = vmatmul.f32.gmra.mxu0 %v661
    %v2363 = vpop.f32.mrf.mxu0
    %v2364 = vadd.f32 0.0, %v2363
    %2365 = vmatmul.f32.gmra.mxu0 %v663
    %v2366 = vpop.f32.mrf.mxu0
    %v2367 = vadd.f32 0.0, %v2366
    %2368 = vmatmul.f32.gmra.mxu0 %v665
    %v2369 = vpop.f32.mrf.mxu0
    %v2370 = vadd.f32 0.0, %v2369
    %2371 = vmatmul.f32.gmra.mxu0 %v667
    %v2372 = vpop.f32.mrf.mxu0
    %v2373 = vadd.f32 0.0, %v2372
    %2374 = vmatmul.f32.gmra.mxu0 %v669
    %v2375 = vpop.f32.mrf.mxu0
    %v2376 = vadd.f32 0.0, %v2375
    %2377 = vdwg.mxu0
    %2378 = vmatpush.msra.mxu0 %v2312
    %2379 = vmatpush.msra.mxu0 %v2311
    %2380 = vmatpush.msra.mxu0 %v2310
    %2381 = vmatpush.msra.mxu0 %v2309
    %2382 = vmatpush.msra.mxu0 %v2308
    %2383 = vmatpush.msra.mxu0 %v2307
    %2384 = vmatpush.msra.mxu0 %v2306
    %2385 = vmatpush.msra.mxu0 %v2305
    %2386 = vmatpush.msra.mxu0 %v2304
    %2387 = vmatpush.msra.mxu0 %v2303
    %2388 = vmatpush.msra.mxu0 %v2302
    %2389 = vmatpush.msra.mxu0 %v2301
    %2390 = vmatpush.msra.mxu0 %v2300
    %2391 = vmatpush.msra.mxu0 %v2299
    %2392 = vmatpush.msra.mxu0 %v2298
    %2393 = vmatpush.msra.mxu0 %v2297
    %2394 = vmatmul.f32.gmra.mxu0 %v640
    %v2395 = vpop.f32.mrf.mxu0
    %v2396 = vadd.f32 %v2331, %v2395
    %2397 = vmatmul.f32.gmra.mxu0 %v642
    %v2398 = vpop.f32.mrf.mxu0
    %v2399 = vadd.f32 %v2334, %v2398
    %2400 = vmatmul.f32.gmra.mxu0 %v644
    %v2401 = vpop.f32.mrf.mxu0
    %v2402 = vadd.f32 %v2337, %v2401
    %2403 = vmatmul.f32.gmra.mxu0 %v646
    %v2404 = vpop.f32.mrf.mxu0
    %v2405 = vadd.f32 %v2340, %v2404
    %2406 = vmatmul.f32.gmra.mxu0 %v648
    %v2407 = vpop.f32.mrf.mxu0
    %v2408 = vadd.f32 %v2343, %v2407
    %2409 = vmatmul.f32.gmra.mxu0 %v650
    %v2410 = vpop.f32.mrf.mxu0
    %v2411 = vadd.f32 %v2346, %v2410
    %2412 = vmatmul.f32.gmra.mxu0 %v652
    %v2413 = vpop.f32.mrf.mxu0
    %v2414 = vadd.f32 %v2349, %v2413
    %2415 = vmatmul.f32.gmra.mxu0 %v654
    %v2416 = vpop.f32.mrf.mxu0
    %v2417 = vadd.f32 %v2352, %v2416
    %2418 = vmatmul.f32.gmra.mxu0 %v656
    %v2419 = vpop.f32.mrf.mxu0
    %v2420 = vadd.f32 %v2355, %v2419
    %2421 = vmatmul.f32.gmra.mxu0 %v658
    %v2422 = vpop.f32.mrf.mxu0
    %v2423 = vadd.f32 %v2358, %v2422
    %2424 = vmatmul.f32.gmra.mxu0 %v660
    %v2425 = vpop.f32.mrf.mxu0
    %v2426 = vadd.f32 %v2361, %v2425
    %2427 = vmatmul.f32.gmra.mxu0 %v662
    %v2428 = vpop.f32.mrf.mxu0
    %v2429 = vadd.f32 %v2364, %v2428
    %2430 = vmatmul.f32.gmra.mxu0 %v664
    %v2431 = vpop.f32.mrf.mxu0
    %v2432 = vadd.f32 %v2367, %v2431
    %2433 = vmatmul.f32.gmra.mxu0 %v666
    %v2434 = vpop.f32.mrf.mxu0
    %v2435 = vadd.f32 %v2370, %v2434
    %2436 = vmatmul.f32.gmra.mxu0 %v668
    %v2437 = vpop.f32.mrf.mxu0
    %v2438 = vadd.f32 %v2373, %v2437
    %2439 = vmatmul.f32.gmra.mxu0 %v670
    %v2440 = vpop.f32.mrf.mxu0
    %v2441 = vadd.f32 %v2376, %v2440
    %2442 = vdwg.mxu0
    %s2443 = scalar_lea.vmem %s7, 1
    %v2444 = vld [vmem:[%s2443] sm:$0x1]
    %v2446 = vperm.slane %v2444, 0
    %v2448 = vmul.f32 %v2037, %v2446
    %v2449 = vmul.f32 %v2038, %v2446
    %v2450 = vmul.f32 %v2039, %v2446
    %v2451 = vmul.f32 %v2040, %v2446
    %v2452 = vmul.f32 %v2041, %v2446
    %v2453 = vmul.f32 %v2042, %v2446
    %v2454 = vmul.f32 %v2043, %v2446
    %v2455 = vmul.f32 %v2044, %v2446
    %v2456 = vmul.f32 %v2045, %v2446
    %v2457 = vmul.f32 %v2046, %v2446
    %v2458 = vmul.f32 %v2047, %v2446
    %v2459 = vmul.f32 %v2048, %v2446
    %v2460 = vmul.f32 %v2049, %v2446
    %v2461 = vmul.f32 %v2050, %v2446
    %v2462 = vmul.f32 %v2051, %v2446
    %v2463 = vmul.f32 %v2052, %v2446
    %v2464 = vadd.f32 %v2448, %v2396
    %v2465 = vadd.f32 %v2449, %v2399
    %v2466 = vadd.f32 %v2450, %v2402
    %v2467 = vadd.f32 %v2451, %v2405
    %v2468 = vadd.f32 %v2452, %v2408
    %v2469 = vadd.f32 %v2453, %v2411
    %v2470 = vadd.f32 %v2454, %v2414
    %v2471 = vadd.f32 %v2455, %v2417
    %v2472 = vadd.f32 %v2456, %v2420
    %v2473 = vadd.f32 %v2457, %v2423
    %v2474 = vadd.f32 %v2458, %v2426
    %v2475 = vadd.f32 %v2459, %v2429
    %v2476 = vadd.f32 %v2460, %v2432
    %v2477 = vadd.f32 %v2461, %v2435
    %v2478 = vadd.f32 %v2462, %v2438
    %v2479 = vadd.f32 %v2463, %v2441
    %s2480 = scalar_lea.vmem [#allocation2], 256
    %v2481 = vld [vmem:[%s2480] sm:$0xff]
    %v2482 = vld [vmem:[%s2480 + $0x8] sm:$0xff]
    %v2483 = vld [vmem:[%s2480 + $0x10] sm:$0xff]
    %v2484 = vld [vmem:[%s2480 + $0x18] sm:$0xff]
    %v2485 = vld [vmem:[%s2480 + $0x20] sm:$0xff]
    %v2486 = vld [vmem:[%s2480 + $0x28] sm:$0xff]
    %v2487 = vld [vmem:[%s2480 + $0x30] sm:$0xff]
    %v2488 = vld [vmem:[%s2480 + $0x38] sm:$0xff]
    %v2489 = vld [vmem:[%s2480 + $0x40] sm:$0xff]
    %v2490 = vld [vmem:[%s2480 + $0x48] sm:$0xff]
    %v2491 = vld [vmem:[%s2480 + $0x50] sm:$0xff]
    %v2492 = vld [vmem:[%s2480 + $0x58] sm:$0xff]
    %v2493 = vld [vmem:[%s2480 + $0x60] sm:$0xff]
    %v2494 = vld [vmem:[%s2480 + $0x68] sm:$0xff]
    %v2495 = vld [vmem:[%s2480 + $0x70] sm:$0xff]
    %v2496 = vld [vmem:[%s2480 + $0x78] sm:$0xff]
    %v2497 = vld [vmem:[%s2480 + $0x80] sm:$0xff]
    %v2498 = vld [vmem:[%s2480 + $0x88] sm:$0xff]
    %v2499 = vld [vmem:[%s2480 + $0x90] sm:$0xff]
    %v2500 = vld [vmem:[%s2480 + $0x98] sm:$0xff]
    %v2501 = vld [vmem:[%s2480 + $0xa0] sm:$0xff]
    %v2502 = vld [vmem:[%s2480 + $0xa8] sm:$0xff]
    %v2503 = vld [vmem:[%s2480 + $0xb0] sm:$0xff]
    %v2504 = vld [vmem:[%s2480 + $0xb8] sm:$0xff]
    %v2505 = vld [vmem:[%s2480 + $0xc0] sm:$0xff]
    %v2506 = vld [vmem:[%s2480 + $0xc8] sm:$0xff]
    %v2507 = vld [vmem:[%s2480 + $0xd0] sm:$0xff]
    %v2508 = vld [vmem:[%s2480 + $0xd8] sm:$0xff]
    %v2509 = vld [vmem:[%s2480 + $0xe0] sm:$0xff]
    %v2510 = vld [vmem:[%s2480 + $0xe8] sm:$0xff]
    %v2511 = vld [vmem:[%s2480 + $0xf0] sm:$0xff]
    %v2512 = vld [vmem:[%s2480 + $0xf8] sm:$0xff]
    %s2513 = scalar_lea.vmem %s9, 2
    %v2514 = vld [vmem:[%s2513] sm:$0x3]
    %v2516 = vperm.slane %v2514, 0
    %v2517 = vperm.slane %v2514, 1
    %2520 = vmatpush.msra.mxu0 %v2511
    %2521 = vmatpush.msra.mxu0 %v2509
    %2522 = vmatpush.msra.mxu0 %v2507
    %2523 = vmatpush.msra.mxu0 %v2505
    %2524 = vmatpush.msra.mxu0 %v2503
    %2525 = vmatpush.msra.mxu0 %v2501
    %2526 = vmatpush.msra.mxu0 %v2499
    %2527 = vmatpush.msra.mxu0 %v2497
    %2528 = vmatpush.msra.mxu0 %v2495
    %2529 = vmatpush.msra.mxu0 %v2493
    %2530 = vmatpush.msra.mxu0 %v2491
    %2531 = vmatpush.msra.mxu0 %v2489
    %2532 = vmatpush.msra.mxu0 %v2487
    %2533 = vmatpush.msra.mxu0 %v2485
    %2534 = vmatpush.msra.mxu0 %v2483
    %2535 = vmatpush.msra.mxu0 %v2481
    %2536 = vmatmul.f32.gmra.mxu0 %v2464
    %v2537 = vpop.f32.mrf.mxu0
    %v2538 = vadd.f32 %v2516, %v2537
    %2539 = vmatmul.f32.gmra.mxu0 %v2465
    %v2540 = vpop.f32.mrf.mxu0
    %v2541 = vadd.f32 %v2516, %v2540
    %2542 = vmatmul.f32.gmra.mxu0 %v2466
    %v2543 = vpop.f32.mrf.mxu0
    %v2544 = vadd.f32 %v2516, %v2543
    %2545 = vmatmul.f32.gmra.mxu0 %v2467
    %v2546 = vpop.f32.mrf.mxu0
    %v2547 = vadd.f32 %v2516, %v2546
    %2548 = vmatmul.f32.gmra.mxu0 %v2468
    %v2549 = vpop.f32.mrf.mxu0
    %v2550 = vadd.f32 %v2516, %v2549
    %2551 = vmatmul.f32.gmra.mxu0 %v2469
    %v2552 = vpop.f32.mrf.mxu0
    %v2553 = vadd.f32 %v2516, %v2552
    %2554 = vmatmul.f32.gmra.mxu0 %v2470
    %v2555 = vpop.f32.mrf.mxu0
    %v2556 = vadd.f32 %v2516, %v2555
    %2557 = vmatmul.f32.gmra.mxu0 %v2471
    %v2558 = vpop.f32.mrf.mxu0
    %v2559 = vadd.f32 %v2516, %v2558
    %2560 = vmatmul.f32.gmra.mxu0 %v2472
    %v2561 = vpop.f32.mrf.mxu0
    %v2562 = vadd.f32 %v2516, %v2561
    %2563 = vmatmul.f32.gmra.mxu0 %v2473
    %v2564 = vpop.f32.mrf.mxu0
    %v2565 = vadd.f32 %v2516, %v2564
    %2566 = vmatmul.f32.gmra.mxu0 %v2474
    %v2567 = vpop.f32.mrf.mxu0
    %v2568 = vadd.f32 %v2516, %v2567
    %2569 = vmatmul.f32.gmra.mxu0 %v2475
    %v2570 = vpop.f32.mrf.mxu0
    %v2571 = vadd.f32 %v2516, %v2570
    %2572 = vmatmul.f32.gmra.mxu0 %v2476
    %v2573 = vpop.f32.mrf.mxu0
    %v2574 = vadd.f32 %v2516, %v2573
    %2575 = vmatmul.f32.gmra.mxu0 %v2477
    %v2576 = vpop.f32.mrf.mxu0
    %v2577 = vadd.f32 %v2516, %v2576
    %2578 = vmatmul.f32.gmra.mxu0 %v2478
    %v2579 = vpop.f32.mrf.mxu0
    %v2580 = vadd.f32 %v2516, %v2579
    %2581 = vmatmul.f32.gmra.mxu0 %v2479
    %v2582 = vpop.f32.mrf.mxu0
    %v2583 = vadd.f32 %v2516, %v2582
    %2584 = vdwg.mxu0
    %2585 = vmatpush.msra.mxu0 %v2512
    %2586 = vmatpush.msra.mxu0 %v2510
    %2587 = vmatpush.msra.mxu0 %v2508
    %2588 = vmatpush.msra.mxu0 %v2506
    %2589 = vmatpush.msra.mxu0 %v2504
    %2590 = vmatpush.msra.mxu0 %v2502
    %2591 = vmatpush.msra.mxu0 %v2500
    %2592 = vmatpush.msra.mxu0 %v2498
    %2593 = vmatpush.msra.mxu0 %v2496
    %2594 = vmatpush.msra.mxu0 %v2494
    %2595 = vmatpush.msra.mxu0 %v2492
    %2596 = vmatpush.msra.mxu0 %v2490
    %2597 = vmatpush.msra.mxu0 %v2488
    %2598 = vmatpush.msra.mxu0 %v2486
    %2599 = vmatpush.msra.mxu0 %v2484
    %2600 = vmatpush.msra.mxu0 %v2482
    %2601 = vmatmul.f32.gmra.mxu0 %v2464
    %v2602 = vpop.f32.mrf.mxu0
    %v2603 = vadd.f32 %v2517, %v2602
    %2604 = vmatmul.f32.gmra.mxu0 %v2465
    %v2605 = vpop.f32.mrf.mxu0
    %v2606 = vadd.f32 %v2517, %v2605
    %2607 = vmatmul.f32.gmra.mxu0 %v2466
    %v2608 = vpop.f32.mrf.mxu0
    %v2609 = vadd.f32 %v2517, %v2608
    %2610 = vmatmul.f32.gmra.mxu0 %v2467
    %v2611 = vpop.f32.mrf.mxu0
    %v2612 = vadd.f32 %v2517, %v2611
    %2613 = vmatmul.f32.gmra.mxu0 %v2468
    %v2614 = vpop.f32.mrf.mxu0
    %v2615 = vadd.f32 %v2517, %v2614
    %2616 = vmatmul.f32.gmra.mxu0 %v2469
    %v2617 = vpop.f32.mrf.mxu0
    %v2618 = vadd.f32 %v2517, %v2617
    %2619 = vmatmul.f32.gmra.mxu0 %v2470
    %v2620 = vpop.f32.mrf.mxu0
    %v2621 = vadd.f32 %v2517, %v2620
    %2622 = vmatmul.f32.gmra.mxu0 %v2471
    %v2623 = vpop.f32.mrf.mxu0
    %v2624 = vadd.f32 %v2517, %v2623
    %2625 = vmatmul.f32.gmra.mxu0 %v2472
    %v2626 = vpop.f32.mrf.mxu0
    %v2627 = vadd.f32 %v2517, %v2626
    %2628 = vmatmul.f32.gmra.mxu0 %v2473
    %v2629 = vpop.f32.mrf.mxu0
    %v2630 = vadd.f32 %v2517, %v2629
    %2631 = vmatmul.f32.gmra.mxu0 %v2474
    %v2632 = vpop.f32.mrf.mxu0
    %v2633 = vadd.f32 %v2517, %v2632
    %2634 = vmatmul.f32.gmra.mxu0 %v2475
    %v2635 = vpop.f32.mrf.mxu0
    %v2636 = vadd.f32 %v2517, %v2635
    %2637 = vmatmul.f32.gmra.mxu0 %v2476
    %v2638 = vpop.f32.mrf.mxu0
    %v2639 = vadd.f32 %v2517, %v2638
    %2640 = vmatmul.f32.gmra.mxu0 %v2477
    %v2641 = vpop.f32.mrf.mxu0
    %v2642 = vadd.f32 %v2517, %v2641
    %2643 = vmatmul.f32.gmra.mxu0 %v2478
    %v2644 = vpop.f32.mrf.mxu0
    %v2645 = vadd.f32 %v2517, %v2644
    %2646 = vmatmul.f32.gmra.mxu0 %v2479
    %v2647 = vpop.f32.mrf.mxu0
    %v2648 = vadd.f32 %v2517, %v2647
    %2649 = vdwg.mxu0
    %s2650 = scalar_lea.vmem %s10, 2
    %v2651 = vld [vmem:[%s2650] sm:$0x3]
    %s2652 = scalar_lea.vmem %s11, 2
    %v2653 = vld [vmem:[%s2652] sm:$0x3]
    %s2654 = scalar_lea.vmem %s12, 2
    %v2655 = vld [vmem:[%s2654] sm:$0x3]
    %s2656 = scalar_lea.vmem %s13, 2
    %v2657 = vld [vmem:[%s2656] sm:$0x3]
    %v2659 = vperm.slane %v2655, 0
    %v2660 = vperm.slane %v2655, 1
    %v2663 = vsub.f32 %v2538, %v2659
    %v2664 = vsub.f32 %v2603, %v2660
    %v2665 = vsub.f32 %v2541, %v2659
    %v2666 = vsub.f32 %v2606, %v2660
    %v2667 = vsub.f32 %v2544, %v2659
    %v2668 = vsub.f32 %v2609, %v2660
    %v2669 = vsub.f32 %v2547, %v2659
    %v2670 = vsub.f32 %v2612, %v2660
    %v2671 = vsub.f32 %v2550, %v2659
    %v2672 = vsub.f32 %v2615, %v2660
    %v2673 = vsub.f32 %v2553, %v2659
    %v2674 = vsub.f32 %v2618, %v2660
    %v2675 = vsub.f32 %v2556, %v2659
    %v2676 = vsub.f32 %v2621, %v2660
    %v2677 = vsub.f32 %v2559, %v2659
    %v2678 = vsub.f32 %v2624, %v2660
    %v2679 = vsub.f32 %v2562, %v2659
    %v2680 = vsub.f32 %v2627, %v2660
    %v2681 = vsub.f32 %v2565, %v2659
    %v2682 = vsub.f32 %v2630, %v2660
    %v2683 = vsub.f32 %v2568, %v2659
    %v2684 = vsub.f32 %v2633, %v2660
    %v2685 = vsub.f32 %v2571, %v2659
    %v2686 = vsub.f32 %v2636, %v2660
    %v2687 = vsub.f32 %v2574, %v2659
    %v2688 = vsub.f32 %v2639, %v2660
    %v2689 = vsub.f32 %v2577, %v2659
    %v2690 = vsub.f32 %v2642, %v2660
    %v2691 = vsub.f32 %v2580, %v2659
    %v2692 = vsub.f32 %v2645, %v2660
    %v2693 = vsub.f32 %v2583, %v2659
    %v2694 = vsub.f32 %v2648, %v2660
    %v2695 = vadd.f32 %v2657, 1e-05
    %v2696 = vrsqrt.pop %v2695
    %v2697 = vmul.f32 %v2696, %v2695
    %v2698 = vmul.f32 %v2697, %v2696
    %v2699 = vmul.f32 0.5, %v2698
    %v2700 = vsub.f32 1.5, %v2699
    %v2701 = vmul.f32 %v2696, %v2700
    %vm2702 = vweird.f32 %v2695
    %vm2703 = vweird.f32 %v2696
    %vm2704 = vmor %vm2702, %vm2703
    %v2705 = vsel %vm2704, %v2696, %v2701
    %v2707 = vperm.slane %v2705, 0
    %v2708 = vperm.slane %v2705, 1
    %v2711 = vmul.f32 %v2663, %v2707
    %v2712 = vmul.f32 %v2664, %v2708
    %v2713 = vmul.f32 %v2665, %v2707
    %v2714 = vmul.f32 %v2666, %v2708
    %v2715 = vmul.f32 %v2667, %v2707
    %v2716 = vmul.f32 %v2668, %v2708
    %v2717 = vmul.f32 %v2669, %v2707
    %v2718 = vmul.f32 %v2670, %v2708
    %v2719 = vmul.f32 %v2671, %v2707
    %v2720 = vmul.f32 %v2672, %v2708
    %v2721 = vmul.f32 %v2673, %v2707
    %v2722 = vmul.f32 %v2674, %v2708
    %v2723 = vmul.f32 %v2675, %v2707
    %v2724 = vmul.f32 %v2676, %v2708
    %v2725 = vmul.f32 %v2677, %v2707
    %v2726 = vmul.f32 %v2678, %v2708
    %v2727 = vmul.f32 %v2679, %v2707
    %v2728 = vmul.f32 %v2680, %v2708
    %v2729 = vmul.f32 %v2681, %v2707
    %v2730 = vmul.f32 %v2682, %v2708
    %v2731 = vmul.f32 %v2683, %v2707
    %v2732 = vmul.f32 %v2684, %v2708
    %v2733 = vmul.f32 %v2685, %v2707
    %v2734 = vmul.f32 %v2686, %v2708
    %v2735 = vmul.f32 %v2687, %v2707
    %v2736 = vmul.f32 %v2688, %v2708
    %v2737 = vmul.f32 %v2689, %v2707
    %v2738 = vmul.f32 %v2690, %v2708
    %v2739 = vmul.f32 %v2691, %v2707
    %v2740 = vmul.f32 %v2692, %v2708
    %v2741 = vmul.f32 %v2693, %v2707
    %v2742 = vmul.f32 %v2694, %v2708
    %v2744 = vperm.slane %v2651, 0
    %v2745 = vperm.slane %v2651, 1
    %v2748 = vmul.f32 %v2711, %v2744
    %v2749 = vmul.f32 %v2712, %v2745
    %v2750 = vmul.f32 %v2713, %v2744
    %v2751 = vmul.f32 %v2714, %v2745
    %v2752 = vmul.f32 %v2715, %v2744
    %v2753 = vmul.f32 %v2716, %v2745
    %v2754 = vmul.f32 %v2717, %v2744
    %v2755 = vmul.f32 %v2718, %v2745
    %v2756 = vmul.f32 %v2719, %v2744
    %v2757 = vmul.f32 %v2720, %v2745
    %v2758 = vmul.f32 %v2721, %v2744
    %v2759 = vmul.f32 %v2722, %v2745
    %v2760 = vmul.f32 %v2723, %v2744
    %v2761 = vmul.f32 %v2724, %v2745
    %v2762 = vmul.f32 %v2725, %v2744
    %v2763 = vmul.f32 %v2726, %v2745
    %v2764 = vmul.f32 %v2727, %v2744
    %v2765 = vmul.f32 %v2728, %v2745
    %v2766 = vmul.f32 %v2729, %v2744
    %v2767 = vmul.f32 %v2730, %v2745
    %v2768 = vmul.f32 %v2731, %v2744
    %v2769 = vmul.f32 %v2732, %v2745
    %v2770 = vmul.f32 %v2733, %v2744
    %v2771 = vmul.f32 %v2734, %v2745
    %v2772 = vmul.f32 %v2735, %v2744
    %v2773 = vmul.f32 %v2736, %v2745
    %v2774 = vmul.f32 %v2737, %v2744
    %v2775 = vmul.f32 %v2738, %v2745
    %v2776 = vmul.f32 %v2739, %v2744
    %v2777 = vmul.f32 %v2740, %v2745
    %v2778 = vmul.f32 %v2741, %v2744
    %v2779 = vmul.f32 %v2742, %v2745
    %v2781 = vperm.slane %v2653, 0
    %v2782 = vperm.slane %v2653, 1
    %v2785 = vadd.f32 %v2748, %v2781
    %v2786 = vadd.f32 %v2749, %v2782
    %v2787 = vadd.f32 %v2750, %v2781
    %v2788 = vadd.f32 %v2751, %v2782
    %v2789 = vadd.f32 %v2752, %v2781
    %v2790 = vadd.f32 %v2753, %v2782
    %v2791 = vadd.f32 %v2754, %v2781
    %v2792 = vadd.f32 %v2755, %v2782
    %v2793 = vadd.f32 %v2756, %v2781
    %v2794 = vadd.f32 %v2757, %v2782
    %v2795 = vadd.f32 %v2758, %v2781
    %v2796 = vadd.f32 %v2759, %v2782
    %v2797 = vadd.f32 %v2760, %v2781
    %v2798 = vadd.f32 %v2761, %v2782
    %v2799 = vadd.f32 %v2762, %v2781
    %v2800 = vadd.f32 %v2763, %v2782
    %v2801 = vadd.f32 %v2764, %v2781
    %v2802 = vadd.f32 %v2765, %v2782
    %v2803 = vadd.f32 %v2766, %v2781
    %v2804 = vadd.f32 %v2767, %v2782
    %v2805 = vadd.f32 %v2768, %v2781
    %v2806 = vadd.f32 %v2769, %v2782
    %v2807 = vadd.f32 %v2770, %v2781
    %v2808 = vadd.f32 %v2771, %v2782
    %v2809 = vadd.f32 %v2772, %v2781
    %v2810 = vadd.f32 %v2773, %v2782
    %v2811 = vadd.f32 %v2774, %v2781
    %v2812 = vadd.f32 %v2775, %v2782
    %v2813 = vadd.f32 %v2776, %v2781
    %v2814 = vadd.f32 %v2777, %v2782
    %v2815 = vadd.f32 %v2778, %v2781
    %v2816 = vadd.f32 %v2779, %v2782
    %v2817 = vmax.f32 %v2785, 0.0
    %v2818 = vmax.f32 %v2786, 0.0
    %v2819 = vmax.f32 %v2787, 0.0
    %v2820 = vmax.f32 %v2788, 0.0
    %v2821 = vmax.f32 %v2789, 0.0
    %v2822 = vmax.f32 %v2790, 0.0
    %v2823 = vmax.f32 %v2791, 0.0
    %v2824 = vmax.f32 %v2792, 0.0
    %v2825 = vmax.f32 %v2793, 0.0
    %v2826 = vmax.f32 %v2794, 0.0
    %v2827 = vmax.f32 %v2795, 0.0
    %v2828 = vmax.f32 %v2796, 0.0
    %v2829 = vmax.f32 %v2797, 0.0
    %v2830 = vmax.f32 %v2798, 0.0
    %v2831 = vmax.f32 %v2799, 0.0
    %v2832 = vmax.f32 %v2800, 0.0
    %v2833 = vmax.f32 %v2801, 0.0
    %v2834 = vmax.f32 %v2802, 0.0
    %v2835 = vmax.f32 %v2803, 0.0
    %v2836 = vmax.f32 %v2804, 0.0
    %v2837 = vmax.f32 %v2805, 0.0
    %v2838 = vmax.f32 %v2806, 0.0
    %v2839 = vmax.f32 %v2807, 0.0
    %v2840 = vmax.f32 %v2808, 0.0
    %v2841 = vmax.f32 %v2809, 0.0
    %v2842 = vmax.f32 %v2810, 0.0
    %v2843 = vmax.f32 %v2811, 0.0
    %v2844 = vmax.f32 %v2812, 0.0
    %v2845 = vmax.f32 %v2813, 0.0
    %v2846 = vmax.f32 %v2814, 0.0
    %v2847 = vmax.f32 %v2815, 0.0
    %v2848 = vmax.f32 %v2816, 0.0
    %s2849 = scalar_lea.vmem [#allocation5], 256
    %v2850 = vld [vmem:[%s2849] sm:$0xff]
    %v2851 = vld [vmem:[%s2849 + $0x8] sm:$0xff]
    %v2852 = vld [vmem:[%s2849 + $0x10] sm:$0xff]
    %v2853 = vld [vmem:[%s2849 + $0x18] sm:$0xff]
    %v2854 = vld [vmem:[%s2849 + $0x20] sm:$0xff]
    %v2855 = vld [vmem:[%s2849 + $0x28] sm:$0xff]
    %v2856 = vld [vmem:[%s2849 + $0x30] sm:$0xff]
    %v2857 = vld [vmem:[%s2849 + $0x38] sm:$0xff]
    %v2858 = vld [vmem:[%s2849 + $0x40] sm:$0xff]
    %v2859 = vld [vmem:[%s2849 + $0x48] sm:$0xff]
    %v2860 = vld [vmem:[%s2849 + $0x50] sm:$0xff]
    %v2861 = vld [vmem:[%s2849 + $0x58] sm:$0xff]
    %v2862 = vld [vmem:[%s2849 + $0x60] sm:$0xff]
    %v2863 = vld [vmem:[%s2849 + $0x68] sm:$0xff]
    %v2864 = vld [vmem:[%s2849 + $0x70] sm:$0xff]
    %v2865 = vld [vmem:[%s2849 + $0x78] sm:$0xff]
    %v2866 = vld [vmem:[%s2849 + $0x80] sm:$0xff]
    %v2867 = vld [vmem:[%s2849 + $0x88] sm:$0xff]
    %v2868 = vld [vmem:[%s2849 + $0x90] sm:$0xff]
    %v2869 = vld [vmem:[%s2849 + $0x98] sm:$0xff]
    %v2870 = vld [vmem:[%s2849 + $0xa0] sm:$0xff]
    %v2871 = vld [vmem:[%s2849 + $0xa8] sm:$0xff]
    %v2872 = vld [vmem:[%s2849 + $0xb0] sm:$0xff]
    %v2873 = vld [vmem:[%s2849 + $0xb8] sm:$0xff]
    %v2874 = vld [vmem:[%s2849 + $0xc0] sm:$0xff]
    %v2875 = vld [vmem:[%s2849 + $0xc8] sm:$0xff]
    %v2876 = vld [vmem:[%s2849 + $0xd0] sm:$0xff]
    %v2877 = vld [vmem:[%s2849 + $0xd8] sm:$0xff]
    %v2878 = vld [vmem:[%s2849 + $0xe0] sm:$0xff]
    %v2879 = vld [vmem:[%s2849 + $0xe8] sm:$0xff]
    %v2880 = vld [vmem:[%s2849 + $0xf0] sm:$0xff]
    %v2881 = vld [vmem:[%s2849 + $0xf8] sm:$0xff]
    %s2882 = scalar_lea.vmem %s15, 1
    %v2883 = vld [vmem:[%s2882] sm:$0x1]
    %v2885 = vperm.slane %v2883, 0
    %2887 = vmatpush.msra.mxu0 %v2865
    %2888 = vmatpush.msra.mxu0 %v2864
    %2889 = vmatpush.msra.mxu0 %v2863
    %2890 = vmatpush.msra.mxu0 %v2862
    %2891 = vmatpush.msra.mxu0 %v2861
    %2892 = vmatpush.msra.mxu0 %v2860
    %2893 = vmatpush.msra.mxu0 %v2859
    %2894 = vmatpush.msra.mxu0 %v2858
    %2895 = vmatpush.msra.mxu0 %v2857
    %2896 = vmatpush.msra.mxu0 %v2856
    %2897 = vmatpush.msra.mxu0 %v2855
    %2898 = vmatpush.msra.mxu0 %v2854
    %2899 = vmatpush.msra.mxu0 %v2853
    %2900 = vmatpush.msra.mxu0 %v2852
    %2901 = vmatpush.msra.mxu0 %v2851
    %2902 = vmatpush.msra.mxu0 %v2850
    %2903 = vmatmul.f32.gmra.mxu0 %v2817
    %v2904 = vpop.f32.mrf.mxu0
    %v2905 = vadd.f32 %v2885, %v2904
    %2906 = vmatmul.f32.gmra.mxu0 %v2819
    %v2907 = vpop.f32.mrf.mxu0
    %v2908 = vadd.f32 %v2885, %v2907
    %2909 = vmatmul.f32.gmra.mxu0 %v2821
    %v2910 = vpop.f32.mrf.mxu0
    %v2911 = vadd.f32 %v2885, %v2910
    %2912 = vmatmul.f32.gmra.mxu0 %v2823
    %v2913 = vpop.f32.mrf.mxu0
    %v2914 = vadd.f32 %v2885, %v2913
    %2915 = vmatmul.f32.gmra.mxu0 %v2825
    %v2916 = vpop.f32.mrf.mxu0
    %v2917 = vadd.f32 %v2885, %v2916
    %2918 = vmatmul.f32.gmra.mxu0 %v2827
    %v2919 = vpop.f32.mrf.mxu0
    %v2920 = vadd.f32 %v2885, %v2919
    %2921 = vmatmul.f32.gmra.mxu0 %v2829
    %v2922 = vpop.f32.mrf.mxu0
    %v2923 = vadd.f32 %v2885, %v2922
    %2924 = vmatmul.f32.gmra.mxu0 %v2831
    %v2925 = vpop.f32.mrf.mxu0
    %v2926 = vadd.f32 %v2885, %v2925
    %2927 = vmatmul.f32.gmra.mxu0 %v2833
    %v2928 = vpop.f32.mrf.mxu0
    %v2929 = vadd.f32 %v2885, %v2928
    %2930 = vmatmul.f32.gmra.mxu0 %v2835
    %v2931 = vpop.f32.mrf.mxu0
    %v2932 = vadd.f32 %v2885, %v2931
    %2933 = vmatmul.f32.gmra.mxu0 %v2837
    %v2934 = vpop.f32.mrf.mxu0
    %v2935 = vadd.f32 %v2885, %v2934
    %2936 = vmatmul.f32.gmra.mxu0 %v2839
    %v2937 = vpop.f32.mrf.mxu0
    %v2938 = vadd.f32 %v2885, %v2937
    %2939 = vmatmul.f32.gmra.mxu0 %v2841
    %v2940 = vpop.f32.mrf.mxu0
    %v2941 = vadd.f32 %v2885, %v2940
    %2942 = vmatmul.f32.gmra.mxu0 %v2843
    %v2943 = vpop.f32.mrf.mxu0
    %v2944 = vadd.f32 %v2885, %v2943
    %2945 = vmatmul.f32.gmra.mxu0 %v2845
    %v2946 = vpop.f32.mrf.mxu0
    %v2947 = vadd.f32 %v2885, %v2946
    %2948 = vmatmul.f32.gmra.mxu0 %v2847
    %v2949 = vpop.f32.mrf.mxu0
    %v2950 = vadd.f32 %v2885, %v2949
    %2951 = vdwg.mxu0
    %2952 = vmatpush.msra.mxu0 %v2881
    %2953 = vmatpush.msra.mxu0 %v2880
    %2954 = vmatpush.msra.mxu0 %v2879
    %2955 = vmatpush.msra.mxu0 %v2878
    %2956 = vmatpush.msra.mxu0 %v2877
    %2957 = vmatpush.msra.mxu0 %v2876
    %2958 = vmatpush.msra.mxu0 %v2875
    %2959 = vmatpush.msra.mxu0 %v2874
    %2960 = vmatpush.msra.mxu0 %v2873
    %2961 = vmatpush.msra.mxu0 %v2872
    %2962 = vmatpush.msra.mxu0 %v2871
    %2963 = vmatpush.msra.mxu0 %v2870
    %2964 = vmatpush.msra.mxu0 %v2869
    %2965 = vmatpush.msra.mxu0 %v2868
    %2966 = vmatpush.msra.mxu0 %v2867
    %2967 = vmatpush.msra.mxu0 %v2866
    %2968 = vmatmul.f32.gmra.mxu0 %v2818
    %v2969 = vpop.f32.mrf.mxu0
    %v2970 = vadd.f32 %v2905, %v2969
    %2971 = vmatmul.f32.gmra.mxu0 %v2820
    %v2972 = vpop.f32.mrf.mxu0
    %v2973 = vadd.f32 %v2908, %v2972
    %2974 = vmatmul.f32.gmra.mxu0 %v2822
    %v2975 = vpop.f32.mrf.mxu0
    %v2976 = vadd.f32 %v2911, %v2975
    %2977 = vmatmul.f32.gmra.mxu0 %v2824
    %v2978 = vpop.f32.mrf.mxu0
    %v2979 = vadd.f32 %v2914, %v2978
    %2980 = vmatmul.f32.gmra.mxu0 %v2826
    %v2981 = vpop.f32.mrf.mxu0
    %v2982 = vadd.f32 %v2917, %v2981
    %2983 = vmatmul.f32.gmra.mxu0 %v2828
    %v2984 = vpop.f32.mrf.mxu0
    %v2985 = vadd.f32 %v2920, %v2984
    %2986 = vmatmul.f32.gmra.mxu0 %v2830
    %v2987 = vpop.f32.mrf.mxu0
    %v2988 = vadd.f32 %v2923, %v2987
    %2989 = vmatmul.f32.gmra.mxu0 %v2832
    %v2990 = vpop.f32.mrf.mxu0
    %v2991 = vadd.f32 %v2926, %v2990
    %2992 = vmatmul.f32.gmra.mxu0 %v2834
    %v2993 = vpop.f32.mrf.mxu0
    %v2994 = vadd.f32 %v2929, %v2993
    %2995 = vmatmul.f32.gmra.mxu0 %v2836
    %v2996 = vpop.f32.mrf.mxu0
    %v2997 = vadd.f32 %v2932, %v2996
    %2998 = vmatmul.f32.gmra.mxu0 %v2838
    %v2999 = vpop.f32.mrf.mxu0
    %v3000 = vadd.f32 %v2935, %v2999
    %3001 = vmatmul.f32.gmra.mxu0 %v2840
    %v3002 = vpop.f32.mrf.mxu0
    %v3003 = vadd.f32 %v2938, %v3002
    %3004 = vmatmul.f32.gmra.mxu0 %v2842
    %v3005 = vpop.f32.mrf.mxu0
    %v3006 = vadd.f32 %v2941, %v3005
    %3007 = vmatmul.f32.gmra.mxu0 %v2844
    %v3008 = vpop.f32.mrf.mxu0
    %v3009 = vadd.f32 %v2944, %v3008
    %3010 = vmatmul.f32.gmra.mxu0 %v2846
    %v3011 = vpop.f32.mrf.mxu0
    %v3012 = vadd.f32 %v2947, %v3011
    %3013 = vmatmul.f32.gmra.mxu0 %v2848
    %v3014 = vpop.f32.mrf.mxu0
    %v3015 = vadd.f32 %v2950, %v3014
    %3016 = vdwg.mxu0
    %s3017 = scalar_lea.vmem %s16, 1
    %v3018 = vld [vmem:[%s3017] sm:$0x1]
    %s3019 = scalar_lea.vmem %s17, 1
    %v3020 = vld [vmem:[%s3019] sm:$0x1]
    %s3021 = scalar_lea.vmem %s18, 1
    %v3022 = vld [vmem:[%s3021] sm:$0x1]
    %s3023 = scalar_lea.vmem %s19, 1
    %v3024 = vld [vmem:[%s3023] sm:$0x1]
    %v3026 = vperm.slane %v3022, 0
    %v3028 = vsub.f32 %v2970, %v3026
    %v3029 = vsub.f32 %v2973, %v3026
    %v3030 = vsub.f32 %v2976, %v3026
    %v3031 = vsub.f32 %v2979, %v3026
    %v3032 = vsub.f32 %v2982, %v3026
    %v3033 = vsub.f32 %v2985, %v3026
    %v3034 = vsub.f32 %v2988, %v3026
    %v3035 = vsub.f32 %v2991, %v3026
    %v3036 = vsub.f32 %v2994, %v3026
    %v3037 = vsub.f32 %v2997, %v3026
    %v3038 = vsub.f32 %v3000, %v3026
    %v3039 = vsub.f32 %v3003, %v3026
    %v3040 = vsub.f32 %v3006, %v3026
    %v3041 = vsub.f32 %v3009, %v3026
    %v3042 = vsub.f32 %v3012, %v3026
    %v3043 = vsub.f32 %v3015, %v3026
    %v3044 = vadd.f32 %v3024, 1e-05
    %v3045 = vrsqrt.pop %v3044
    %v3046 = vmul.f32 %v3045, %v3044
    %v3047 = vmul.f32 %v3046, %v3045
    %v3048 = vmul.f32 0.5, %v3047
    %v3049 = vsub.f32 1.5, %v3048
    %v3050 = vmul.f32 %v3045, %v3049
    %vm3051 = vweird.f32 %v3044
    %vm3052 = vweird.f32 %v3045
    %vm3053 = vmor %vm3051, %vm3052
    %v3054 = vsel %vm3053, %v3045, %v3050
    %v3056 = vperm.slane %v3054, 0
    %v3058 = vmul.f32 %v3028, %v3056
    %v3059 = vmul.f32 %v3029, %v3056
    %v3060 = vmul.f32 %v3030, %v3056
    %v3061 = vmul.f32 %v3031, %v3056
    %v3062 = vmul.f32 %v3032, %v3056
    %v3063 = vmul.f32 %v3033, %v3056
    %v3064 = vmul.f32 %v3034, %v3056
    %v3065 = vmul.f32 %v3035, %v3056
    %v3066 = vmul.f32 %v3036, %v3056
    %v3067 = vmul.f32 %v3037, %v3056
    %v3068 = vmul.f32 %v3038, %v3056
    %v3069 = vmul.f32 %v3039, %v3056
    %v3070 = vmul.f32 %v3040, %v3056
    %v3071 = vmul.f32 %v3041, %v3056
    %v3072 = vmul.f32 %v3042, %v3056
    %v3073 = vmul.f32 %v3043, %v3056
    %v3075 = vperm.slane %v3018, 0
    %v3077 = vmul.f32 %v3058, %v3075
    %v3078 = vmul.f32 %v3059, %v3075
    %v3079 = vmul.f32 %v3060, %v3075
    %v3080 = vmul.f32 %v3061, %v3075
    %v3081 = vmul.f32 %v3062, %v3075
    %v3082 = vmul.f32 %v3063, %v3075
    %v3083 = vmul.f32 %v3064, %v3075
    %v3084 = vmul.f32 %v3065, %v3075
    %v3085 = vmul.f32 %v3066, %v3075
    %v3086 = vmul.f32 %v3067, %v3075
    %v3087 = vmul.f32 %v3068, %v3075
    %v3088 = vmul.f32 %v3069, %v3075
    %v3089 = vmul.f32 %v3070, %v3075
    %v3090 = vmul.f32 %v3071, %v3075
    %v3091 = vmul.f32 %v3072, %v3075
    %v3092 = vmul.f32 %v3073, %v3075
    %v3094 = vperm.slane %v3020, 0
    %v3096 = vadd.f32 %v3077, %v3094
    %v3097 = vadd.f32 %v3078, %v3094
    %v3098 = vadd.f32 %v3079, %v3094
    %v3099 = vadd.f32 %v3080, %v3094
    %v3100 = vadd.f32 %v3081, %v3094
    %v3101 = vadd.f32 %v3082, %v3094
    %v3102 = vadd.f32 %v3083, %v3094
    %v3103 = vadd.f32 %v3084, %v3094
    %v3104 = vadd.f32 %v3085, %v3094
    %v3105 = vadd.f32 %v3086, %v3094
    %v3106 = vadd.f32 %v3087, %v3094
    %v3107 = vadd.f32 %v3088, %v3094
    %v3108 = vadd.f32 %v3089, %v3094
    %v3109 = vadd.f32 %v3090, %v3094
    %v3110 = vadd.f32 %v3091, %v3094
    %v3111 = vadd.f32 %v3092, %v3094
    %v3112 = vmax.f32 %v3096, 0.0
    %v3113 = vmax.f32 %v3097, 0.0
    %v3114 = vmax.f32 %v3098, 0.0
    %v3115 = vmax.f32 %v3099, 0.0
    %v3116 = vmax.f32 %v3100, 0.0
    %v3117 = vmax.f32 %v3101, 0.0
    %v3118 = vmax.f32 %v3102, 0.0
    %v3119 = vmax.f32 %v3103, 0.0
    %v3120 = vmax.f32 %v3104, 0.0
    %v3121 = vmax.f32 %v3105, 0.0
    %v3122 = vmax.f32 %v3106, 0.0
    %v3123 = vmax.f32 %v3107, 0.0
    %v3124 = vmax.f32 %v3108, 0.0
    %v3125 = vmax.f32 %v3109, 0.0
    %v3126 = vmax.f32 %v3110, 0.0
    %v3127 = vmax.f32 %v3111, 0.0
    %s3128 = scalar_lea.vmem %s6, 16
    %v3129 = vld [vmem:[%s3128] sm:$0xff]
    %3130 = vmatpush.msra.mxu0 0.0
    %3131 = vmatpush.msra.mxu0 0.0
    %3132 = vmatpush.msra.mxu0 0.0
    %3133 = vmatpush.msra.mxu0 0.0
    %3134 = vmatpush.msra.mxu0 0.0
    %3135 = vmatpush.msra.mxu0 0.0
    %3136 = vmatpush.msra.mxu0 0.0
    %3137 = vmatpush.msra.mxu0 0.0
    %3138 = vmatpush.msra.mxu0 0.0
    %3139 = vmatpush.msra.mxu0 0.0
    %3140 = vmatpush.msra.mxu0 0.0
    %3141 = vmatpush.msra.mxu0 0.0
    %3142 = vmatpush.msra.mxu0 0.0
    %3143 = vmatpush.msra.mxu0 0.0
    %3144 = vmatpush.msra.mxu0 0.0
    %3145 = vmatpush.msra.mxu0 %v3129
    %3146 = vmatmul.f32.gmra.mxu0 %v898
    %v3147 = vpop.f32.mrf.mxu0
    %v3148 = vadd.f32 0.0, %v3147
    %3149 = vmatmul.f32.gmra.mxu0 %v901
    %v3150 = vpop.f32.mrf.mxu0
    %v3151 = vadd.f32 0.0, %v3150
    %3152 = vmatmul.f32.gmra.mxu0 %v904
    %v3153 = vpop.f32.mrf.mxu0
    %v3154 = vadd.f32 0.0, %v3153
    %3155 = vmatmul.f32.gmra.mxu0 %v907
    %v3156 = vpop.f32.mrf.mxu0
    %v3157 = vadd.f32 0.0, %v3156
    %3158 = vmatmul.f32.gmra.mxu0 %v910
    %v3159 = vpop.f32.mrf.mxu0
    %v3160 = vadd.f32 0.0, %v3159
    %3161 = vmatmul.f32.gmra.mxu0 %v913
    %v3162 = vpop.f32.mrf.mxu0
    %v3163 = vadd.f32 0.0, %v3162
    %3164 = vmatmul.f32.gmra.mxu0 %v916
    %v3165 = vpop.f32.mrf.mxu0
    %v3166 = vadd.f32 0.0, %v3165
    %3167 = vmatmul.f32.gmra.mxu0 %v919
    %v3168 = vpop.f32.mrf.mxu0
    %v3169 = vadd.f32 0.0, %v3168
    %3170 = vmatmul.f32.gmra.mxu0 %v922
    %v3171 = vpop.f32.mrf.mxu0
    %v3172 = vadd.f32 0.0, %v3171
    %3173 = vmatmul.f32.gmra.mxu0 %v925
    %v3174 = vpop.f32.mrf.mxu0
    %v3175 = vadd.f32 0.0, %v3174
    %3176 = vmatmul.f32.gmra.mxu0 %v928
    %v3177 = vpop.f32.mrf.mxu0
    %v3178 = vadd.f32 0.0, %v3177
    %3179 = vmatmul.f32.gmra.mxu0 %v931
    %v3180 = vpop.f32.mrf.mxu0
    %v3181 = vadd.f32 0.0, %v3180
    %3182 = vmatmul.f32.gmra.mxu0 %v934
    %v3183 = vpop.f32.mrf.mxu0
    %v3184 = vadd.f32 0.0, %v3183
    %3185 = vmatmul.f32.gmra.mxu0 %v937
    %v3186 = vpop.f32.mrf.mxu0
    %v3187 = vadd.f32 0.0, %v3186
    %3188 = vmatmul.f32.gmra.mxu0 %v940
    %v3189 = vpop.f32.mrf.mxu0
    %v3190 = vadd.f32 0.0, %v3189
    %3191 = vmatmul.f32.gmra.mxu0 %v943
    %v3192 = vpop.f32.mrf.mxu0
    %v3193 = vadd.f32 0.0, %v3192
    %3194 = vmatmul.f32.gmra.mxu0 %v946
    %v3195 = vpop.f32.mrf.mxu0
    %v3196 = vadd.f32 0.0, %v3195
    %3197 = vmatmul.f32.gmra.mxu0 %v949
    %v3198 = vpop.f32.mrf.mxu0
    %v3199 = vadd.f32 0.0, %v3198
    %3200 = vmatmul.f32.gmra.mxu0 %v952
    %v3201 = vpop.f32.mrf.mxu0
    %v3202 = vadd.f32 0.0, %v3201
    %3203 = vmatmul.f32.gmra.mxu0 %v955
    %v3204 = vpop.f32.mrf.mxu0
    %v3205 = vadd.f32 0.0, %v3204
    %3206 = vmatmul.f32.gmra.mxu0 %v958
    %v3207 = vpop.f32.mrf.mxu0
    %v3208 = vadd.f32 0.0, %v3207
    %3209 = vmatmul.f32.gmra.mxu0 %v961
    %v3210 = vpop.f32.mrf.mxu0
    %v3211 = vadd.f32 0.0, %v3210
    %3212 = vmatmul.f32.gmra.mxu0 %v964
    %v3213 = vpop.f32.mrf.mxu0
    %v3214 = vadd.f32 0.0, %v3213
    %3215 = vmatmul.f32.gmra.mxu0 %v967
    %v3216 = vpop.f32.mrf.mxu0
    %v3217 = vadd.f32 0.0, %v3216
    %3218 = vmatmul.f32.gmra.mxu0 %v970
    %v3219 = vpop.f32.mrf.mxu0
    %v3220 = vadd.f32 0.0, %v3219
    %3221 = vmatmul.f32.gmra.mxu0 %v973
    %v3222 = vpop.f32.mrf.mxu0
    %v3223 = vadd.f32 0.0, %v3222
    %3224 = vmatmul.f32.gmra.mxu0 %v976
    %v3225 = vpop.f32.mrf.mxu0
    %v3226 = vadd.f32 0.0, %v3225
    %3227 = vmatmul.f32.gmra.mxu0 %v979
    %v3228 = vpop.f32.mrf.mxu0
    %v3229 = vadd.f32 0.0, %v3228
    %3230 = vmatmul.f32.gmra.mxu0 %v982
    %v3231 = vpop.f32.mrf.mxu0
    %v3232 = vadd.f32 0.0, %v3231
    %3233 = vmatmul.f32.gmra.mxu0 %v985
    %v3234 = vpop.f32.mrf.mxu0
    %v3235 = vadd.f32 0.0, %v3234
    %3236 = vmatmul.f32.gmra.mxu0 %v988
    %v3237 = vpop.f32.mrf.mxu0
    %v3238 = vadd.f32 0.0, %v3237
    %3239 = vmatmul.f32.gmra.mxu0 %v991
    %v3240 = vpop.f32.mrf.mxu0
    %v3241 = vadd.f32 0.0, %v3240
    %3242 = vdwg.mxu0
    %3243 = vmatpush.msra.mxu0 %v3127
    %3244 = vmatpush.msra.mxu0 %v3126
    %3245 = vmatpush.msra.mxu0 %v3125
    %3246 = vmatpush.msra.mxu0 %v3124
    %3247 = vmatpush.msra.mxu0 %v3123
    %3248 = vmatpush.msra.mxu0 %v3122
    %3249 = vmatpush.msra.mxu0 %v3121
    %3250 = vmatpush.msra.mxu0 %v3120
    %3251 = vmatpush.msra.mxu0 %v3119
    %3252 = vmatpush.msra.mxu0 %v3118
    %3253 = vmatpush.msra.mxu0 %v3117
    %3254 = vmatpush.msra.mxu0 %v3116
    %3255 = vmatpush.msra.mxu0 %v3115
    %3256 = vmatpush.msra.mxu0 %v3114
    %3257 = vmatpush.msra.mxu0 %v3113
    %3258 = vmatpush.msra.mxu0 %v3112
    %3259 = vmatmul.f32.gmra.mxu0 %v523
    %v3260 = vpop.f32.mrf.mxu0
    %v3261 = vadd.f32 %v3148, %v3260
    %3262 = vmatmul.f32.gmra.mxu0 %v524
    %v3263 = vpop.f32.mrf.mxu0
    %v3264 = vadd.f32 %v3151, %v3263
    %3265 = vmatmul.f32.gmra.mxu0 %v525
    %v3266 = vpop.f32.mrf.mxu0
    %v3267 = vadd.f32 %v3154, %v3266
    %3268 = vmatmul.f32.gmra.mxu0 %v526
    %v3269 = vpop.f32.mrf.mxu0
    %v3270 = vadd.f32 %v3157, %v3269
    %3271 = vmatmul.f32.gmra.mxu0 %v527
    %v3272 = vpop.f32.mrf.mxu0
    %v3273 = vadd.f32 %v3160, %v3272
    %3274 = vmatmul.f32.gmra.mxu0 %v528
    %v3275 = vpop.f32.mrf.mxu0
    %v3276 = vadd.f32 %v3163, %v3275
    %3277 = vmatmul.f32.gmra.mxu0 %v529
    %v3278 = vpop.f32.mrf.mxu0
    %v3279 = vadd.f32 %v3166, %v3278
    %3280 = vmatmul.f32.gmra.mxu0 %v530
    %v3281 = vpop.f32.mrf.mxu0
    %v3282 = vadd.f32 %v3169, %v3281
    %3283 = vmatmul.f32.gmra.mxu0 %v531
    %v3284 = vpop.f32.mrf.mxu0
    %v3285 = vadd.f32 %v3172, %v3284
    %3286 = vmatmul.f32.gmra.mxu0 %v532
    %v3287 = vpop.f32.mrf.mxu0
    %v3288 = vadd.f32 %v3175, %v3287
    %3289 = vmatmul.f32.gmra.mxu0 %v533
    %v3290 = vpop.f32.mrf.mxu0
    %v3291 = vadd.f32 %v3178, %v3290
    %3292 = vmatmul.f32.gmra.mxu0 %v534
    %v3293 = vpop.f32.mrf.mxu0
    %v3294 = vadd.f32 %v3181, %v3293
    %3295 = vmatmul.f32.gmra.mxu0 %v535
    %v3296 = vpop.f32.mrf.mxu0
    %v3297 = vadd.f32 %v3184, %v3296
    %3298 = vmatmul.f32.gmra.mxu0 %v536
    %v3299 = vpop.f32.mrf.mxu0
    %v3300 = vadd.f32 %v3187, %v3299
    %3301 = vmatmul.f32.gmra.mxu0 %v537
    %v3302 = vpop.f32.mrf.mxu0
    %v3303 = vadd.f32 %v3190, %v3302
    %3304 = vmatmul.f32.gmra.mxu0 %v538
    %v3305 = vpop.f32.mrf.mxu0
    %v3306 = vadd.f32 %v3193, %v3305
    %3307 = vmatmul.f32.gmra.mxu0 %v539
    %v3308 = vpop.f32.mrf.mxu0
    %v3309 = vadd.f32 %v3196, %v3308
    %3310 = vmatmul.f32.gmra.mxu0 %v540
    %v3311 = vpop.f32.mrf.mxu0
    %v3312 = vadd.f32 %v3199, %v3311
    %3313 = vmatmul.f32.gmra.mxu0 %v541
    %v3314 = vpop.f32.mrf.mxu0
    %v3315 = vadd.f32 %v3202, %v3314
    %3316 = vmatmul.f32.gmra.mxu0 %v542
    %v3317 = vpop.f32.mrf.mxu0
    %v3318 = vadd.f32 %v3205, %v3317
    %3319 = vmatmul.f32.gmra.mxu0 %v543
    %v3320 = vpop.f32.mrf.mxu0
    %v3321 = vadd.f32 %v3208, %v3320
    %3322 = vmatmul.f32.gmra.mxu0 %v544
    %v3323 = vpop.f32.mrf.mxu0
    %v3324 = vadd.f32 %v3211, %v3323
    %3325 = vmatmul.f32.gmra.mxu0 %v545
    %v3326 = vpop.f32.mrf.mxu0
    %v3327 = vadd.f32 %v3214, %v3326
    %3328 = vmatmul.f32.gmra.mxu0 %v546
    %v3329 = vpop.f32.mrf.mxu0
    %v3330 = vadd.f32 %v3217, %v3329
    %3331 = vmatmul.f32.gmra.mxu0 %v547
    %v3332 = vpop.f32.mrf.mxu0
    %v3333 = vadd.f32 %v3220, %v3332
    %3334 = vmatmul.f32.gmra.mxu0 %v548
    %v3335 = vpop.f32.mrf.mxu0
    %v3336 = vadd.f32 %v3223, %v3335
    %3337 = vmatmul.f32.gmra.mxu0 %v549
    %v3338 = vpop.f32.mrf.mxu0
    %v3339 = vadd.f32 %v3226, %v3338
    %3340 = vmatmul.f32.gmra.mxu0 %v550
    %v3341 = vpop.f32.mrf.mxu0
    %v3342 = vadd.f32 %v3229, %v3341
    %3343 = vmatmul.f32.gmra.mxu0 %v551
    %v3344 = vpop.f32.mrf.mxu0
    %v3345 = vadd.f32 %v3232, %v3344
    %3346 = vmatmul.f32.gmra.mxu0 %v552
    %v3347 = vpop.f32.mrf.mxu0
    %v3348 = vadd.f32 %v3235, %v3347
    %3349 = vmatmul.f32.gmra.mxu0 %v553
    %v3350 = vpop.f32.mrf.mxu0
    %v3351 = vadd.f32 %v3238, %v3350
    %3352 = vmatmul.f32.gmra.mxu0 %v554
    %v3353 = vpop.f32.mrf.mxu0
    %v3354 = vadd.f32 %v3241, %v3353
    %3355 = vdwg.mxu0
    %v3356 = vmax.f32 %v3261, 0.0
    %v3357 = vmax.f32 %v3264, 0.0
    %v3358 = vmax.f32 %v3267, 0.0
    %v3359 = vmax.f32 %v3270, 0.0
    %v3360 = vmax.f32 %v3273, 0.0
    %v3361 = vmax.f32 %v3276, 0.0
    %v3362 = vmax.f32 %v3279, 0.0
    %v3363 = vmax.f32 %v3282, 0.0
    %v3364 = vmax.f32 %v3285, 0.0
    %v3365 = vmax.f32 %v3288, 0.0
    %v3366 = vmax.f32 %v3291, 0.0
    %v3367 = vmax.f32 %v3294, 0.0
    %v3368 = vmax.f32 %v3297, 0.0
    %v3369 = vmax.f32 %v3300, 0.0
    %v3370 = vmax.f32 %v3303, 0.0
    %v3371 = vmax.f32 %v3306, 0.0
    %v3372 = vmax.f32 %v3309, 0.0
    %v3373 = vmax.f32 %v3312, 0.0
    %v3374 = vmax.f32 %v3315, 0.0
    %v3375 = vmax.f32 %v3318, 0.0
    %v3376 = vmax.f32 %v3321, 0.0
    %v3377 = vmax.f32 %v3324, 0.0
    %v3378 = vmax.f32 %v3327, 0.0
    %v3379 = vmax.f32 %v3330, 0.0
    %v3380 = vmax.f32 %v3333, 0.0
    %v3381 = vmax.f32 %v3336, 0.0
    %v3382 = vmax.f32 %v3339, 0.0
    %v3383 = vmax.f32 %v3342, 0.0
    %v3384 = vmax.f32 %v3345, 0.0
    %v3385 = vmax.f32 %v3348, 0.0
    %v3386 = vmax.f32 %v3351, 0.0
    %v3387 = vmax.f32 %v3354, 0.0
    %3388 = vmatpush.msra.mxu0 %v3371
    %3389 = vmatpush.msra.mxu0 %v3370
    %3390 = vmatpush.msra.mxu0 %v3369
    %3391 = vmatpush.msra.mxu0 %v3368
    %3392 = vmatpush.msra.mxu0 %v3367
    %3393 = vmatpush.msra.mxu0 %v3366
    %3394 = vmatpush.msra.mxu0 %v3365
    %3395 = vmatpush.msra.mxu0 %v3364
    %3396 = vmatpush.msra.mxu0 %v3363
    %3397 = vmatpush.msra.mxu0 %v3362
    %3398 = vmatpush.msra.mxu0 %v3361
    %3399 = vmatpush.msra.mxu0 %v3360
    %3400 = vmatpush.msra.mxu0 %v3359
    %3401 = vmatpush.msra.mxu0 %v3358
    %3402 = vmatpush.msra.mxu0 %v3357
    %3403 = vmatpush.msra.mxu0 %v3356
    %3404 = vmatmul.f32.gmra.mxu0 %v639
    %v3405 = vpop.f32.mrf.mxu0
    %v3406 = vadd.f32 0.0, %v3405
    %3407 = vmatmul.f32.gmra.mxu0 %v641
    %v3408 = vpop.f32.mrf.mxu0
    %v3409 = vadd.f32 0.0, %v3408
    %3410 = vmatmul.f32.gmra.mxu0 %v643
    %v3411 = vpop.f32.mrf.mxu0
    %v3412 = vadd.f32 0.0, %v3411
    %3413 = vmatmul.f32.gmra.mxu0 %v645
    %v3414 = vpop.f32.mrf.mxu0
    %v3415 = vadd.f32 0.0, %v3414
    %3416 = vmatmul.f32.gmra.mxu0 %v647
    %v3417 = vpop.f32.mrf.mxu0
    %v3418 = vadd.f32 0.0, %v3417
    %3419 = vmatmul.f32.gmra.mxu0 %v649
    %v3420 = vpop.f32.mrf.mxu0
    %v3421 = vadd.f32 0.0, %v3420
    %3422 = vmatmul.f32.gmra.mxu0 %v651
    %v3423 = vpop.f32.mrf.mxu0
    %v3424 = vadd.f32 0.0, %v3423
    %3425 = vmatmul.f32.gmra.mxu0 %v653
    %v3426 = vpop.f32.mrf.mxu0
    %v3427 = vadd.f32 0.0, %v3426
    %3428 = vmatmul.f32.gmra.mxu0 %v655
    %v3429 = vpop.f32.mrf.mxu0
    %v3430 = vadd.f32 0.0, %v3429
    %3431 = vmatmul.f32.gmra.mxu0 %v657
    %v3432 = vpop.f32.mrf.mxu0
    %v3433 = vadd.f32 0.0, %v3432
    %3434 = vmatmul.f32.gmra.mxu0 %v659
    %v3435 = vpop.f32.mrf.mxu0
    %v3436 = vadd.f32 0.0, %v3435
    %3437 = vmatmul.f32.gmra.mxu0 %v661
    %v3438 = vpop.f32.mrf.mxu0
    %v3439 = vadd.f32 0.0, %v3438
    %3440 = vmatmul.f32.gmra.mxu0 %v663
    %v3441 = vpop.f32.mrf.mxu0
    %v3442 = vadd.f32 0.0, %v3441
    %3443 = vmatmul.f32.gmra.mxu0 %v665
    %v3444 = vpop.f32.mrf.mxu0
    %v3445 = vadd.f32 0.0, %v3444
    %3446 = vmatmul.f32.gmra.mxu0 %v667
    %v3447 = vpop.f32.mrf.mxu0
    %v3448 = vadd.f32 0.0, %v3447
    %3449 = vmatmul.f32.gmra.mxu0 %v669
    %v3450 = vpop.f32.mrf.mxu0
    %v3451 = vadd.f32 0.0, %v3450
    %3452 = vdwg.mxu0
    %3453 = vmatpush.msra.mxu0 %v3387
    %3454 = vmatpush.msra.mxu0 %v3386
    %3455 = vmatpush.msra.mxu0 %v3385
    %3456 = vmatpush.msra.mxu0 %v3384
    %3457 = vmatpush.msra.mxu0 %v3383
    %3458 = vmatpush.msra.mxu0 %v3382
    %3459 = vmatpush.msra.mxu0 %v3381
    %3460 = vmatpush.msra.mxu0 %v3380
    %3461 = vmatpush.msra.mxu0 %v3379
    %3462 = vmatpush.msra.mxu0 %v3378
    %3463 = vmatpush.msra.mxu0 %v3377
    %3464 = vmatpush.msra.mxu0 %v3376
    %3465 = vmatpush.msra.mxu0 %v3375
    %3466 = vmatpush.msra.mxu0 %v3374
    %3467 = vmatpush.msra.mxu0 %v3373
    %3468 = vmatpush.msra.mxu0 %v3372
    %3469 = vmatmul.f32.gmra.mxu0 %v640
    %v3470 = vpop.f32.mrf.mxu0
    %v3471 = vadd.f32 %v3406, %v3470
    %3472 = vmatmul.f32.gmra.mxu0 %v642
    %v3473 = vpop.f32.mrf.mxu0
    %v3474 = vadd.f32 %v3409, %v3473
    %3475 = vmatmul.f32.gmra.mxu0 %v644
    %v3476 = vpop.f32.mrf.mxu0
    %v3477 = vadd.f32 %v3412, %v3476
    %3478 = vmatmul.f32.gmra.mxu0 %v646
    %v3479 = vpop.f32.mrf.mxu0
    %v3480 = vadd.f32 %v3415, %v3479
    %3481 = vmatmul.f32.gmra.mxu0 %v648
    %v3482 = vpop.f32.mrf.mxu0
    %v3483 = vadd.f32 %v3418, %v3482
    %3484 = vmatmul.f32.gmra.mxu0 %v650
    %v3485 = vpop.f32.mrf.mxu0
    %v3486 = vadd.f32 %v3421, %v3485
    %3487 = vmatmul.f32.gmra.mxu0 %v652
    %v3488 = vpop.f32.mrf.mxu0
    %v3489 = vadd.f32 %v3424, %v3488
    %3490 = vmatmul.f32.gmra.mxu0 %v654
    %v3491 = vpop.f32.mrf.mxu0
    %v3492 = vadd.f32 %v3427, %v3491
    %3493 = vmatmul.f32.gmra.mxu0 %v656
    %v3494 = vpop.f32.mrf.mxu0
    %v3495 = vadd.f32 %v3430, %v3494
    %3496 = vmatmul.f32.gmra.mxu0 %v658
    %v3497 = vpop.f32.mrf.mxu0
    %v3498 = vadd.f32 %v3433, %v3497
    %3499 = vmatmul.f32.gmra.mxu0 %v660
    %v3500 = vpop.f32.mrf.mxu0
    %v3501 = vadd.f32 %v3436, %v3500
    %3502 = vmatmul.f32.gmra.mxu0 %v662
    %v3503 = vpop.f32.mrf.mxu0
    %v3504 = vadd.f32 %v3439, %v3503
    %3505 = vmatmul.f32.gmra.mxu0 %v664
    %v3506 = vpop.f32.mrf.mxu0
    %v3507 = vadd.f32 %v3442, %v3506
    %3508 = vmatmul.f32.gmra.mxu0 %v666
    %v3509 = vpop.f32.mrf.mxu0
    %v3510 = vadd.f32 %v3445, %v3509
    %3511 = vmatmul.f32.gmra.mxu0 %v668
    %v3512 = vpop.f32.mrf.mxu0
    %v3513 = vadd.f32 %v3448, %v3512
    %3514 = vmatmul.f32.gmra.mxu0 %v670
    %v3515 = vpop.f32.mrf.mxu0
    %v3516 = vadd.f32 %v3451, %v3515
    %3517 = vdwg.mxu0
    %s3518 = scalar_lea.vmem %s7, 2
    %v3519 = vld [vmem:[%s3518] sm:$0x1]
    %v3521 = vperm.slane %v3519, 0
    %v3523 = vmul.f32 %v3112, %v3521
    %v3524 = vmul.f32 %v3113, %v3521
    %v3525 = vmul.f32 %v3114, %v3521
    %v3526 = vmul.f32 %v3115, %v3521
    %v3527 = vmul.f32 %v3116, %v3521
    %v3528 = vmul.f32 %v3117, %v3521
    %v3529 = vmul.f32 %v3118, %v3521
    %v3530 = vmul.f32 %v3119, %v3521
    %v3531 = vmul.f32 %v3120, %v3521
    %v3532 = vmul.f32 %v3121, %v3521
    %v3533 = vmul.f32 %v3122, %v3521
    %v3534 = vmul.f32 %v3123, %v3521
    %v3535 = vmul.f32 %v3124, %v3521
    %v3536 = vmul.f32 %v3125, %v3521
    %v3537 = vmul.f32 %v3126, %v3521
    %v3538 = vmul.f32 %v3127, %v3521
    %v3539 = vadd.f32 %v3523, %v3471
    %v3540 = vadd.f32 %v3524, %v3474
    %v3541 = vadd.f32 %v3525, %v3477
    %v3542 = vadd.f32 %v3526, %v3480
    %v3543 = vadd.f32 %v3527, %v3483
    %v3544 = vadd.f32 %v3528, %v3486
    %v3545 = vadd.f32 %v3529, %v3489
    %v3546 = vadd.f32 %v3530, %v3492
    %v3547 = vadd.f32 %v3531, %v3495
    %v3548 = vadd.f32 %v3532, %v3498
    %v3549 = vadd.f32 %v3533, %v3501
    %v3550 = vadd.f32 %v3534, %v3504
    %v3551 = vadd.f32 %v3535, %v3507
    %v3552 = vadd.f32 %v3536, %v3510
    %v3553 = vadd.f32 %v3537, %v3513
    %v3554 = vadd.f32 %v3538, %v3516
    %s3555 = scalar_lea.vmem [#allocation2], 512
    %v3556 = vld [vmem:[%s3555] sm:$0xff]
    %v3557 = vld [vmem:[%s3555 + $0x8] sm:$0xff]
    %v3558 = vld [vmem:[%s3555 + $0x10] sm:$0xff]
    %v3559 = vld [vmem:[%s3555 + $0x18] sm:$0xff]
    %v3560 = vld [vmem:[%s3555 + $0x20] sm:$0xff]
    %v3561 = vld [vmem:[%s3555 + $0x28] sm:$0xff]
    %v3562 = vld [vmem:[%s3555 + $0x30] sm:$0xff]
    %v3563 = vld [vmem:[%s3555 + $0x38] sm:$0xff]
    %v3564 = vld [vmem:[%s3555 + $0x40] sm:$0xff]
    %v3565 = vld [vmem:[%s3555 + $0x48] sm:$0xff]
    %v3566 = vld [vmem:[%s3555 + $0x50] sm:$0xff]
    %v3567 = vld [vmem:[%s3555 + $0x58] sm:$0xff]
    %v3568 = vld [vmem:[%s3555 + $0x60] sm:$0xff]
    %v3569 = vld [vmem:[%s3555 + $0x68] sm:$0xff]
    %v3570 = vld [vmem:[%s3555 + $0x70] sm:$0xff]
    %v3571 = vld [vmem:[%s3555 + $0x78] sm:$0xff]
    %v3572 = vld [vmem:[%s3555 + $0x80] sm:$0xff]
    %v3573 = vld [vmem:[%s3555 + $0x88] sm:$0xff]
    %v3574 = vld [vmem:[%s3555 + $0x90] sm:$0xff]
    %v3575 = vld [vmem:[%s3555 + $0x98] sm:$0xff]
    %v3576 = vld [vmem:[%s3555 + $0xa0] sm:$0xff]
    %v3577 = vld [vmem:[%s3555 + $0xa8] sm:$0xff]
    %v3578 = vld [vmem:[%s3555 + $0xb0] sm:$0xff]
    %v3579 = vld [vmem:[%s3555 + $0xb8] sm:$0xff]
    %v3580 = vld [vmem:[%s3555 + $0xc0] sm:$0xff]
    %v3581 = vld [vmem:[%s3555 + $0xc8] sm:$0xff]
    %v3582 = vld [vmem:[%s3555 + $0xd0] sm:$0xff]
    %v3583 = vld [vmem:[%s3555 + $0xd8] sm:$0xff]
    %v3584 = vld [vmem:[%s3555 + $0xe0] sm:$0xff]
    %v3585 = vld [vmem:[%s3555 + $0xe8] sm:$0xff]
    %v3586 = vld [vmem:[%s3555 + $0xf0] sm:$0xff]
    %v3587 = vld [vmem:[%s3555 + $0xf8] sm:$0xff]
    %s3588 = scalar_lea.vmem %s9, 4
    %v3589 = vld [vmem:[%s3588] sm:$0x3]
    %v3591 = vperm.slane %v3589, 0
    %v3592 = vperm.slane %v3589, 1
    %3595 = vmatpush.msra.mxu0 %v3586
    %3596 = vmatpush.msra.mxu0 %v3584
    %3597 = vmatpush.msra.mxu0 %v3582
    %3598 = vmatpush.msra.mxu0 %v3580
    %3599 = vmatpush.msra.mxu0 %v3578
    %3600 = vmatpush.msra.mxu0 %v3576
    %3601 = vmatpush.msra.mxu0 %v3574
    %3602 = vmatpush.msra.mxu0 %v3572
    %3603 = vmatpush.msra.mxu0 %v3570
    %3604 = vmatpush.msra.mxu0 %v3568
    %3605 = vmatpush.msra.mxu0 %v3566
    %3606 = vmatpush.msra.mxu0 %v3564
    %3607 = vmatpush.msra.mxu0 %v3562
    %3608 = vmatpush.msra.mxu0 %v3560
    %3609 = vmatpush.msra.mxu0 %v3558
    %3610 = vmatpush.msra.mxu0 %v3556
    %3611 = vmatmul.f32.gmra.mxu0 %v3539
    %v3612 = vpop.f32.mrf.mxu0
    %v3613 = vadd.f32 %v3591, %v3612
    %3614 = vmatmul.f32.gmra.mxu0 %v3540
    %v3615 = vpop.f32.mrf.mxu0
    %v3616 = vadd.f32 %v3591, %v3615
    %3617 = vmatmul.f32.gmra.mxu0 %v3541
    %v3618 = vpop.f32.mrf.mxu0
    %v3619 = vadd.f32 %v3591, %v3618
    %3620 = vmatmul.f32.gmra.mxu0 %v3542
    %v3621 = vpop.f32.mrf.mxu0
    %v3622 = vadd.f32 %v3591, %v3621
    %3623 = vmatmul.f32.gmra.mxu0 %v3543
    %v3624 = vpop.f32.mrf.mxu0
    %v3625 = vadd.f32 %v3591, %v3624
    %3626 = vmatmul.f32.gmra.mxu0 %v3544
    %v3627 = vpop.f32.mrf.mxu0
    %v3628 = vadd.f32 %v3591, %v3627
    %3629 = vmatmul.f32.gmra.mxu0 %v3545
    %v3630 = vpop.f32.mrf.mxu0
    %v3631 = vadd.f32 %v3591, %v3630
    %3632 = vmatmul.f32.gmra.mxu0 %v3546
    %v3633 = vpop.f32.mrf.mxu0
    %v3634 = vadd.f32 %v3591, %v3633
    %3635 = vmatmul.f32.gmra.mxu0 %v3547
    %v3636 = vpop.f32.mrf.mxu0
    %v3637 = vadd.f32 %v3591, %v3636
    %3638 = vmatmul.f32.gmra.mxu0 %v3548
    %v3639 = vpop.f32.mrf.mxu0
    %v3640 = vadd.f32 %v3591, %v3639
    %3641 = vmatmul.f32.gmra.mxu0 %v3549
    %v3642 = vpop.f32.mrf.mxu0
    %v3643 = vadd.f32 %v3591, %v3642
    %3644 = vmatmul.f32.gmra.mxu0 %v3550
    %v3645 = vpop.f32.mrf.mxu0
    %v3646 = vadd.f32 %v3591, %v3645
    %3647 = vmatmul.f32.gmra.mxu0 %v3551
    %v3648 = vpop.f32.mrf.mxu0
    %v3649 = vadd.f32 %v3591, %v3648
    %3650 = vmatmul.f32.gmra.mxu0 %v3552
    %v3651 = vpop.f32.mrf.mxu0
    %v3652 = vadd.f32 %v3591, %v3651
    %3653 = vmatmul.f32.gmra.mxu0 %v3553
    %v3654 = vpop.f32.mrf.mxu0
    %v3655 = vadd.f32 %v3591, %v3654
    %3656 = vmatmul.f32.gmra.mxu0 %v3554
    %v3657 = vpop.f32.mrf.mxu0
    %v3658 = vadd.f32 %v3591, %v3657
    %3659 = vdwg.mxu0
    %3660 = vmatpush.msra.mxu0 %v3587
    %3661 = vmatpush.msra.mxu0 %v3585
    %3662 = vmatpush.msra.mxu0 %v3583
    %3663 = vmatpush.msra.mxu0 %v3581
    %3664 = vmatpush.msra.mxu0 %v3579
    %3665 = vmatpush.msra.mxu0 %v3577
    %3666 = vmatpush.msra.mxu0 %v3575
    %3667 = vmatpush.msra.mxu0 %v3573
    %3668 = vmatpush.msra.mxu0 %v3571
    %3669 = vmatpush.msra.mxu0 %v3569
    %3670 = vmatpush.msra.mxu0 %v3567
    %3671 = vmatpush.msra.mxu0 %v3565
    %3672 = vmatpush.msra.mxu0 %v3563
    %3673 = vmatpush.msra.mxu0 %v3561
    %3674 = vmatpush.msra.mxu0 %v3559
    %3675 = vmatpush.msra.mxu0 %v3557
    %3676 = vmatmul.f32.gmra.mxu0 %v3539
    %v3677 = vpop.f32.mrf.mxu0
    %v3678 = vadd.f32 %v3592, %v3677
    %3679 = vmatmul.f32.gmra.mxu0 %v3540
    %v3680 = vpop.f32.mrf.mxu0
    %v3681 = vadd.f32 %v3592, %v3680
    %3682 = vmatmul.f32.gmra.mxu0 %v3541
    %v3683 = vpop.f32.mrf.mxu0
    %v3684 = vadd.f32 %v3592, %v3683
    %3685 = vmatmul.f32.gmra.mxu0 %v3542
    %v3686 = vpop.f32.mrf.mxu0
    %v3687 = vadd.f32 %v3592, %v3686
    %3688 = vmatmul.f32.gmra.mxu0 %v3543
    %v3689 = vpop.f32.mrf.mxu0
    %v3690 = vadd.f32 %v3592, %v3689
    %3691 = vmatmul.f32.gmra.mxu0 %v3544
    %v3692 = vpop.f32.mrf.mxu0
    %v3693 = vadd.f32 %v3592, %v3692
    %3694 = vmatmul.f32.gmra.mxu0 %v3545
    %v3695 = vpop.f32.mrf.mxu0
    %v3696 = vadd.f32 %v3592, %v3695
    %3697 = vmatmul.f32.gmra.mxu0 %v3546
    %v3698 = vpop.f32.mrf.mxu0
    %v3699 = vadd.f32 %v3592, %v3698
    %3700 = vmatmul.f32.gmra.mxu0 %v3547
    %v3701 = vpop.f32.mrf.mxu0
    %v3702 = vadd.f32 %v3592, %v3701
    %3703 = vmatmul.f32.gmra.mxu0 %v3548
    %v3704 = vpop.f32.mrf.mxu0
    %v3705 = vadd.f32 %v3592, %v3704
    %3706 = vmatmul.f32.gmra.mxu0 %v3549
    %v3707 = vpop.f32.mrf.mxu0
    %v3708 = vadd.f32 %v3592, %v3707
    %3709 = vmatmul.f32.gmra.mxu0 %v3550
    %v3710 = vpop.f32.mrf.mxu0
    %v3711 = vadd.f32 %v3592, %v3710
    %3712 = vmatmul.f32.gmra.mxu0 %v3551
    %v3713 = vpop.f32.mrf.mxu0
    %v3714 = vadd.f32 %v3592, %v3713
    %3715 = vmatmul.f32.gmra.mxu0 %v3552
    %v3716 = vpop.f32.mrf.mxu0
    %v3717 = vadd.f32 %v3592, %v3716
    %3718 = vmatmul.f32.gmra.mxu0 %v3553
    %v3719 = vpop.f32.mrf.mxu0
    %v3720 = vadd.f32 %v3592, %v3719
    %3721 = vmatmul.f32.gmra.mxu0 %v3554
    %v3722 = vpop.f32.mrf.mxu0
    %v3723 = vadd.f32 %v3592, %v3722
    %3724 = vdwg.mxu0
    %s3725 = scalar_lea.vmem %s10, 4
    %v3726 = vld [vmem:[%s3725] sm:$0x3]
    %s3727 = scalar_lea.vmem %s11, 4
    %v3728 = vld [vmem:[%s3727] sm:$0x3]
    %s3729 = scalar_lea.vmem %s12, 4
    %v3730 = vld [vmem:[%s3729] sm:$0x3]
    %s3731 = scalar_lea.vmem %s13, 4
    %v3732 = vld [vmem:[%s3731] sm:$0x3]
    %v3734 = vperm.slane %v3730, 0
    %v3735 = vperm.slane %v3730, 1
    %v3738 = vsub.f32 %v3613, %v3734
    %v3739 = vsub.f32 %v3678, %v3735
    %v3740 = vsub.f32 %v3616, %v3734
    %v3741 = vsub.f32 %v3681, %v3735
    %v3742 = vsub.f32 %v3619, %v3734
    %v3743 = vsub.f32 %v3684, %v3735
    %v3744 = vsub.f32 %v3622, %v3734
    %v3745 = vsub.f32 %v3687, %v3735
    %v3746 = vsub.f32 %v3625, %v3734
    %v3747 = vsub.f32 %v3690, %v3735
    %v3748 = vsub.f32 %v3628, %v3734
    %v3749 = vsub.f32 %v3693, %v3735
    %v3750 = vsub.f32 %v3631, %v3734
    %v3751 = vsub.f32 %v3696, %v3735
    %v3752 = vsub.f32 %v3634, %v3734
    %v3753 = vsub.f32 %v3699, %v3735
    %v3754 = vsub.f32 %v3637, %v3734
    %v3755 = vsub.f32 %v3702, %v3735
    %v3756 = vsub.f32 %v3640, %v3734
    %v3757 = vsub.f32 %v3705, %v3735
    %v3758 = vsub.f32 %v3643, %v3734
    %v3759 = vsub.f32 %v3708, %v3735
    %v3760 = vsub.f32 %v3646, %v3734
    %v3761 = vsub.f32 %v3711, %v3735
    %v3762 = vsub.f32 %v3649, %v3734
    %v3763 = vsub.f32 %v3714, %v3735
    %v3764 = vsub.f32 %v3652, %v3734
    %v3765 = vsub.f32 %v3717, %v3735
    %v3766 = vsub.f32 %v3655, %v3734
    %v3767 = vsub.f32 %v3720, %v3735
    %v3768 = vsub.f32 %v3658, %v3734
    %v3769 = vsub.f32 %v3723, %v3735
    %v3770 = vadd.f32 %v3732, 1e-05
    %v3771 = vrsqrt.pop %v3770
    %v3772 = vmul.f32 %v3771, %v3770
    %v3773 = vmul.f32 %v3772, %v3771
    %v3774 = vmul.f32 0.5, %v3773
    %v3775 = vsub.f32 1.5, %v3774
    %v3776 = vmul.f32 %v3771, %v3775
    %vm3777 = vweird.f32 %v3770
    %vm3778 = vweird.f32 %v3771
    %vm3779 = vmor %vm3777, %vm3778
    %v3780 = vsel %vm3779, %v3771, %v3776
    %v3782 = vperm.slane %v3780, 0
    %v3783 = vperm.slane %v3780, 1
    %v3786 = vmul.f32 %v3738, %v3782
    %v3787 = vmul.f32 %v3739, %v3783
    %v3788 = vmul.f32 %v3740, %v3782
    %v3789 = vmul.f32 %v3741, %v3783
    %v3790 = vmul.f32 %v3742, %v3782
    %v3791 = vmul.f32 %v3743, %v3783
    %v3792 = vmul.f32 %v3744, %v3782
    %v3793 = vmul.f32 %v3745, %v3783
    %v3794 = vmul.f32 %v3746, %v3782
    %v3795 = vmul.f32 %v3747, %v3783
    %v3796 = vmul.f32 %v3748, %v3782
    %v3797 = vmul.f32 %v3749, %v3783
    %v3798 = vmul.f32 %v3750, %v3782
    %v3799 = vmul.f32 %v3751, %v3783
    %v3800 = vmul.f32 %v3752, %v3782
    %v3801 = vmul.f32 %v3753, %v3783
    %v3802 = vmul.f32 %v3754, %v3782
    %v3803 = vmul.f32 %v3755, %v3783
    %v3804 = vmul.f32 %v3756, %v3782
    %v3805 = vmul.f32 %v3757, %v3783
    %v3806 = vmul.f32 %v3758, %v3782
    %v3807 = vmul.f32 %v3759, %v3783
    %v3808 = vmul.f32 %v3760, %v3782
    %v3809 = vmul.f32 %v3761, %v3783
    %v3810 = vmul.f32 %v3762, %v3782
    %v3811 = vmul.f32 %v3763, %v3783
    %v3812 = vmul.f32 %v3764, %v3782
    %v3813 = vmul.f32 %v3765, %v3783
    %v3814 = vmul.f32 %v3766, %v3782
    %v3815 = vmul.f32 %v3767, %v3783
    %v3816 = vmul.f32 %v3768, %v3782
    %v3817 = vmul.f32 %v3769, %v3783
    %v3819 = vperm.slane %v3726, 0
    %v3820 = vperm.slane %v3726, 1
    %v3823 = vmul.f32 %v3786, %v3819
    %v3824 = vmul.f32 %v3787, %v3820
    %v3825 = vmul.f32 %v3788, %v3819
    %v3826 = vmul.f32 %v3789, %v3820
    %v3827 = vmul.f32 %v3790, %v3819
    %v3828 = vmul.f32 %v3791, %v3820
    %v3829 = vmul.f32 %v3792, %v3819
    %v3830 = vmul.f32 %v3793, %v3820
    %v3831 = vmul.f32 %v3794, %v3819
    %v3832 = vmul.f32 %v3795, %v3820
    %v3833 = vmul.f32 %v3796, %v3819
    %v3834 = vmul.f32 %v3797, %v3820
    %v3835 = vmul.f32 %v3798, %v3819
    %v3836 = vmul.f32 %v3799, %v3820
    %v3837 = vmul.f32 %v3800, %v3819
    %v3838 = vmul.f32 %v3801, %v3820
    %v3839 = vmul.f32 %v3802, %v3819
    %v3840 = vmul.f32 %v3803, %v3820
    %v3841 = vmul.f32 %v3804, %v3819
    %v3842 = vmul.f32 %v3805, %v3820
    %v3843 = vmul.f32 %v3806, %v3819
    %v3844 = vmul.f32 %v3807, %v3820
    %v3845 = vmul.f32 %v3808, %v3819
    %v3846 = vmul.f32 %v3809, %v3820
    %v3847 = vmul.f32 %v3810, %v3819
    %v3848 = vmul.f32 %v3811, %v3820
    %v3849 = vmul.f32 %v3812, %v3819
    %v3850 = vmul.f32 %v3813, %v3820
    %v3851 = vmul.f32 %v3814, %v3819
    %v3852 = vmul.f32 %v3815, %v3820
    %v3853 = vmul.f32 %v3816, %v3819
    %v3854 = vmul.f32 %v3817, %v3820
    %v3856 = vperm.slane %v3728, 0
    %v3857 = vperm.slane %v3728, 1
    %v3860 = vadd.f32 %v3823, %v3856
    %v3861 = vadd.f32 %v3824, %v3857
    %v3862 = vadd.f32 %v3825, %v3856
    %v3863 = vadd.f32 %v3826, %v3857
    %v3864 = vadd.f32 %v3827, %v3856
    %v3865 = vadd.f32 %v3828, %v3857
    %v3866 = vadd.f32 %v3829, %v3856
    %v3867 = vadd.f32 %v3830, %v3857
    %v3868 = vadd.f32 %v3831, %v3856
    %v3869 = vadd.f32 %v3832, %v3857
    %v3870 = vadd.f32 %v3833, %v3856
    %v3871 = vadd.f32 %v3834, %v3857
    %v3872 = vadd.f32 %v3835, %v3856
    %v3873 = vadd.f32 %v3836, %v3857
    %v3874 = vadd.f32 %v3837, %v3856
    %v3875 = vadd.f32 %v3838, %v3857
    %v3876 = vadd.f32 %v3839, %v3856
    %v3877 = vadd.f32 %v3840, %v3857
    %v3878 = vadd.f32 %v3841, %v3856
    %v3879 = vadd.f32 %v3842, %v3857
    %v3880 = vadd.f32 %v3843, %v3856
    %v3881 = vadd.f32 %v3844, %v3857
    %v3882 = vadd.f32 %v3845, %v3856
    %v3883 = vadd.f32 %v3846, %v3857
    %v3884 = vadd.f32 %v3847, %v3856
    %v3885 = vadd.f32 %v3848, %v3857
    %v3886 = vadd.f32 %v3849, %v3856
    %v3887 = vadd.f32 %v3850, %v3857
    %v3888 = vadd.f32 %v3851, %v3856
    %v3889 = vadd.f32 %v3852, %v3857
    %v3890 = vadd.f32 %v3853, %v3856
    %v3891 = vadd.f32 %v3854, %v3857
    %v3892 = vmax.f32 %v3860, 0.0
    %v3893 = vmax.f32 %v3861, 0.0
    %v3894 = vmax.f32 %v3862, 0.0
    %v3895 = vmax.f32 %v3863, 0.0
    %v3896 = vmax.f32 %v3864, 0.0
    %v3897 = vmax.f32 %v3865, 0.0
    %v3898 = vmax.f32 %v3866, 0.0
    %v3899 = vmax.f32 %v3867, 0.0
    %v3900 = vmax.f32 %v3868, 0.0
    %v3901 = vmax.f32 %v3869, 0.0
    %v3902 = vmax.f32 %v3870, 0.0
    %v3903 = vmax.f32 %v3871, 0.0
    %v3904 = vmax.f32 %v3872, 0.0
    %v3905 = vmax.f32 %v3873, 0.0
    %v3906 = vmax.f32 %v3874, 0.0
    %v3907 = vmax.f32 %v3875, 0.0
    %v3908 = vmax.f32 %v3876, 0.0
    %v3909 = vmax.f32 %v3877, 0.0
    %v3910 = vmax.f32 %v3878, 0.0
    %v3911 = vmax.f32 %v3879, 0.0
    %v3912 = vmax.f32 %v3880, 0.0
    %v3913 = vmax.f32 %v3881, 0.0
    %v3914 = vmax.f32 %v3882, 0.0
    %v3915 = vmax.f32 %v3883, 0.0
    %v3916 = vmax.f32 %v3884, 0.0
    %v3917 = vmax.f32 %v3885, 0.0
    %v3918 = vmax.f32 %v3886, 0.0
    %v3919 = vmax.f32 %v3887, 0.0
    %v3920 = vmax.f32 %v3888, 0.0
    %v3921 = vmax.f32 %v3889, 0.0
    %v3922 = vmax.f32 %v3890, 0.0
    %v3923 = vmax.f32 %v3891, 0.0
    %s3924 = scalar_lea.vmem [#allocation5], 512
    %v3925 = vld [vmem:[%s3924] sm:$0xff]
    %v3926 = vld [vmem:[%s3924 + $0x8] sm:$0xff]
    %v3927 = vld [vmem:[%s3924 + $0x10] sm:$0xff]
    %v3928 = vld [vmem:[%s3924 + $0x18] sm:$0xff]
    %v3929 = vld [vmem:[%s3924 + $0x20] sm:$0xff]
    %v3930 = vld [vmem:[%s3924 + $0x28] sm:$0xff]
    %v3931 = vld [vmem:[%s3924 + $0x30] sm:$0xff]
    %v3932 = vld [vmem:[%s3924 + $0x38] sm:$0xff]
    %v3933 = vld [vmem:[%s3924 + $0x40] sm:$0xff]
    %v3934 = vld [vmem:[%s3924 + $0x48] sm:$0xff]
    %v3935 = vld [vmem:[%s3924 + $0x50] sm:$0xff]
    %v3936 = vld [vmem:[%s3924 + $0x58] sm:$0xff]
    %v3937 = vld [vmem:[%s3924 + $0x60] sm:$0xff]
    %v3938 = vld [vmem:[%s3924 + $0x68] sm:$0xff]
    %v3939 = vld [vmem:[%s3924 + $0x70] sm:$0xff]
    %v3940 = vld [vmem:[%s3924 + $0x78] sm:$0xff]
    %v3941 = vld [vmem:[%s3924 + $0x80] sm:$0xff]
    %v3942 = vld [vmem:[%s3924 + $0x88] sm:$0xff]
    %v3943 = vld [vmem:[%s3924 + $0x90] sm:$0xff]
    %v3944 = vld [vmem:[%s3924 + $0x98] sm:$0xff]
    %v3945 = vld [vmem:[%s3924 + $0xa0] sm:$0xff]
    %v3946 = vld [vmem:[%s3924 + $0xa8] sm:$0xff]
    %v3947 = vld [vmem:[%s3924 + $0xb0] sm:$0xff]
    %v3948 = vld [vmem:[%s3924 + $0xb8] sm:$0xff]
    %v3949 = vld [vmem:[%s3924 + $0xc0] sm:$0xff]
    %v3950 = vld [vmem:[%s3924 + $0xc8] sm:$0xff]
    %v3951 = vld [vmem:[%s3924 + $0xd0] sm:$0xff]
    %v3952 = vld [vmem:[%s3924 + $0xd8] sm:$0xff]
    %v3953 = vld [vmem:[%s3924 + $0xe0] sm:$0xff]
    %v3954 = vld [vmem:[%s3924 + $0xe8] sm:$0xff]
    %v3955 = vld [vmem:[%s3924 + $0xf0] sm:$0xff]
    %v3956 = vld [vmem:[%s3924 + $0xf8] sm:$0xff]
    %s3957 = scalar_lea.vmem %s15, 2
    %v3958 = vld [vmem:[%s3957] sm:$0x1]
    %v3960 = vperm.slane %v3958, 0
    %3962 = vmatpush.msra.mxu0 %v3940
    %3963 = vmatpush.msra.mxu0 %v3939
    %3964 = vmatpush.msra.mxu0 %v3938
    %3965 = vmatpush.msra.mxu0 %v3937
    %3966 = vmatpush.msra.mxu0 %v3936
    %3967 = vmatpush.msra.mxu0 %v3935
    %3968 = vmatpush.msra.mxu0 %v3934
    %3969 = vmatpush.msra.mxu0 %v3933
    %3970 = vmatpush.msra.mxu0 %v3932
    %3971 = vmatpush.msra.mxu0 %v3931
    %3972 = vmatpush.msra.mxu0 %v3930
    %3973 = vmatpush.msra.mxu0 %v3929
    %3974 = vmatpush.msra.mxu0 %v3928
    %3975 = vmatpush.msra.mxu0 %v3927
    %3976 = vmatpush.msra.mxu0 %v3926
    %3977 = vmatpush.msra.mxu0 %v3925
    %3978 = vmatmul.f32.gmra.mxu0 %v3892
    %v3979 = vpop.f32.mrf.mxu0
    %v3980 = vadd.f32 %v3960, %v3979
    %3981 = vmatmul.f32.gmra.mxu0 %v3894
    %v3982 = vpop.f32.mrf.mxu0
    %v3983 = vadd.f32 %v3960, %v3982
    %3984 = vmatmul.f32.gmra.mxu0 %v3896
    %v3985 = vpop.f32.mrf.mxu0
    %v3986 = vadd.f32 %v3960, %v3985
    %3987 = vmatmul.f32.gmra.mxu0 %v3898
    %v3988 = vpop.f32.mrf.mxu0
    %v3989 = vadd.f32 %v3960, %v3988
    %3990 = vmatmul.f32.gmra.mxu0 %v3900
    %v3991 = vpop.f32.mrf.mxu0
    %v3992 = vadd.f32 %v3960, %v3991
    %3993 = vmatmul.f32.gmra.mxu0 %v3902
    %v3994 = vpop.f32.mrf.mxu0
    %v3995 = vadd.f32 %v3960, %v3994
    %3996 = vmatmul.f32.gmra.mxu0 %v3904
    %v3997 = vpop.f32.mrf.mxu0
    %v3998 = vadd.f32 %v3960, %v3997
    %3999 = vmatmul.f32.gmra.mxu0 %v3906
    %v4000 = vpop.f32.mrf.mxu0
    %v4001 = vadd.f32 %v3960, %v4000
    %4002 = vmatmul.f32.gmra.mxu0 %v3908
    %v4003 = vpop.f32.mrf.mxu0
    %v4004 = vadd.f32 %v3960, %v4003
    %4005 = vmatmul.f32.gmra.mxu0 %v3910
    %v4006 = vpop.f32.mrf.mxu0
    %v4007 = vadd.f32 %v3960, %v4006
    %4008 = vmatmul.f32.gmra.mxu0 %v3912
    %v4009 = vpop.f32.mrf.mxu0
    %v4010 = vadd.f32 %v3960, %v4009
    %4011 = vmatmul.f32.gmra.mxu0 %v3914
    %v4012 = vpop.f32.mrf.mxu0
    %v4013 = vadd.f32 %v3960, %v4012
    %4014 = vmatmul.f32.gmra.mxu0 %v3916
    %v4015 = vpop.f32.mrf.mxu0
    %v4016 = vadd.f32 %v3960, %v4015
    %4017 = vmatmul.f32.gmra.mxu0 %v3918
    %v4018 = vpop.f32.mrf.mxu0
    %v4019 = vadd.f32 %v3960, %v4018
    %4020 = vmatmul.f32.gmra.mxu0 %v3920
    %v4021 = vpop.f32.mrf.mxu0
    %v4022 = vadd.f32 %v3960, %v4021
    %4023 = vmatmul.f32.gmra.mxu0 %v3922
    %v4024 = vpop.f32.mrf.mxu0
    %v4025 = vadd.f32 %v3960, %v4024
    %4026 = vdwg.mxu0
    %4027 = vmatpush.msra.mxu0 %v3956
    %4028 = vmatpush.msra.mxu0 %v3955
    %4029 = vmatpush.msra.mxu0 %v3954
    %4030 = vmatpush.msra.mxu0 %v3953
    %4031 = vmatpush.msra.mxu0 %v3952
    %4032 = vmatpush.msra.mxu0 %v3951
    %4033 = vmatpush.msra.mxu0 %v3950
    %4034 = vmatpush.msra.mxu0 %v3949
    %4035 = vmatpush.msra.mxu0 %v3948
    %4036 = vmatpush.msra.mxu0 %v3947
    %4037 = vmatpush.msra.mxu0 %v3946
    %4038 = vmatpush.msra.mxu0 %v3945
    %4039 = vmatpush.msra.mxu0 %v3944
    %4040 = vmatpush.msra.mxu0 %v3943
    %4041 = vmatpush.msra.mxu0 %v3942
    %4042 = vmatpush.msra.mxu0 %v3941
    %4043 = vmatmul.f32.gmra.mxu0 %v3893
    %v4044 = vpop.f32.mrf.mxu0
    %v4045 = vadd.f32 %v3980, %v4044
    %4046 = vmatmul.f32.gmra.mxu0 %v3895
    %v4047 = vpop.f32.mrf.mxu0
    %v4048 = vadd.f32 %v3983, %v4047
    %4049 = vmatmul.f32.gmra.mxu0 %v3897
    %v4050 = vpop.f32.mrf.mxu0
    %v4051 = vadd.f32 %v3986, %v4050
    %4052 = vmatmul.f32.gmra.mxu0 %v3899
    %v4053 = vpop.f32.mrf.mxu0
    %v4054 = vadd.f32 %v3989, %v4053
    %4055 = vmatmul.f32.gmra.mxu0 %v3901
    %v4056 = vpop.f32.mrf.mxu0
    %v4057 = vadd.f32 %v3992, %v4056
    %4058 = vmatmul.f32.gmra.mxu0 %v3903
    %v4059 = vpop.f32.mrf.mxu0
    %v4060 = vadd.f32 %v3995, %v4059
    %4061 = vmatmul.f32.gmra.mxu0 %v3905
    %v4062 = vpop.f32.mrf.mxu0
    %v4063 = vadd.f32 %v3998, %v4062
    %4064 = vmatmul.f32.gmra.mxu0 %v3907
    %v4065 = vpop.f32.mrf.mxu0
    %v4066 = vadd.f32 %v4001, %v4065
    %4067 = vmatmul.f32.gmra.mxu0 %v3909
    %v4068 = vpop.f32.mrf.mxu0
    %v4069 = vadd.f32 %v4004, %v4068
    %4070 = vmatmul.f32.gmra.mxu0 %v3911
    %v4071 = vpop.f32.mrf.mxu0
    %v4072 = vadd.f32 %v4007, %v4071
    %4073 = vmatmul.f32.gmra.mxu0 %v3913
    %v4074 = vpop.f32.mrf.mxu0
    %v4075 = vadd.f32 %v4010, %v4074
    %4076 = vmatmul.f32.gmra.mxu0 %v3915
    %v4077 = vpop.f32.mrf.mxu0
    %v4078 = vadd.f32 %v4013, %v4077
    %4079 = vmatmul.f32.gmra.mxu0 %v3917
    %v4080 = vpop.f32.mrf.mxu0
    %v4081 = vadd.f32 %v4016, %v4080
    %4082 = vmatmul.f32.gmra.mxu0 %v3919
    %v4083 = vpop.f32.mrf.mxu0
    %v4084 = vadd.f32 %v4019, %v4083
    %4085 = vmatmul.f32.gmra.mxu0 %v3921
    %v4086 = vpop.f32.mrf.mxu0
    %v4087 = vadd.f32 %v4022, %v4086
    %4088 = vmatmul.f32.gmra.mxu0 %v3923
    %v4089 = vpop.f32.mrf.mxu0
    %v4090 = vadd.f32 %v4025, %v4089
    %4091 = vdwg.mxu0
    %s4092 = scalar_lea.vmem %s16, 2
    %v4093 = vld [vmem:[%s4092] sm:$0x1]
    %s4094 = scalar_lea.vmem %s17, 2
    %v4095 = vld [vmem:[%s4094] sm:$0x1]
    %s4096 = scalar_lea.vmem %s18, 2
    %v4097 = vld [vmem:[%s4096] sm:$0x1]
    %s4098 = scalar_lea.vmem %s19, 2
    %v4099 = vld [vmem:[%s4098] sm:$0x1]
    %v4101 = vperm.slane %v4097, 0
    %v4103 = vsub.f32 %v4045, %v4101
    %v4104 = vsub.f32 %v4048, %v4101
    %v4105 = vsub.f32 %v4051, %v4101
    %v4106 = vsub.f32 %v4054, %v4101
    %v4107 = vsub.f32 %v4057, %v4101
    %v4108 = vsub.f32 %v4060, %v4101
    %v4109 = vsub.f32 %v4063, %v4101
    %v4110 = vsub.f32 %v4066, %v4101
    %v4111 = vsub.f32 %v4069, %v4101
    %v4112 = vsub.f32 %v4072, %v4101
    %v4113 = vsub.f32 %v4075, %v4101
    %v4114 = vsub.f32 %v4078, %v4101
    %v4115 = vsub.f32 %v4081, %v4101
    %v4116 = vsub.f32 %v4084, %v4101
    %v4117 = vsub.f32 %v4087, %v4101
    %v4118 = vsub.f32 %v4090, %v4101
    %v4119 = vadd.f32 %v4099, 1e-05
    %v4120 = vrsqrt.pop %v4119
    %v4121 = vmul.f32 %v4120, %v4119
    %v4122 = vmul.f32 %v4121, %v4120
    %v4123 = vmul.f32 0.5, %v4122
    %v4124 = vsub.f32 1.5, %v4123
    %v4125 = vmul.f32 %v4120, %v4124
    %vm4126 = vweird.f32 %v4119
    %vm4127 = vweird.f32 %v4120
    %vm4128 = vmor %vm4126, %vm4127
    %v4129 = vsel %vm4128, %v4120, %v4125
    %v4131 = vperm.slane %v4129, 0
    %v4133 = vmul.f32 %v4103, %v4131
    %v4134 = vmul.f32 %v4104, %v4131
    %v4135 = vmul.f32 %v4105, %v4131
    %v4136 = vmul.f32 %v4106, %v4131
    %v4137 = vmul.f32 %v4107, %v4131
    %v4138 = vmul.f32 %v4108, %v4131
    %v4139 = vmul.f32 %v4109, %v4131
    %v4140 = vmul.f32 %v4110, %v4131
    %v4141 = vmul.f32 %v4111, %v4131
    %v4142 = vmul.f32 %v4112, %v4131
    %v4143 = vmul.f32 %v4113, %v4131
    %v4144 = vmul.f32 %v4114, %v4131
    %v4145 = vmul.f32 %v4115, %v4131
    %v4146 = vmul.f32 %v4116, %v4131
    %v4147 = vmul.f32 %v4117, %v4131
    %v4148 = vmul.f32 %v4118, %v4131
    %v4150 = vperm.slane %v4093, 0
    %v4152 = vmul.f32 %v4133, %v4150
    %v4153 = vmul.f32 %v4134, %v4150
    %v4154 = vmul.f32 %v4135, %v4150
    %v4155 = vmul.f32 %v4136, %v4150
    %v4156 = vmul.f32 %v4137, %v4150
    %v4157 = vmul.f32 %v4138, %v4150
    %v4158 = vmul.f32 %v4139, %v4150
    %v4159 = vmul.f32 %v4140, %v4150
    %v4160 = vmul.f32 %v4141, %v4150
    %v4161 = vmul.f32 %v4142, %v4150
    %v4162 = vmul.f32 %v4143, %v4150
    %v4163 = vmul.f32 %v4144, %v4150
    %v4164 = vmul.f32 %v4145, %v4150
    %v4165 = vmul.f32 %v4146, %v4150
    %v4166 = vmul.f32 %v4147, %v4150
    %v4167 = vmul.f32 %v4148, %v4150
    %v4169 = vperm.slane %v4095, 0
    %v4171 = vadd.f32 %v4152, %v4169
    %v4172 = vadd.f32 %v4153, %v4169
    %v4173 = vadd.f32 %v4154, %v4169
    %v4174 = vadd.f32 %v4155, %v4169
    %v4175 = vadd.f32 %v4156, %v4169
    %v4176 = vadd.f32 %v4157, %v4169
    %v4177 = vadd.f32 %v4158, %v4169
    %v4178 = vadd.f32 %v4159, %v4169
    %v4179 = vadd.f32 %v4160, %v4169
    %v4180 = vadd.f32 %v4161, %v4169
    %v4181 = vadd.f32 %v4162, %v4169
    %v4182 = vadd.f32 %v4163, %v4169
    %v4183 = vadd.f32 %v4164, %v4169
    %v4184 = vadd.f32 %v4165, %v4169
    %v4185 = vadd.f32 %v4166, %v4169
    %v4186 = vadd.f32 %v4167, %v4169
    %4187 = vst [vmem:[#allocation7] sm:$0xff] %v4171
    %4188 = vst [vmem:[#allocation7 + $0x8] sm:$0xff] %v4172
    %4189 = vst [vmem:[#allocation7 + $0x10] sm:$0xff] %v4173
    %4190 = vst [vmem:[#allocation7 + $0x18] sm:$0xff] %v4174
    %4191 = vst [vmem:[#allocation7 + $0x20] sm:$0xff] %v4175
    %4192 = vst [vmem:[#allocation7 + $0x28] sm:$0xff] %v4176
    %4193 = vst [vmem:[#allocation7 + $0x30] sm:$0xff] %v4177
    %4194 = vst [vmem:[#allocation7 + $0x38] sm:$0xff] %v4178
    %4195 = vst [vmem:[#allocation7 + $0x40] sm:$0xff] %v4179
    %4196 = vst [vmem:[#allocation7 + $0x48] sm:$0xff] %v4180
    %4197 = vst [vmem:[#allocation7 + $0x50] sm:$0xff] %v4181
    %4198 = vst [vmem:[#allocation7 + $0x58] sm:$0xff] %v4182
    %4199 = vst [vmem:[#allocation7 + $0x60] sm:$0xff] %v4183
    %4200 = vst [vmem:[#allocation7 + $0x68] sm:$0xff] %v4184
    %4201 = vst [vmem:[#allocation7 + $0x70] sm:$0xff] %v4185
    %4202 = vst [vmem:[#allocation7 + $0x78] sm:$0xff] %v4186
    %v4203 = vld [vmem:[%s4] sm:$0x1]
    %v4204 = vperm.slane %v4203, 0
    %vm4205 = vcmp.eq.s32.totalorder %v556, %v4204
    %v4206 = vsel %vm4205, 1, 0
    %v4207 = vcvt.s32.f32 %v4206
    %4208 = vmatpush.msra.mxu0 %v4186
    %4209 = vmatpush.msra.mxu0 %v4185
    %4210 = vmatpush.msra.mxu0 %v4184
    %4211 = vmatpush.msra.mxu0 %v4183
    %4212 = vmatpush.msra.mxu0 %v4182
    %4213 = vmatpush.msra.mxu0 %v4181
    %4214 = vmatpush.msra.mxu0 %v4180
    %4215 = vmatpush.msra.mxu0 %v4179
    %4216 = vmatpush.msra.mxu0 %v4178
    %4217 = vmatpush.msra.mxu0 %v4177
    %4218 = vmatpush.msra.mxu0 %v4176
    %4219 = vmatpush.msra.mxu0 %v4175
    %4220 = vmatpush.msra.mxu0 %v4174
    %4221 = vmatpush.msra.mxu0 %v4173
    %4222 = vmatpush.msra.mxu0 %v4172
    %4223 = vmatpush.msra.mxu0 %v4171
    %4224 = vmatmul.f32.gmra.mxu0 %v4207
    %v4225 = vpop.f32.mrf.mxu0
    %v4226 = vadd.f32 0.0, %v4225
    %4227 = vdwg.mxu0
    %4228 = vadd.xlane.f32.xlu0 %v4207
    %v4229 = vpop.xlane.xlu0 %4228
    %v4230 = vadd.f32 %v4229, 1e-09
    %v4231 = vrcp.pop %v4230
    %v4232 = vmul.f32 %v4230, %v4231
    %v4233 = vsub.f32 1.0, %v4232
    %v4234 = vmul.f32 %v4231, %v4233
    %v4235 = vadd.f32 %v4231, %v4234
    %vm4236 = vweird.f32 %v4230
    %vm4237 = vweird.f32 %v4231
    %vm4238 = vmor %vm4236, %vm4237
    %v4239 = vsel %vm4238, %v4231, %v4235
    %v4240 = vand.u32 2147483647, %v4230
    %vm4241 = vcmp.eq.f32.partialorder %v4240, 8.507059e+37
    %v4242 = vand.u32 %v4230, 2147483648
    %v4243 = vor.u32 1.1754944e-38, %v4242
    %v4244 = vsel %vm4241, %v4243, %v4239
    %v4245 = vmul.f32 %v4226, %v4244
    %4246 = vst [vmem:[#allocation8] sm:$0xff] %v4245
    // Predicated region
    $region90: #{tpu_custom_call.1} parent=1 // pred_check
      _
    $region91: #{tpu_custom_call.1} parent=1 // pred_check_branch
      %4248 = sbr.rel (0) target = $region93
    $region92: #{tpu_custom_call.1} parent=1 // pred_region
      %4250 = vsyncadd [#allocation4], 0
      %s4251 = sshll.u32 [#allocation7], 4
      %s4252 = int_to_ptr.vmem [resolvable:$true] %s4251
      %s4253 = sshll.u32 %s20, 4
      %s4254 = int_to_ptr.hbm [resolvable:$true] %s4253
      %4259 = dma.vmem_to_hbm [thread:$0]  %s4252, 2048, %s4254, [#allocation4], 128, 128, 8
    $region93: #{tpu_custom_call.1} parent=1 // pred_fallthru
      _
    // Predicated region
    $region94: #{tpu_custom_call.1} parent=1 // pred_check
      _
    $region95: #{tpu_custom_call.1} parent=1 // pred_check_branch
      %4261 = sbr.rel (0) target = $region97
    $region96: #{tpu_custom_call.1} parent=1 // pred_region
      %4263 = vsyncadd [#allocation9], 0
      %s4265 = sshll.u32 [#allocation8], 4
      %s4266 = int_to_ptr.vmem [resolvable:$true] %s4265
      %s4267 = sshll.u32 %s21, 4
      %s4268 = int_to_ptr.hbm [resolvable:$true] %s4267
      %4270 = dma.vmem_to_hbm [thread:$0]  %s4266, 128, %s4268, [#allocation9]
    $region97: #{tpu_custom_call.1} parent=1 // pred_fallthru
      _
    // Predicated region
    $region98: #{tpu_custom_call.1} parent=1 // pred_check
      _
    $region99: #{tpu_custom_call.1} parent=1 // pred_check_branch
      %4272 = sbr.rel (0) target = $region101
    $region100: #{tpu_custom_call.1} parent=1 // pred_region
      %4274 = dma.done [#allocation4], 2048
    $region101: #{tpu_custom_call.1} parent=1 // pred_fallthru
      _
    // Predicated region
    $region102: #{tpu_custom_call.1} parent=1 // pred_check
      _
    $region103: #{tpu_custom_call.1} parent=1 // pred_check_branch
      %4276 = sbr.rel (0) target = $region105
    $region104: #{tpu_custom_call.1} parent=1 // pred_region
      %4278 = dma.done [#allocation9], 128
    $region105: #{tpu_custom_call.1} parent=1 // pred_fallthru
      _
    %4279 = vsyncpa [#allocation3], 1
    %4280 = vsyncpa [#allocation6], 1
    %4281 = vsyncpa [#allocation4], 1
    %4282 = vsyncpa [#allocation9], 1

</llo_original>
